<compile_context>
chip_gen: v5e
topology: v5e:2x2
jax: 0.10.0
libtpu: 0.0.40
codegen_flags: <defaults>
</compile_context>

<pallas_src>
import functools

import jax
import jax.numpy as jnp
import numpy as np
from jax.experimental import pallas as pl
from jax.experimental.pallas import tpu as pltpu

_TM_CAP = 8192                   # max row-tile
_TILE_VMEM_BUDGET = 24 << 20     # bytes for double-buffered streamed tiles


def _round_up(x, m):
    return ((x + m - 1) // m) * m


def _resident_spec(block_shape):
    """Full-extent, constant-index, single-buffered BlockSpec (VMEM resident)."""
    index_map = lambda i: (0,) * len(block_shape)
    try:
        return pl.BlockSpec(block_shape, index_map, pipeline_mode=pl.Buffered(1))
    except (TypeError, AttributeError):
        # Older jax without pipeline_mode: fall back to default buffering.
        return pl.BlockSpec(block_shape, index_map)


def _derive_tm(per_row_bytes, n_rows):
    """Row tile from a VMEM byte budget; >=2 grid steps when enough work."""
    tm = max(8, min(_TM_CAP, _TILE_VMEM_BUDGET // max(per_row_bytes, 1)))
    tm = (tm // 8) * 8
    tm = min(tm, _round_up(n_rows, 8))
    # Make sure both v7x TensorCores get a grid step when there is enough work.
    if n_rows >= 16 and pl.cdiv(n_rows, tm) < 2:
        tm = _round_up(pl.cdiv(n_rows, 2), 8)
    return max(8, tm)


def _vmem_limit(total_bytes):
    # ~25% headroom, floored at 16 MiB, capped under v7x physical per-TC VMEM.
    return int(min(max(int(total_bytes * 1.25), 16 << 20), 64 << 20))


def prepare_siren_params(weight, bias, *, w0=200.0, is_last=False):
    """One-time layout + scale prep from the PyTorch nn.Linear convention.

    weight: (out_f, in_f) -> (in_f, out_f);  bias: (out_f,) -> (1, out_f).
    For non-last layers w0 is folded into both (sin(w0*(xW+b)) == sin(x(w0 W)+w0 b)),
    so the kernel never multiplies by w0.  Do this once at load time.
    """
    w_t = jnp.asarray(weight).T
    b2d = jnp.asarray(bias).reshape(1, -1)
    if not is_last:
        w_t = w_t * float(w0)
        b2d = b2d * float(w0)
    return w_t, b2d


# ----------------------------- single layer ---------------------------------


def _siren_kernel(x_ref, w_ref, b_ref, o_ref, *, apply_sin):
    # x_ref: (tm, in_f) streamed; w_ref: (in_f, out_f) and b_ref: (1, out_f)
    # are VMEM-resident for the whole grid.
    acc = jnp.dot(
        x_ref[...],
        w_ref[...],
        preferred_element_type=jnp.float32,
        precision=jax.lax.Precision.HIGHEST,
    )
    acc = acc + b_ref[...].astype(jnp.float32)
    if apply_sin:
        acc = jnp.sin(acc)  # w0 already folded into W and b
    o_ref[...] = acc.astype(o_ref.dtype)


def siren_layer(x, w_t, b2d, *, is_last=False, tm=None):
    """SIREN layer forward (w0 pre-folded via prepare_siren_params).

    x: (N, in_f); w_t: (in_f, out_f); b2d: (1, out_f).
    Returns (N, out_f): sin(x @ w_t + b) unless is_last, else x @ w_t + b.
    """
    N, in_f = x.shape
    in_f_w, out_f = w_t.shape
    assert in_f == in_f_w, "weight/in_f mismatch"
    assert b2d.shape == (1, out_f), "bias must be (1, out_f)"

    itemsize = x.dtype.itemsize
    if tm is None:
        tm = _derive_tm(2 * itemsize * (in_f + out_f), N)
    tm = max(8, (min(int(tm), _round_up(N, 8)) // 8) * 8)
    grid = pl.cdiv(N, tm)

    resident_bytes = w_t.size * w_t.dtype.itemsize + b2d.size * b2d.dtype.itemsize
    tile_bytes = 2 * tm * (in_f + out_f) * itemsize

    kernel = functools.partial(_siren_kernel, apply_sin=not is_last)

    return pl.pallas_call(
        kernel,
        out_shape=jax.ShapeDtypeStruct((N, out_f), x.dtype),
        grid_spec=pltpu.PrefetchScalarGridSpec(
            num_scalar_prefetch=0,
            grid=(grid,),
            in_specs=[
                pl.BlockSpec((tm, in_f), lambda i: (i, 0)),  # streamed row tile
                _resident_spec((in_f, out_f)),               # weight (resident)
                _resident_spec((1, out_f)),                  # bias (resident)
            ],
            out_specs=pl.BlockSpec((tm, out_f), lambda i: (i, 0)),
        ),
        compiler_params=pltpu.CompilerParams(
            dimension_semantics=("parallel",),
            vmem_limit_bytes=_vmem_limit(tile_bytes + resident_bytes),
        ),
    )(x, w_t, b2d)


# ----------------------------- fused MLP -------------------------------------


def _siren_mlp_kernel(x_ref, *refs, apply_sin):
    # refs = (w_0, b_0, w_1, b_1, ..., o_ref); all weights/biases VMEM-resident.
    o_ref = refs[-1]
    h = x_ref[...].astype(jnp.float32)
    for l, do_sin in enumerate(apply_sin):
        w = refs[2 * l][...]
        b = refs[2 * l + 1][...]
        h = jnp.dot(h, w, preferred_element_type=jnp.float32,
                    precision=jax.lax.Precision.HIGHEST)
        h = h + b.astype(jnp.float32)
        if do_sin:
            h = jnp.sin(h)
    o_ref[...] = h.astype(o_ref.dtype)


def siren_mlp(x, layers, *, tm=None):
    """Fused multi-layer SIREN: one kernel, weights resident, sin in-register.

    layers: list of (w_t, b2d, is_last) with w_t/b2d from prepare_siren_params.
    Only the final activations are written to HBM.
    """
    N, in_f = x.shape
    widths, f = [], in_f
    for w_t, b2d, _ in layers:
        assert w_t.shape[0] == f and b2d.shape == (1, w_t.shape[1])
        f = w_t.shape[1]
        widths.append(f)
    out_f = widths[-1]
    apply_sin = tuple(not is_last for _, _, is_last in layers)

    itemsize = x.dtype.itemsize
    max_w = max([in_f] + widths)
    if tm is None:
        # streamed x/out rows (double-buffered) + ~2 live f32 intermediates/row
        tm = _derive_tm(2 * itemsize * (in_f + out_f) + 2 * 4 * max_w, N)
    tm = max(8, (min(int(tm), _round_up(N, 8)) // 8) * 8)
    grid = pl.cdiv(N, tm)

    resident_bytes = sum(w.size * w.dtype.itemsize + b.size * b.dtype.itemsize
                         for w, b, _ in layers)
    tile_bytes = 2 * tm * (in_f + out_f) * itemsize + 2 * tm * 4 * max_w

    in_specs = [pl.BlockSpec((tm, in_f), lambda i: (i, 0))]
    args = [x]
    for w_t, b2d, _ in layers:
        in_specs.append(_resident_spec(w_t.shape))
        in_specs.append(_resident_spec(b2d.shape))
        args.extend((w_t, b2d))

    kernel = functools.partial(_siren_mlp_kernel, apply_sin=apply_sin)

    return pl.pallas_call(
        kernel,
        out_shape=jax.ShapeDtypeStruct((N, out_f), x.dtype),
        grid_spec=pltpu.PrefetchScalarGridSpec(
            num_scalar_prefetch=0,
            grid=(grid,),
            in_specs=in_specs,
            out_specs=pl.BlockSpec((tm, out_f), lambda i: (i, 0)),
        ),
        compiler_params=pltpu.CompilerParams(
            dimension_semantics=("parallel",),
            vmem_limit_bytes=_vmem_limit(tile_bytes + resident_bytes),
        ),
    )(*args)


# ----------------------------- init + demo -----------------------------------


def init_siren_params(key, in_f, out_f, *, w0=200.0, is_first=False):
    """Deterministic SIREN init matching the PyTorch module's init_weights.

    Returns weight in the PyTorch layout (out_f, in_f) and bias (out_f,).
    """
    b = (1.0 / in_f) if is_first else (np.sqrt(6.0 / in_f) / w0)
    weight = jax.random.uniform(
        key, (out_f, in_f), dtype=jnp.float32, minval=-b, maxval=b
    )
    bias = jnp.zeros((out_f,), dtype=jnp.float32)
    return weight, bias


if __name__ == "__main__":
    key = jax.random.PRNGKey(0)
    kx, kw1, kw2 = jax.random.split(key, 3)

    # N deliberately not a tile multiple (exercises the ragged last block and
    # the >=2-step grid split); last layer out_f=3 (small full-extent block).
    N, hidden, out_last = 300, 64, 3
    w0 = 200.0

    x = jax.random.normal(kx, (N, hidden), dtype=jnp.float32)

    w_hid, b_hid = init_siren_params(kw1, hidden, hidden, w0=w0, is_first=False)
    w_out, b_out = init_siren_params(kw2, hidden, out_last, w0=w0, is_first=False)

    # One-time layout + w0-folding prep (not in the per-call hot path).
    w_hid_t, b_hid2d = prepare_siren_params(w_hid, b_hid, w0=w0, is_last=False)
    w_out_t, b_out2d = prepare_siren_params(w_out, b_out, w0=w0, is_last=True)

    # (a) Per-layer kernels (matches SirenLayer.forward, one call per layer).
    h = siren_layer(x, w_hid_t, b_hid2d, is_last=False)
    y = siren_layer(h, w_out_t, b_out2d, is_last=True)
    y = jax.block_until_ready(y)

    # (b) Fused 2-layer SIREN MLP: single kernel, no intermediate HBM traffic.
    y_fused = siren_mlp(x, [(w_hid_t, b_hid2d, False), (w_out_t, b_out2d, True)])
    y_fused = jax.block_until_ready(y_fused)

    # Pure-JAX reference with PyTorch-f32 semantics (precision pinned so the
    # reference matmul is not bf16-truncated on TPU).
    hi = jax.lax.Precision.HIGHEST
    h_ref = jnp.sin(w0 * (jnp.dot(x, w_hid.T, precision=hi) + b_hid))
    y_ref = jnp.dot(h_ref, w_out.T, precision=hi) + b_out

    np.testing.assert_allclose(np.asarray(h), np.asarray(h_ref), atol=1e-4, rtol=1e-4)
    np.testing.assert_allclose(np.asarray(y), np.asarray(y_ref), atol=1e-4, rtol=1e-4)
    np.testing.assert_allclose(np.asarray(y_fused), np.asarray(y_ref), atol=1e-4, rtol=1e-4)

    print("KERNEL_OK")
</pallas_src>

<mosaic_0001>
module attributes {stable_mosaic.version = 11 : i64} {
  func.func @_siren_kernel(%arg0: i32, %arg1: memref<152x64xf32, #tpu.memory_space<vmem>>, %arg2: memref<64x64xf32, #tpu.memory_space<vmem>>, %arg3: memref<1x64xf32, #tpu.memory_space<vmem>>, %arg4: memref<152x64xf32, #tpu.memory_space<vmem>>) attributes {dimension_semantics = [#tpu.dimension_semantics<parallel>], iteration_bounds = array<i64: 2>, scalar_prefetch = 0 : i64, scratch_operands = 0 : i64, tpu.core_type = #tpu.core_type<tc>, window_params = [{transform_indices = @transform_0, window_bounds = array<i64: 152, 64>}, {pipeline_mode = #tpu.pipeline_mode<synchronous>, transform_indices = @transform_1, window_bounds = array<i64: 64, 64>}, {pipeline_mode = #tpu.pipeline_mode<synchronous>, transform_indices = @transform_2, window_bounds = array<i64: 1, 64>}, {transform_indices = @transform_3, window_bounds = array<i64: 152, 64>}]} {
    %c0 = arith.constant 0 : index
    %c0_0 = arith.constant 0 : index
    %0 = vector.load %arg1[%c0, %c0_0] : memref<152x64xf32, #tpu.memory_space<vmem>>, vector<152x64xf32>
    %c0_1 = arith.constant 0 : index
    %c0_2 = arith.constant 0 : index
    %1 = vector.load %arg2[%c0_1, %c0_2] : memref<64x64xf32, #tpu.memory_space<vmem>>, vector<64x64xf32>
    %cst = arith.constant dense<0.000000e+00> : vector<152x64xf32>
    %2 = tpu.matmul %0, %1, %cst {dimension_numbers = #tpu.dot_dimension_numbers<[1], [0], [0], [1], [0, 0, 1, 1], [], []>, precision = #tpu.contract_precision<fp32>} : vector<152x64xf32>, vector<64x64xf32>, vector<152x64xf32> -> vector<152x64xf32>
    %c0_3 = arith.constant 0 : index
    %c0_4 = arith.constant 0 : index
    %3 = vector.load %arg3[%c0_3, %c0_4] : memref<1x64xf32, #tpu.memory_space<vmem>>, vector<1x64xf32>
    %4 = vector.broadcast %3 : vector<1x64xf32> to vector<152x64xf32>
    %5 = arith.addf %2, %4 : vector<152x64xf32>
    %6 = math.sin %5 : vector<152x64xf32>
    %c0_5 = arith.constant 0 : index
    %c0_6 = arith.constant 0 : index
    %7 = vector.load %arg4[%c0_5, %c0_6] : memref<152x64xf32, #tpu.memory_space<vmem>>, vector<152x64xf32>
    tpu.vector_store %arg4[%c0_5, %c0_6], %6 {strides = array<i32>} : memref<152x64xf32, #tpu.memory_space<vmem>>, vector<152x64xf32>,
    return
  }
  func.func @transform_0(%arg0: i32) -> (i32, i32) {
    %c0_i32 = arith.constant 0 : i32
    %c0_i32_0 = arith.constant 0 : i32
    return %arg0, %c0_i32 : i32, i32
  }
  func.func @transform_1(%arg0: i32) -> (i32, i32) {
    %c0_i32 = arith.constant 0 : i32
    %c0_i32_0 = arith.constant 0 : i32
    %c0_i32_1 = arith.constant 0 : i32
    return %c0_i32, %c0_i32_0 : i32, i32
  }
  func.func @transform_2(%arg0: i32) -> (i32, i32) {
    %c0_i32 = arith.constant 0 : i32
    %c0_i32_0 = arith.constant 0 : i32
    %c0_i32_1 = arith.constant 0 : i32
    return %c0_i32, %c0_i32_0 : i32, i32
  }
  func.func @transform_3(%arg0: i32) -> (i32, i32) {
    %c0_i32 = arith.constant 0 : i32
    %c0_i32_0 = arith.constant 0 : i32
    return %arg0, %c0_i32 : i32, i32
  }
}

</mosaic_0001>

<llo_original>
// kernel: tpu_custom_call.1
$region0: #{tpu_custom_call.1}
  #allocation0 [shape = 'u32[]', space=smem, size = 0x4, offset = 0x4, fixed_abs, tag = 'smem constant byte address 0x4 - core index']
  #allocation1 [shape = 'u32[72,128]{1,0:T(1,128)}', space=vmem, size = 0x9000, scoped, tag = 'internal scratch']
  %s0 = inlined_call_operand.vmem [shape: f32[300,64], index: 0, kind: input, shape index: {}]
  %s1 = inlined_call_operand.vmem [shape: f32[64,64], index: 1, kind: input, shape index: {}]
  %s2 = inlined_call_operand.vmem [shape: f32[1,64], index: 2, kind: input, shape index: {}]
  %s3 = inlined_call_operand.vmem [shape: f32[300,64], index: 3, kind: output, shape index: {}]
  %s4 = sld [smem:[#allocation0]]
  $region45: #{tpu_custom_call.1} parent=0
    _
  %s6 = ssub.s32 1, %s4
  %s7 = scalar_select 0, %s6, %s4
  loop: start=0, step=1, limit=4
  $region2: #{tpu_custom_call.1} parent=0 // loop_pre_header
    _
  $region3: #{tpu_custom_call.1} parent=0 // loop_header
    %s9 = sphi 0, %s13
    %p10 = scmp.ge.s32.totalorder %s9, 4
    %s19 = sphi 0, %s21
    %s22 = sphi 0, %s19
    %s23 = sphi 0, %s22
    %s39 = sphi 0, %s23
    %s43 = sphi 0, %s43
    %s45 = sphi 0, %s43
    %s46 = sphi 0, %s45
    %s60 = sphi 0, %s46
    %s64 = sphi 0, %s64
    %s66 = sphi 0, %s64
    %s67 = sphi 0, %s66
    %s81 = sphi 0, %s67
    %s87 = sphi 0, %s89
    %s90 = sphi 0, %s87
    %s91 = sphi 0, %s90
    %s107 = sphi 0, %s91
  $region4: #{tpu_custom_call.1} parent=0 // loop_header_branch
    %12 = sbr.rel (%p10) target = $region8
  $region5: #{tpu_custom_call.1} parent=0 // loop_body
    %s14 = ssub.s32 %s9, 1
    %s15 = ssub.s32 %s9, 2
    %s16 = sadd.s32 %s9, 1
    %s17 = ssub.s32 %s9, %s16
    %p18 = scmp.eq.s32.totalorder %s17, 0
    %s20 = sadd.s32 %s19, 1
    %s21 = scalar_select %p18, %s19, %s20
    %p24 = pneg %p18
    %p25 = scmp.eq.s32.totalorder %s9, 1
    %p26 = por %p24, %p25
    %p27 = scmp.ne.s32.totalorder %s19, %s22
    %p28 = scmp.eq.s32.totalorder %s9, 0
    %p29 = por %p27, %p28
    %p30 = scmp.ne.s32.totalorder %s19, %s22
    %p31 = scmp.eq.s32.totalorder %s14, 1
    %p32 = por %p30, %p31
    %p33 = scmp.ne.s32.totalorder %s22, %s23
    %p34 = scmp.eq.s32.totalorder %s14, 0
    %p35 = por %p33, %p34
    %p36 = scmp.ne.s32.totalorder %s22, %s23
    %p37 = scmp.eq.s32.totalorder %s15, 1
    %p38 = por %p36, %p37
    %p40 = scmp.ne.s32.totalorder %s23, %s39
    %p41 = scmp.eq.s32.totalorder %s15, 0
    %p42 = por %p40, %p41
    %s44 = sadd.s32 %s43, 1
    %p47 = scmp.eq.s32.totalorder %s9, 1
    %p48 = scmp.ne.s32.totalorder %s43, %s45
    %p49 = scmp.eq.s32.totalorder %s9, 0
    %p50 = por %p48, %p49
    %p51 = scmp.ne.s32.totalorder %s43, %s45
    %p52 = scmp.eq.s32.totalorder %s14, 1
    %p53 = por %p51, %p52
    %p54 = scmp.ne.s32.totalorder %s45, %s46
    %p55 = scmp.eq.s32.totalorder %s14, 0
    %p56 = por %p54, %p55
    %p57 = scmp.ne.s32.totalorder %s45, %s46
    %p58 = scmp.eq.s32.totalorder %s15, 1
    %p59 = por %p57, %p58
    %p61 = scmp.ne.s32.totalorder %s46, %s60
    %p62 = scmp.eq.s32.totalorder %s15, 0
    %p63 = por %p61, %p62
    %s65 = sadd.s32 %s64, 1
    %p68 = scmp.eq.s32.totalorder %s9, 1
    %p69 = scmp.ne.s32.totalorder %s64, %s66
    %p70 = scmp.eq.s32.totalorder %s9, 0
    %p71 = por %p69, %p70
    %p72 = scmp.ne.s32.totalorder %s64, %s66
    %p73 = scmp.eq.s32.totalorder %s14, 1
    %p74 = por %p72, %p73
    %p75 = scmp.ne.s32.totalorder %s66, %s67
    %p76 = scmp.eq.s32.totalorder %s14, 0
    %p77 = por %p75, %p76
    %p78 = scmp.ne.s32.totalorder %s66, %s67
    %p79 = scmp.eq.s32.totalorder %s15, 1
    %p80 = por %p78, %p79
    %p82 = scmp.ne.s32.totalorder %s67, %s81
    %p83 = scmp.eq.s32.totalorder %s15, 0
    %p84 = por %p82, %p83
    %s85 = ssub.s32 %s9, %s16
    %p86 = scmp.eq.s32.totalorder %s85, 0
    %s88 = sadd.s32 %s87, 1
    %s89 = scalar_select %p86, %s87, %s88
    %p92 = pneg %p86
    %p93 = scmp.eq.s32.totalorder %s9, 1
    %p94 = por %p92, %p93
    %p95 = scmp.ne.s32.totalorder %s87, %s90
    %p96 = scmp.eq.s32.totalorder %s9, 0
    %p97 = por %p95, %p96
    %p98 = scmp.ne.s32.totalorder %s87, %s90
    %p99 = scmp.eq.s32.totalorder %s14, 1
    %p100 = por %p98, %p99
    %p101 = scmp.ne.s32.totalorder %s90, %s91
    %p102 = scmp.eq.s32.totalorder %s14, 0
    %p103 = por %p101, %p102
    %p104 = scmp.ne.s32.totalorder %s90, %s91
    %p105 = scmp.eq.s32.totalorder %s15, 1
    %p106 = por %p104, %p105
    %p108 = scmp.ne.s32.totalorder %s91, %s107
    %p109 = scmp.eq.s32.totalorder %s15, 0
    %p110 = por %p108, %p109
    %p111 = scmp.le.s32.totalorder 1, %s9
    %p112 = scmp.lt.s32.totalorder %s9, 3
    %p113 = pnand %p111, %p112
    %p114 = pneg %p113
    // Predicated region
    $region9: #{tpu_custom_call.1} parent=5 // pred_check
      _
    $region10: #{tpu_custom_call.1} parent=5 // pred_check_branch
      %116 = sbr.rel (%p113) target = $region12
    $region11: #{tpu_custom_call.1} parent=5 // pred_region
      %s117 = ssub.s32 %s9, 1
      // Predicated region
      $region13: #{tpu_custom_call.1} parent=11 // pred_check
        %p118 = pneg %p56
      $region14: #{tpu_custom_call.1} parent=11 // pred_check_branch
        %120 = sbr.rel (%p118) target = $region16
      $region15: #{tpu_custom_call.1} parent=11 // pred_region
        _
      $region16: #{tpu_custom_call.1} parent=11 // pred_fallthru
        _
      // Predicated region
      $region17: #{tpu_custom_call.1} parent=11 // pred_check
        %p121 = pneg %p77
      $region18: #{tpu_custom_call.1} parent=11 // pred_check_branch
        %123 = sbr.rel (%p121) target = $region20
      $region19: #{tpu_custom_call.1} parent=11 // pred_region
        _
      $region20: #{tpu_custom_call.1} parent=11 // pred_fallthru
        _
    $region12: #{tpu_custom_call.1} parent=5 // pred_fallthru
      _
    %p124 = scmp.lt.s32.totalorder %s9, 2
    // Predicated region
    $region21: #{tpu_custom_call.1} parent=5 // pred_check
      %p125 = pneg %p124
    $region22: #{tpu_custom_call.1} parent=5 // pred_check_branch
      %127 = sbr.rel (%p125) target = $region24
    $region23: #{tpu_custom_call.1} parent=5 // pred_region
      // Predicated region
      $region25: #{tpu_custom_call.1} parent=23 // pred_check
        %p128 = pneg %p29
      $region26: #{tpu_custom_call.1} parent=23 // pred_check_branch
        %130 = sbr.rel (%p128) target = $region28
      $region27: #{tpu_custom_call.1} parent=23 // pred_region
        %s131 = smul.u32 19, %s9
        %p132 = scmp.lt.s32.totalorder %s131, 37
        %s133 = scalar_select %p132, %s131, 37
        %s134 = smul.addr %s133, 8
        %s135 = scalar_lea.vmem %s0, %s134
        %s136 = smul.u32 19, %s9
      $region28: #{tpu_custom_call.1} parent=23 // pred_fallthru
        _
    $region24: #{tpu_custom_call.1} parent=5 // pred_fallthru
      _
    %p137 = scmp.le.s32.totalorder 1, %s9
    %p138 = scmp.lt.s32.totalorder %s9, 3
    %p139 = pnand %p137, %p138
    %p140 = pneg %p139
    // Predicated region
    $region29: #{tpu_custom_call.1} parent=5 // pred_check
      _
    $region30: #{tpu_custom_call.1} parent=5 // pred_check_branch
      %142 = sbr.rel (%p139) target = $region32
    $region31: #{tpu_custom_call.1} parent=5 // pred_region
      %s143 = ssub.s32 %s9, 1
      %s144 = smul.u32 19, %s14
      %p145 = scmp.lt.s32.totalorder %s144, 37
      %s146 = scalar_select %p145, %s144, 37
      %s147 = smul.addr %s146, 8
      %s148 = scalar_lea.vmem %s0, %s147
      %p149 = pneg %p35
      %p150 = pneg %p32
      %p151 = pneg %p56
      %p152 = pneg %p53
      %p153 = pneg %p77
      %p154 = pneg %p74
      %p155 = pneg %p103
      %p156 = pneg %p100
      %s157 = smul.u32 19, %s14
      %p158 = scmp.lt.s32.totalorder %s157, 37
      %s159 = scalar_select %p158, %s157, 37
      %s160 = smul.addr %s159, 8
      %s161 = scalar_lea.vmem %s3, %s160
      %s162 = smul.u32 19, %s14
      %p163 = scmp.lt.s32.totalorder %s162, 37
      %s164 = scalar_select %p163, %s162, 37
      %s165 = smul.addr %s164, 8
      %s166 = scalar_lea.vmem %s0, %s165
      %s167 = smul.u32 19, %s14
      %s168 = smul.u32 19, %s14
      %p169 = scmp.lt.s32.totalorder %s168, 37
      %s170 = scalar_select %p169, %s168, 37
      %s171 = smul.addr %s170, 8
      %s172 = scalar_lea.vmem %s3, %s171
      %s173 = smul.u32 19, %s14
      %v174 = vld [vmem:[%s166] sm:$0xff]
      %v175 = vld [vmem:[%s166 + $0x8] sm:$0xff]
      %v176 = vld [vmem:[%s166 + $0x10] sm:$0xff]
      %v177 = vld [vmem:[%s166 + $0x18] sm:$0xff]
      %v178 = vld [vmem:[%s166 + $0x20] sm:$0xff]
      %v179 = vld [vmem:[%s166 + $0x28] sm:$0xff]
      %v180 = vld [vmem:[%s166 + $0x30] sm:$0xff]
      %v181 = vld [vmem:[%s166 + $0x38] sm:$0xff]
      %v182 = vld [vmem:[%s166 + $0x40] sm:$0xff]
      %v183 = vld [vmem:[%s166 + $0x48] sm:$0xff]
      %v184 = vld [vmem:[%s166 + $0x50] sm:$0xff]
      %v185 = vld [vmem:[%s166 + $0x58] sm:$0xff]
      %v186 = vld [vmem:[%s166 + $0x60] sm:$0xff]
      %v187 = vld [vmem:[%s166 + $0x68] sm:$0xff]
      %v188 = vld [vmem:[%s166 + $0x70] sm:$0xff]
      %v189 = vld [vmem:[%s166 + $0x78] sm:$0xff]
      %v190 = vld [vmem:[%s166 + $0x80] sm:$0xff]
      %v191 = vld [vmem:[%s166 + $0x88] sm:$0xff]
      %v192 = vld [vmem:[%s166 + $0x90] sm:$0xff]
      %v193 = vld [vmem:[%s1] sm:$0xff]
      %v194 = vld [vmem:[%s1 + $0x8] sm:$0xff]
      %v195 = vld [vmem:[%s1 + $0x10] sm:$0xff]
      %v196 = vld [vmem:[%s1 + $0x18] sm:$0xff]
      %v197 = vld [vmem:[%s1 + $0x20] sm:$0xff]
      %v198 = vld [vmem:[%s1 + $0x28] sm:$0xff]
      %v199 = vld [vmem:[%s1 + $0x30] sm:$0xff]
      %v200 = vld [vmem:[%s1 + $0x38] sm:$0xff]
      %v201 = vld [vmem:[%s2] sm:$0x1]
      %v203 = vperm.slane %v201, 0
      %vm205 = vcmask 523264
      %v207 = vsel %vm205, %v174, 0
      %v210 = vsel %vm205, %v175, 0
      %v213 = vsel %vm205, %v176, 0
      %v216 = vsel %vm205, %v177, 0
      %v219 = vsel %vm205, %v178, 0
      %v222 = vsel %vm205, %v179, 0
      %v225 = vsel %vm205, %v180, 0
      %v228 = vsel %vm205, %v181, 0
      %v231 = vsel %vm205, %v182, 0
      %v234 = vsel %vm205, %v183, 0
      %v237 = vsel %vm205, %v184, 0
      %v240 = vsel %vm205, %v185, 0
      %v243 = vsel %vm205, %v186, 0
      %v246 = vsel %vm205, %v187, 0
      %v249 = vsel %vm205, %v188, 0
      %v252 = vsel %vm205, %v189, 0
      %v255 = vsel %vm205, %v190, 0
      %v258 = vsel %vm205, %v191, 0
      %v261 = vsel %vm205, %v192, 0
      %263 = vmatpush.msra.mxu0 0.0
      %264 = vmatpush.msra.mxu0 0.0
      %265 = vmatpush.msra.mxu0 0.0
      %266 = vmatpush.msra.mxu0 0.0
      %267 = vmatpush.msra.mxu0 0.0
      %268 = vmatpush.msra.mxu0 0.0
      %269 = vmatpush.msra.mxu0 0.0
      %270 = vmatpush.msra.mxu0 0.0
      %v271 = vand.u32 %v200, 4294901760
      %272 = vmatpush.msra.mxu0 %v271
      %v273 = vand.u32 %v199, 4294901760
      %274 = vmatpush.msra.mxu0 %v273
      %v275 = vand.u32 %v198, 4294901760
      %276 = vmatpush.msra.mxu0 %v275
      %v277 = vand.u32 %v197, 4294901760
      %278 = vmatpush.msra.mxu0 %v277
      %v279 = vand.u32 %v196, 4294901760
      %280 = vmatpush.msra.mxu0 %v279
      %v281 = vand.u32 %v195, 4294901760
      %282 = vmatpush.msra.mxu0 %v281
      %v283 = vand.u32 %v194, 4294901760
      %284 = vmatpush.msra.mxu0 %v283
      %v285 = vand.u32 %v193, 4294901760
      %286 = vmatpush.msra.mxu0 %v285
      %v287 = vand.u32 %v207, 4294901760
      %v288 = vsub.f32 %v207, %v287
      %v289 = vand.u32 %v288, 4294901760
      %v290 = vsub.f32 %v288, %v289
      %v291 = vand.u32 %v290, 4294901760
      %292 = vmatmul.f32.gmra.mxu0 %v291
      %v293 = vpop.f32.mrf.mxu0
      %v294 = vadd.f32 %v203, %v293
      %v295 = vand.u32 %v210, 4294901760
      %v296 = vsub.f32 %v210, %v295
      %v297 = vand.u32 %v296, 4294901760
      %v298 = vsub.f32 %v296, %v297
      %v299 = vand.u32 %v298, 4294901760
      %300 = vmatmul.f32.gmra.mxu0 %v299
      %v301 = vpop.f32.mrf.mxu0
      %v302 = vadd.f32 %v203, %v301
      %v303 = vand.u32 %v213, 4294901760
      %v304 = vsub.f32 %v213, %v303
      %v305 = vand.u32 %v304, 4294901760
      %v306 = vsub.f32 %v304, %v305
      %v307 = vand.u32 %v306, 4294901760
      %308 = vmatmul.f32.gmra.mxu0 %v307
      %v309 = vpop.f32.mrf.mxu0
      %v310 = vadd.f32 %v203, %v309
      %v311 = vand.u32 %v216, 4294901760
      %v312 = vsub.f32 %v216, %v311
      %v313 = vand.u32 %v312, 4294901760
      %v314 = vsub.f32 %v312, %v313
      %v315 = vand.u32 %v314, 4294901760
      %316 = vmatmul.f32.gmra.mxu0 %v315
      %v317 = vpop.f32.mrf.mxu0
      %v318 = vadd.f32 %v203, %v317
      %v319 = vand.u32 %v219, 4294901760
      %v320 = vsub.f32 %v219, %v319
      %v321 = vand.u32 %v320, 4294901760
      %v322 = vsub.f32 %v320, %v321
      %v323 = vand.u32 %v322, 4294901760
      %324 = vmatmul.f32.gmra.mxu0 %v323
      %v325 = vpop.f32.mrf.mxu0
      %v326 = vadd.f32 %v203, %v325
      %v327 = vand.u32 %v222, 4294901760
      %v328 = vsub.f32 %v222, %v327
      %v329 = vand.u32 %v328, 4294901760
      %v330 = vsub.f32 %v328, %v329
      %v331 = vand.u32 %v330, 4294901760
      %332 = vmatmul.f32.gmra.mxu0 %v331
      %v333 = vpop.f32.mrf.mxu0
      %v334 = vadd.f32 %v203, %v333
      %v335 = vand.u32 %v225, 4294901760
      %v336 = vsub.f32 %v225, %v335
      %v337 = vand.u32 %v336, 4294901760
      %v338 = vsub.f32 %v336, %v337
      %v339 = vand.u32 %v338, 4294901760
      %340 = vmatmul.f32.gmra.mxu0 %v339
      %v341 = vpop.f32.mrf.mxu0
      %v342 = vadd.f32 %v203, %v341
      %v343 = vand.u32 %v228, 4294901760
      %v344 = vsub.f32 %v228, %v343
      %v345 = vand.u32 %v344, 4294901760
      %v346 = vsub.f32 %v344, %v345
      %v347 = vand.u32 %v346, 4294901760
      %348 = vmatmul.f32.gmra.mxu0 %v347
      %v349 = vpop.f32.mrf.mxu0
      %v350 = vadd.f32 %v203, %v349
      %v351 = vand.u32 %v231, 4294901760
      %v352 = vsub.f32 %v231, %v351
      %v353 = vand.u32 %v352, 4294901760
      %v354 = vsub.f32 %v352, %v353
      %v355 = vand.u32 %v354, 4294901760
      %356 = vmatmul.f32.gmra.mxu0 %v355
      %v357 = vpop.f32.mrf.mxu0
      %v358 = vadd.f32 %v203, %v357
      %v359 = vand.u32 %v234, 4294901760
      %v360 = vsub.f32 %v234, %v359
      %v361 = vand.u32 %v360, 4294901760
      %v362 = vsub.f32 %v360, %v361
      %v363 = vand.u32 %v362, 4294901760
      %364 = vmatmul.f32.gmra.mxu0 %v363
      %v365 = vpop.f32.mrf.mxu0
      %v366 = vadd.f32 %v203, %v365
      %v367 = vand.u32 %v237, 4294901760
      %v368 = vsub.f32 %v237, %v367
      %v369 = vand.u32 %v368, 4294901760
      %v370 = vsub.f32 %v368, %v369
      %v371 = vand.u32 %v370, 4294901760
      %372 = vmatmul.f32.gmra.mxu0 %v371
      %v373 = vpop.f32.mrf.mxu0
      %v374 = vadd.f32 %v203, %v373
      %v375 = vand.u32 %v240, 4294901760
      %v376 = vsub.f32 %v240, %v375
      %v377 = vand.u32 %v376, 4294901760
      %v378 = vsub.f32 %v376, %v377
      %v379 = vand.u32 %v378, 4294901760
      %380 = vmatmul.f32.gmra.mxu0 %v379
      %v381 = vpop.f32.mrf.mxu0
      %v382 = vadd.f32 %v203, %v381
      %v383 = vand.u32 %v243, 4294901760
      %v384 = vsub.f32 %v243, %v383
      %v385 = vand.u32 %v384, 4294901760
      %v386 = vsub.f32 %v384, %v385
      %v387 = vand.u32 %v386, 4294901760
      %388 = vmatmul.f32.gmra.mxu0 %v387
      %v389 = vpop.f32.mrf.mxu0
      %v390 = vadd.f32 %v203, %v389
      %v391 = vand.u32 %v246, 4294901760
      %v392 = vsub.f32 %v246, %v391
      %v393 = vand.u32 %v392, 4294901760
      %v394 = vsub.f32 %v392, %v393
      %v395 = vand.u32 %v394, 4294901760
      %396 = vmatmul.f32.gmra.mxu0 %v395
      %v397 = vpop.f32.mrf.mxu0
      %v398 = vadd.f32 %v203, %v397
      %v399 = vand.u32 %v249, 4294901760
      %v400 = vsub.f32 %v249, %v399
      %v401 = vand.u32 %v400, 4294901760
      %v402 = vsub.f32 %v400, %v401
      %v403 = vand.u32 %v402, 4294901760
      %404 = vmatmul.f32.gmra.mxu0 %v403
      %v405 = vpop.f32.mrf.mxu0
      %v406 = vadd.f32 %v203, %v405
      %v407 = vand.u32 %v252, 4294901760
      %v408 = vsub.f32 %v252, %v407
      %v409 = vand.u32 %v408, 4294901760
      %v410 = vsub.f32 %v408, %v409
      %v411 = vand.u32 %v410, 4294901760
      %412 = vmatmul.f32.gmra.mxu0 %v411
      %v413 = vpop.f32.mrf.mxu0
      %v414 = vadd.f32 %v203, %v413
      %v415 = vand.u32 %v255, 4294901760
      %v416 = vsub.f32 %v255, %v415
      %v417 = vand.u32 %v416, 4294901760
      %v418 = vsub.f32 %v416, %v417
      %v419 = vand.u32 %v418, 4294901760
      %420 = vmatmul.f32.gmra.mxu0 %v419
      %v421 = vpop.f32.mrf.mxu0
      %v422 = vadd.f32 %v203, %v421
      %v423 = vand.u32 %v258, 4294901760
      %v424 = vsub.f32 %v258, %v423
      %v425 = vand.u32 %v424, 4294901760
      %v426 = vsub.f32 %v424, %v425
      %v427 = vand.u32 %v426, 4294901760
      %428 = vmatmul.f32.gmra.mxu0 %v427
      %v429 = vpop.f32.mrf.mxu0
      %v430 = vadd.f32 %v203, %v429
      %v431 = vand.u32 %v261, 4294901760
      %v432 = vsub.f32 %v261, %v431
      %v433 = vand.u32 %v432, 4294901760
      %v434 = vsub.f32 %v432, %v433
      %v435 = vand.u32 %v434, 4294901760
      %436 = vmatmul.f32.gmra.mxu0 %v435
      %v437 = vpop.f32.mrf.mxu0
      %v438 = vadd.f32 %v203, %v437
      %439 = vdwg.mxu0
      %440 = vmatpush.msra.mxu0 0.0
      %441 = vmatpush.msra.mxu0 0.0
      %442 = vmatpush.msra.mxu0 0.0
      %443 = vmatpush.msra.mxu0 0.0
      %444 = vmatpush.msra.mxu0 0.0
      %445 = vmatpush.msra.mxu0 0.0
      %446 = vmatpush.msra.mxu0 0.0
      %447 = vmatpush.msra.mxu0 0.0
      %v448 = vand.u32 %v200, 4294901760
      %v449 = vsub.f32 %v200, %v448
      %v450 = vand.u32 %v449, 4294901760
      %v451 = vsub.f32 %v449, %v450
      %v452 = vand.u32 %v451, 4294901760
      %453 = vmatpush.msra.mxu0 %v452
      %v454 = vand.u32 %v199, 4294901760
      %v455 = vsub.f32 %v199, %v454
      %v456 = vand.u32 %v455, 4294901760
      %v457 = vsub.f32 %v455, %v456
      %v458 = vand.u32 %v457, 4294901760
      %459 = vmatpush.msra.mxu0 %v458
      %v460 = vand.u32 %v198, 4294901760
      %v461 = vsub.f32 %v198, %v460
      %v462 = vand.u32 %v461, 4294901760
      %v463 = vsub.f32 %v461, %v462
      %v464 = vand.u32 %v463, 4294901760
      %465 = vmatpush.msra.mxu0 %v464
      %v466 = vand.u32 %v197, 4294901760
      %v467 = vsub.f32 %v197, %v466
      %v468 = vand.u32 %v467, 4294901760
      %v469 = vsub.f32 %v467, %v468
      %v470 = vand.u32 %v469, 4294901760
      %471 = vmatpush.msra.mxu0 %v470
      %v472 = vand.u32 %v196, 4294901760
      %v473 = vsub.f32 %v196, %v472
      %v474 = vand.u32 %v473, 4294901760
      %v475 = vsub.f32 %v473, %v474
      %v476 = vand.u32 %v475, 4294901760
      %477 = vmatpush.msra.mxu0 %v476
      %v478 = vand.u32 %v195, 4294901760
      %v479 = vsub.f32 %v195, %v478
      %v480 = vand.u32 %v479, 4294901760
      %v481 = vsub.f32 %v479, %v480
      %v482 = vand.u32 %v481, 4294901760
      %483 = vmatpush.msra.mxu0 %v482
      %v484 = vand.u32 %v194, 4294901760
      %v485 = vsub.f32 %v194, %v484
      %v486 = vand.u32 %v485, 4294901760
      %v487 = vsub.f32 %v485, %v486
      %v488 = vand.u32 %v487, 4294901760
      %489 = vmatpush.msra.mxu0 %v488
      %v490 = vand.u32 %v193, 4294901760
      %v491 = vsub.f32 %v193, %v490
      %v492 = vand.u32 %v491, 4294901760
      %v493 = vsub.f32 %v491, %v492
      %v494 = vand.u32 %v493, 4294901760
      %495 = vmatpush.msra.mxu0 %v494
      %v496 = vand.u32 %v207, 4294901760
      %497 = vmatmul.f32.gmra.mxu0 %v496
      %v498 = vpop.f32.mrf.mxu0
      %v499 = vadd.f32 %v294, %v498
      %v500 = vand.u32 %v210, 4294901760
      %501 = vmatmul.f32.gmra.mxu0 %v500
      %v502 = vpop.f32.mrf.mxu0
      %v503 = vadd.f32 %v302, %v502
      %v504 = vand.u32 %v213, 4294901760
      %505 = vmatmul.f32.gmra.mxu0 %v504
      %v506 = vpop.f32.mrf.mxu0
      %v507 = vadd.f32 %v310, %v506
      %v508 = vand.u32 %v216, 4294901760
      %509 = vmatmul.f32.gmra.mxu0 %v508
      %v510 = vpop.f32.mrf.mxu0
      %v511 = vadd.f32 %v318, %v510
      %v512 = vand.u32 %v219, 4294901760
      %513 = vmatmul.f32.gmra.mxu0 %v512
      %v514 = vpop.f32.mrf.mxu0
      %v515 = vadd.f32 %v326, %v514
      %v516 = vand.u32 %v222, 4294901760
      %517 = vmatmul.f32.gmra.mxu0 %v516
      %v518 = vpop.f32.mrf.mxu0
      %v519 = vadd.f32 %v334, %v518
      %v520 = vand.u32 %v225, 4294901760
      %521 = vmatmul.f32.gmra.mxu0 %v520
      %v522 = vpop.f32.mrf.mxu0
      %v523 = vadd.f32 %v342, %v522
      %v524 = vand.u32 %v228, 4294901760
      %525 = vmatmul.f32.gmra.mxu0 %v524
      %v526 = vpop.f32.mrf.mxu0
      %v527 = vadd.f32 %v350, %v526
      %v528 = vand.u32 %v231, 4294901760
      %529 = vmatmul.f32.gmra.mxu0 %v528
      %v530 = vpop.f32.mrf.mxu0
      %v531 = vadd.f32 %v358, %v530
      %v532 = vand.u32 %v234, 4294901760
      %533 = vmatmul.f32.gmra.mxu0 %v532
      %v534 = vpop.f32.mrf.mxu0
      %v535 = vadd.f32 %v366, %v534
      %v536 = vand.u32 %v237, 4294901760
      %537 = vmatmul.f32.gmra.mxu0 %v536
      %v538 = vpop.f32.mrf.mxu0
      %v539 = vadd.f32 %v374, %v538
      %v540 = vand.u32 %v240, 4294901760
      %541 = vmatmul.f32.gmra.mxu0 %v540
      %v542 = vpop.f32.mrf.mxu0
      %v543 = vadd.f32 %v382, %v542
      %v544 = vand.u32 %v243, 4294901760
      %545 = vmatmul.f32.gmra.mxu0 %v544
      %v546 = vpop.f32.mrf.mxu0
      %v547 = vadd.f32 %v390, %v546
      %v548 = vand.u32 %v246, 4294901760
      %549 = vmatmul.f32.gmra.mxu0 %v548
      %v550 = vpop.f32.mrf.mxu0
      %v551 = vadd.f32 %v398, %v550
      %v552 = vand.u32 %v249, 4294901760
      %553 = vmatmul.f32.gmra.mxu0 %v552
      %v554 = vpop.f32.mrf.mxu0
      %v555 = vadd.f32 %v406, %v554
      %v556 = vand.u32 %v252, 4294901760
      %557 = vmatmul.f32.gmra.mxu0 %v556
      %v558 = vpop.f32.mrf.mxu0
      %v559 = vadd.f32 %v414, %v558
      %v560 = vand.u32 %v255, 4294901760
      %561 = vmatmul.f32.gmra.mxu0 %v560
      %v562 = vpop.f32.mrf.mxu0
      %v563 = vadd.f32 %v422, %v562
      %v564 = vand.u32 %v258, 4294901760
      %565 = vmatmul.f32.gmra.mxu0 %v564
      %v566 = vpop.f32.mrf.mxu0
      %v567 = vadd.f32 %v430, %v566
      %v568 = vand.u32 %v261, 4294901760
      %569 = vmatmul.f32.gmra.mxu0 %v568
      %v570 = vpop.f32.mrf.mxu0
      %v571 = vadd.f32 %v438, %v570
      %572 = vdwg.mxu0
      %573 = vmatpush.msra.mxu0 0.0
      %574 = vmatpush.msra.mxu0 0.0
      %575 = vmatpush.msra.mxu0 0.0
      %576 = vmatpush.msra.mxu0 0.0
      %577 = vmatpush.msra.mxu0 0.0
      %578 = vmatpush.msra.mxu0 0.0
      %579 = vmatpush.msra.mxu0 0.0
      %580 = vmatpush.msra.mxu0 0.0
      %v581 = vand.u32 %v200, 4294901760
      %v582 = vsub.f32 %v200, %v581
      %583 = vmatpush.msra.mxu0 %v582
      %v584 = vand.u32 %v199, 4294901760
      %v585 = vsub.f32 %v199, %v584
      %586 = vmatpush.msra.mxu0 %v585
      %v587 = vand.u32 %v198, 4294901760
      %v588 = vsub.f32 %v198, %v587
      %589 = vmatpush.msra.mxu0 %v588
      %v590 = vand.u32 %v197, 4294901760
      %v591 = vsub.f32 %v197, %v590
      %592 = vmatpush.msra.mxu0 %v591
      %v593 = vand.u32 %v196, 4294901760
      %v594 = vsub.f32 %v196, %v593
      %595 = vmatpush.msra.mxu0 %v594
      %v596 = vand.u32 %v195, 4294901760
      %v597 = vsub.f32 %v195, %v596
      %598 = vmatpush.msra.mxu0 %v597
      %v599 = vand.u32 %v194, 4294901760
      %v600 = vsub.f32 %v194, %v599
      %601 = vmatpush.msra.mxu0 %v600
      %v602 = vand.u32 %v193, 4294901760
      %v603 = vsub.f32 %v193, %v602
      %604 = vmatpush.msra.mxu0 %v603
      %v605 = vand.u32 %v207, 4294901760
      %v606 = vsub.f32 %v207, %v605
      %607 = vmatmul.f32.gmra.mxu0 %v606
      %v608 = vpop.f32.mrf.mxu0
      %v609 = vadd.f32 %v499, %v608
      %v610 = vand.u32 %v210, 4294901760
      %v611 = vsub.f32 %v210, %v610
      %612 = vmatmul.f32.gmra.mxu0 %v611
      %v613 = vpop.f32.mrf.mxu0
      %v614 = vadd.f32 %v503, %v613
      %v615 = vand.u32 %v213, 4294901760
      %v616 = vsub.f32 %v213, %v615
      %617 = vmatmul.f32.gmra.mxu0 %v616
      %v618 = vpop.f32.mrf.mxu0
      %v619 = vadd.f32 %v507, %v618
      %v620 = vand.u32 %v216, 4294901760
      %v621 = vsub.f32 %v216, %v620
      %622 = vmatmul.f32.gmra.mxu0 %v621
      %v623 = vpop.f32.mrf.mxu0
      %v624 = vadd.f32 %v511, %v623
      %v625 = vand.u32 %v219, 4294901760
      %v626 = vsub.f32 %v219, %v625
      %627 = vmatmul.f32.gmra.mxu0 %v626
      %v628 = vpop.f32.mrf.mxu0
      %v629 = vadd.f32 %v515, %v628
      %v630 = vand.u32 %v222, 4294901760
      %v631 = vsub.f32 %v222, %v630
      %632 = vmatmul.f32.gmra.mxu0 %v631
      %v633 = vpop.f32.mrf.mxu0
      %v634 = vadd.f32 %v519, %v633
      %v635 = vand.u32 %v225, 4294901760
      %v636 = vsub.f32 %v225, %v635
      %637 = vmatmul.f32.gmra.mxu0 %v636
      %v638 = vpop.f32.mrf.mxu0
      %v639 = vadd.f32 %v523, %v638
      %v640 = vand.u32 %v228, 4294901760
      %v641 = vsub.f32 %v228, %v640
      %642 = vmatmul.f32.gmra.mxu0 %v641
      %v643 = vpop.f32.mrf.mxu0
      %v644 = vadd.f32 %v527, %v643
      %v645 = vand.u32 %v231, 4294901760
      %v646 = vsub.f32 %v231, %v645
      %647 = vmatmul.f32.gmra.mxu0 %v646
      %v648 = vpop.f32.mrf.mxu0
      %v649 = vadd.f32 %v531, %v648
      %v650 = vand.u32 %v234, 4294901760
      %v651 = vsub.f32 %v234, %v650
      %652 = vmatmul.f32.gmra.mxu0 %v651
      %v653 = vpop.f32.mrf.mxu0
      %v654 = vadd.f32 %v535, %v653
      %v655 = vand.u32 %v237, 4294901760
      %v656 = vsub.f32 %v237, %v655
      %657 = vmatmul.f32.gmra.mxu0 %v656
      %v658 = vpop.f32.mrf.mxu0
      %v659 = vadd.f32 %v539, %v658
      %v660 = vand.u32 %v240, 4294901760
      %v661 = vsub.f32 %v240, %v660
      %662 = vmatmul.f32.gmra.mxu0 %v661
      %v663 = vpop.f32.mrf.mxu0
      %v664 = vadd.f32 %v543, %v663
      %v665 = vand.u32 %v243, 4294901760
      %v666 = vsub.f32 %v243, %v665
      %667 = vmatmul.f32.gmra.mxu0 %v666
      %v668 = vpop.f32.mrf.mxu0
      %v669 = vadd.f32 %v547, %v668
      %v670 = vand.u32 %v246, 4294901760
      %v671 = vsub.f32 %v246, %v670
      %672 = vmatmul.f32.gmra.mxu0 %v671
      %v673 = vpop.f32.mrf.mxu0
      %v674 = vadd.f32 %v551, %v673
      %v675 = vand.u32 %v249, 4294901760
      %v676 = vsub.f32 %v249, %v675
      %677 = vmatmul.f32.gmra.mxu0 %v676
      %v678 = vpop.f32.mrf.mxu0
      %v679 = vadd.f32 %v555, %v678
      %v680 = vand.u32 %v252, 4294901760
      %v681 = vsub.f32 %v252, %v680
      %682 = vmatmul.f32.gmra.mxu0 %v681
      %v683 = vpop.f32.mrf.mxu0
      %v684 = vadd.f32 %v559, %v683
      %v685 = vand.u32 %v255, 4294901760
      %v686 = vsub.f32 %v255, %v685
      %687 = vmatmul.f32.gmra.mxu0 %v686
      %v688 = vpop.f32.mrf.mxu0
      %v689 = vadd.f32 %v563, %v688
      %v690 = vand.u32 %v258, 4294901760
      %v691 = vsub.f32 %v258, %v690
      %692 = vmatmul.f32.gmra.mxu0 %v691
      %v693 = vpop.f32.mrf.mxu0
      %v694 = vadd.f32 %v567, %v693
      %v695 = vand.u32 %v261, 4294901760
      %v696 = vsub.f32 %v261, %v695
      %697 = vmatmul.f32.gmra.mxu0 %v696
      %v698 = vpop.f32.mrf.mxu0
      %v699 = vadd.f32 %v571, %v698
      %700 = vdwg.mxu0
      %701 = vmatpush.msra.mxu0 0.0
      %702 = vmatpush.msra.mxu0 0.0
      %703 = vmatpush.msra.mxu0 0.0
      %704 = vmatpush.msra.mxu0 0.0
      %705 = vmatpush.msra.mxu0 0.0
      %706 = vmatpush.msra.mxu0 0.0
      %707 = vmatpush.msra.mxu0 0.0
      %708 = vmatpush.msra.mxu0 0.0
      %v709 = vand.u32 %v200, 4294901760
      %710 = vmatpush.msra.mxu0 %v709
      %v711 = vand.u32 %v199, 4294901760
      %712 = vmatpush.msra.mxu0 %v711
      %v713 = vand.u32 %v198, 4294901760
      %714 = vmatpush.msra.mxu0 %v713
      %v715 = vand.u32 %v197, 4294901760
      %716 = vmatpush.msra.mxu0 %v715
      %v717 = vand.u32 %v196, 4294901760
      %718 = vmatpush.msra.mxu0 %v717
      %v719 = vand.u32 %v195, 4294901760
      %720 = vmatpush.msra.mxu0 %v719
      %v721 = vand.u32 %v194, 4294901760
      %722 = vmatpush.msra.mxu0 %v721
      %v723 = vand.u32 %v193, 4294901760
      %724 = vmatpush.msra.mxu0 %v723
      %v725 = vand.u32 %v207, 4294901760
      %v726 = vsub.f32 %v207, %v725
      %v727 = vand.u32 %v726, 4294901760
      %728 = vmatmul.f32.gmra.mxu0 %v727
      %v729 = vpop.f32.mrf.mxu0
      %v730 = vadd.f32 %v609, %v729
      %v731 = vand.u32 %v210, 4294901760
      %v732 = vsub.f32 %v210, %v731
      %v733 = vand.u32 %v732, 4294901760
      %734 = vmatmul.f32.gmra.mxu0 %v733
      %v735 = vpop.f32.mrf.mxu0
      %v736 = vadd.f32 %v614, %v735
      %v737 = vand.u32 %v213, 4294901760
      %v738 = vsub.f32 %v213, %v737
      %v739 = vand.u32 %v738, 4294901760
      %740 = vmatmul.f32.gmra.mxu0 %v739
      %v741 = vpop.f32.mrf.mxu0
      %v742 = vadd.f32 %v619, %v741
      %v743 = vand.u32 %v216, 4294901760
      %v744 = vsub.f32 %v216, %v743
      %v745 = vand.u32 %v744, 4294901760
      %746 = vmatmul.f32.gmra.mxu0 %v745
      %v747 = vpop.f32.mrf.mxu0
      %v748 = vadd.f32 %v624, %v747
      %v749 = vand.u32 %v219, 4294901760
      %v750 = vsub.f32 %v219, %v749
      %v751 = vand.u32 %v750, 4294901760
      %752 = vmatmul.f32.gmra.mxu0 %v751
      %v753 = vpop.f32.mrf.mxu0
      %v754 = vadd.f32 %v629, %v753
      %v755 = vand.u32 %v222, 4294901760
      %v756 = vsub.f32 %v222, %v755
      %v757 = vand.u32 %v756, 4294901760
      %758 = vmatmul.f32.gmra.mxu0 %v757
      %v759 = vpop.f32.mrf.mxu0
      %v760 = vadd.f32 %v634, %v759
      %v761 = vand.u32 %v225, 4294901760
      %v762 = vsub.f32 %v225, %v761
      %v763 = vand.u32 %v762, 4294901760
      %764 = vmatmul.f32.gmra.mxu0 %v763
      %v765 = vpop.f32.mrf.mxu0
      %v766 = vadd.f32 %v639, %v765
      %v767 = vand.u32 %v228, 4294901760
      %v768 = vsub.f32 %v228, %v767
      %v769 = vand.u32 %v768, 4294901760
      %770 = vmatmul.f32.gmra.mxu0 %v769
      %v771 = vpop.f32.mrf.mxu0
      %v772 = vadd.f32 %v644, %v771
      %v773 = vand.u32 %v231, 4294901760
      %v774 = vsub.f32 %v231, %v773
      %v775 = vand.u32 %v774, 4294901760
      %776 = vmatmul.f32.gmra.mxu0 %v775
      %v777 = vpop.f32.mrf.mxu0
      %v778 = vadd.f32 %v649, %v777
      %v779 = vand.u32 %v234, 4294901760
      %v780 = vsub.f32 %v234, %v779
      %v781 = vand.u32 %v780, 4294901760
      %782 = vmatmul.f32.gmra.mxu0 %v781
      %v783 = vpop.f32.mrf.mxu0
      %v784 = vadd.f32 %v654, %v783
      %v785 = vand.u32 %v237, 4294901760
      %v786 = vsub.f32 %v237, %v785
      %v787 = vand.u32 %v786, 4294901760
      %788 = vmatmul.f32.gmra.mxu0 %v787
      %v789 = vpop.f32.mrf.mxu0
      %v790 = vadd.f32 %v659, %v789
      %v791 = vand.u32 %v240, 4294901760
      %v792 = vsub.f32 %v240, %v791
      %v793 = vand.u32 %v792, 4294901760
      %794 = vmatmul.f32.gmra.mxu0 %v793
      %v795 = vpop.f32.mrf.mxu0
      %v796 = vadd.f32 %v664, %v795
      %v797 = vand.u32 %v243, 4294901760
      %v798 = vsub.f32 %v243, %v797
      %v799 = vand.u32 %v798, 4294901760
      %800 = vmatmul.f32.gmra.mxu0 %v799
      %v801 = vpop.f32.mrf.mxu0
      %v802 = vadd.f32 %v669, %v801
      %v803 = vand.u32 %v246, 4294901760
      %v804 = vsub.f32 %v246, %v803
      %v805 = vand.u32 %v804, 4294901760
      %806 = vmatmul.f32.gmra.mxu0 %v805
      %v807 = vpop.f32.mrf.mxu0
      %v808 = vadd.f32 %v674, %v807
      %v809 = vand.u32 %v249, 4294901760
      %v810 = vsub.f32 %v249, %v809
      %v811 = vand.u32 %v810, 4294901760
      %812 = vmatmul.f32.gmra.mxu0 %v811
      %v813 = vpop.f32.mrf.mxu0
      %v814 = vadd.f32 %v679, %v813
      %v815 = vand.u32 %v252, 4294901760
      %v816 = vsub.f32 %v252, %v815
      %v817 = vand.u32 %v816, 4294901760
      %818 = vmatmul.f32.gmra.mxu0 %v817
      %v819 = vpop.f32.mrf.mxu0
      %v820 = vadd.f32 %v684, %v819
      %v821 = vand.u32 %v255, 4294901760
      %v822 = vsub.f32 %v255, %v821
      %v823 = vand.u32 %v822, 4294901760
      %824 = vmatmul.f32.gmra.mxu0 %v823
      %v825 = vpop.f32.mrf.mxu0
      %v826 = vadd.f32 %v689, %v825
      %v827 = vand.u32 %v258, 4294901760
      %v828 = vsub.f32 %v258, %v827
      %v829 = vand.u32 %v828, 4294901760
      %830 = vmatmul.f32.gmra.mxu0 %v829
      %v831 = vpop.f32.mrf.mxu0
      %v832 = vadd.f32 %v694, %v831
      %v833 = vand.u32 %v261, 4294901760
      %v834 = vsub.f32 %v261, %v833
      %v835 = vand.u32 %v834, 4294901760
      %836 = vmatmul.f32.gmra.mxu0 %v835
      %v837 = vpop.f32.mrf.mxu0
      %v838 = vadd.f32 %v699, %v837
      %839 = vdwg.mxu0
      %840 = vmatpush.msra.mxu0 0.0
      %841 = vmatpush.msra.mxu0 0.0
      %842 = vmatpush.msra.mxu0 0.0
      %843 = vmatpush.msra.mxu0 0.0
      %844 = vmatpush.msra.mxu0 0.0
      %845 = vmatpush.msra.mxu0 0.0
      %846 = vmatpush.msra.mxu0 0.0
      %847 = vmatpush.msra.mxu0 0.0
      %v848 = vand.u32 %v200, 4294901760
      %v849 = vsub.f32 %v200, %v848
      %v850 = vand.u32 %v849, 4294901760
      %851 = vmatpush.msra.mxu0 %v850
      %v852 = vand.u32 %v199, 4294901760
      %v853 = vsub.f32 %v199, %v852
      %v854 = vand.u32 %v853, 4294901760
      %855 = vmatpush.msra.mxu0 %v854
      %v856 = vand.u32 %v198, 4294901760
      %v857 = vsub.f32 %v198, %v856
      %v858 = vand.u32 %v857, 4294901760
      %859 = vmatpush.msra.mxu0 %v858
      %v860 = vand.u32 %v197, 4294901760
      %v861 = vsub.f32 %v197, %v860
      %v862 = vand.u32 %v861, 4294901760
      %863 = vmatpush.msra.mxu0 %v862
      %v864 = vand.u32 %v196, 4294901760
      %v865 = vsub.f32 %v196, %v864
      %v866 = vand.u32 %v865, 4294901760
      %867 = vmatpush.msra.mxu0 %v866
      %v868 = vand.u32 %v195, 4294901760
      %v869 = vsub.f32 %v195, %v868
      %v870 = vand.u32 %v869, 4294901760
      %871 = vmatpush.msra.mxu0 %v870
      %v872 = vand.u32 %v194, 4294901760
      %v873 = vsub.f32 %v194, %v872
      %v874 = vand.u32 %v873, 4294901760
      %875 = vmatpush.msra.mxu0 %v874
      %v876 = vand.u32 %v193, 4294901760
      %v877 = vsub.f32 %v193, %v876
      %v878 = vand.u32 %v877, 4294901760
      %879 = vmatpush.msra.mxu0 %v878
      %v880 = vand.u32 %v207, 4294901760
      %881 = vmatmul.f32.gmra.mxu0 %v880
      %v882 = vpop.f32.mrf.mxu0
      %v883 = vadd.f32 %v730, %v882
      %v884 = vand.u32 %v210, 4294901760
      %885 = vmatmul.f32.gmra.mxu0 %v884
      %v886 = vpop.f32.mrf.mxu0
      %v887 = vadd.f32 %v736, %v886
      %v888 = vand.u32 %v213, 4294901760
      %889 = vmatmul.f32.gmra.mxu0 %v888
      %v890 = vpop.f32.mrf.mxu0
      %v891 = vadd.f32 %v742, %v890
      %v892 = vand.u32 %v216, 4294901760
      %893 = vmatmul.f32.gmra.mxu0 %v892
      %v894 = vpop.f32.mrf.mxu0
      %v895 = vadd.f32 %v748, %v894
      %v896 = vand.u32 %v219, 4294901760
      %897 = vmatmul.f32.gmra.mxu0 %v896
      %v898 = vpop.f32.mrf.mxu0
      %v899 = vadd.f32 %v754, %v898
      %v900 = vand.u32 %v222, 4294901760
      %901 = vmatmul.f32.gmra.mxu0 %v900
      %v902 = vpop.f32.mrf.mxu0
      %v903 = vadd.f32 %v760, %v902
      %v904 = vand.u32 %v225, 4294901760
      %905 = vmatmul.f32.gmra.mxu0 %v904
      %v906 = vpop.f32.mrf.mxu0
      %v907 = vadd.f32 %v766, %v906
      %v908 = vand.u32 %v228, 4294901760
      %909 = vmatmul.f32.gmra.mxu0 %v908
      %v910 = vpop.f32.mrf.mxu0
      %v911 = vadd.f32 %v772, %v910
      %v912 = vand.u32 %v231, 4294901760
      %913 = vmatmul.f32.gmra.mxu0 %v912
      %v914 = vpop.f32.mrf.mxu0
      %v915 = vadd.f32 %v778, %v914
      %v916 = vand.u32 %v234, 4294901760
      %917 = vmatmul.f32.gmra.mxu0 %v916
      %v918 = vpop.f32.mrf.mxu0
      %v919 = vadd.f32 %v784, %v918
      %v920 = vand.u32 %v237, 4294901760
      %921 = vmatmul.f32.gmra.mxu0 %v920
      %v922 = vpop.f32.mrf.mxu0
      %v923 = vadd.f32 %v790, %v922
      %v924 = vand.u32 %v240, 4294901760
      %925 = vmatmul.f32.gmra.mxu0 %v924
      %v926 = vpop.f32.mrf.mxu0
      %v927 = vadd.f32 %v796, %v926
      %v928 = vand.u32 %v243, 4294901760
      %929 = vmatmul.f32.gmra.mxu0 %v928
      %v930 = vpop.f32.mrf.mxu0
      %v931 = vadd.f32 %v802, %v930
      %v932 = vand.u32 %v246, 4294901760
      %933 = vmatmul.f32.gmra.mxu0 %v932
      %v934 = vpop.f32.mrf.mxu0
      %v935 = vadd.f32 %v808, %v934
      %v936 = vand.u32 %v249, 4294901760
      %937 = vmatmul.f32.gmra.mxu0 %v936
      %v938 = vpop.f32.mrf.mxu0
      %v939 = vadd.f32 %v814, %v938
      %v940 = vand.u32 %v252, 4294901760
      %941 = vmatmul.f32.gmra.mxu0 %v940
      %v942 = vpop.f32.mrf.mxu0
      %v943 = vadd.f32 %v820, %v942
      %v944 = vand.u32 %v255, 4294901760
      %945 = vmatmul.f32.gmra.mxu0 %v944
      %v946 = vpop.f32.mrf.mxu0
      %v947 = vadd.f32 %v826, %v946
      %v948 = vand.u32 %v258, 4294901760
      %949 = vmatmul.f32.gmra.mxu0 %v948
      %v950 = vpop.f32.mrf.mxu0
      %v951 = vadd.f32 %v832, %v950
      %v952 = vand.u32 %v261, 4294901760
      %953 = vmatmul.f32.gmra.mxu0 %v952
      %v954 = vpop.f32.mrf.mxu0
      %v955 = vadd.f32 %v838, %v954
      %956 = vdwg.mxu0
      %957 = vmatpush.msra.mxu0 0.0
      %958 = vmatpush.msra.mxu0 0.0
      %959 = vmatpush.msra.mxu0 0.0
      %960 = vmatpush.msra.mxu0 0.0
      %961 = vmatpush.msra.mxu0 0.0
      %962 = vmatpush.msra.mxu0 0.0
      %963 = vmatpush.msra.mxu0 0.0
      %964 = vmatpush.msra.mxu0 0.0
      %v965 = vand.u32 %v200, 4294901760
      %966 = vmatpush.msra.mxu0 %v965
      %v967 = vand.u32 %v199, 4294901760
      %968 = vmatpush.msra.mxu0 %v967
      %v969 = vand.u32 %v198, 4294901760
      %970 = vmatpush.msra.mxu0 %v969
      %v971 = vand.u32 %v197, 4294901760
      %972 = vmatpush.msra.mxu0 %v971
      %v973 = vand.u32 %v196, 4294901760
      %974 = vmatpush.msra.mxu0 %v973
      %v975 = vand.u32 %v195, 4294901760
      %976 = vmatpush.msra.mxu0 %v975
      %v977 = vand.u32 %v194, 4294901760
      %978 = vmatpush.msra.mxu0 %v977
      %v979 = vand.u32 %v193, 4294901760
      %980 = vmatpush.msra.mxu0 %v979
      %v981 = vand.u32 %v207, 4294901760
      %982 = vmatmul.f32.gmra.mxu0 %v981
      %v983 = vpop.f32.mrf.mxu0
      %v984 = vadd.f32 %v883, %v983
      %v985 = vand.u32 %v210, 4294901760
      %986 = vmatmul.f32.gmra.mxu0 %v985
      %v987 = vpop.f32.mrf.mxu0
      %v988 = vadd.f32 %v887, %v987
      %v989 = vand.u32 %v213, 4294901760
      %990 = vmatmul.f32.gmra.mxu0 %v989
      %v991 = vpop.f32.mrf.mxu0
      %v992 = vadd.f32 %v891, %v991
      %v993 = vand.u32 %v216, 4294901760
      %994 = vmatmul.f32.gmra.mxu0 %v993
      %v995 = vpop.f32.mrf.mxu0
      %v996 = vadd.f32 %v895, %v995
      %v997 = vand.u32 %v219, 4294901760
      %998 = vmatmul.f32.gmra.mxu0 %v997
      %v999 = vpop.f32.mrf.mxu0
      %v1000 = vadd.f32 %v899, %v999
      %v1001 = vand.u32 %v222, 4294901760
      %1002 = vmatmul.f32.gmra.mxu0 %v1001
      %v1003 = vpop.f32.mrf.mxu0
      %v1004 = vadd.f32 %v903, %v1003
      %v1005 = vand.u32 %v225, 4294901760
      %1006 = vmatmul.f32.gmra.mxu0 %v1005
      %v1007 = vpop.f32.mrf.mxu0
      %v1008 = vadd.f32 %v907, %v1007
      %v1009 = vand.u32 %v228, 4294901760
      %1010 = vmatmul.f32.gmra.mxu0 %v1009
      %v1011 = vpop.f32.mrf.mxu0
      %v1012 = vadd.f32 %v911, %v1011
      %v1013 = vand.u32 %v231, 4294901760
      %1014 = vmatmul.f32.gmra.mxu0 %v1013
      %v1015 = vpop.f32.mrf.mxu0
      %v1016 = vadd.f32 %v915, %v1015
      %v1017 = vand.u32 %v234, 4294901760
      %1018 = vmatmul.f32.gmra.mxu0 %v1017
      %v1019 = vpop.f32.mrf.mxu0
      %v1020 = vadd.f32 %v919, %v1019
      %v1021 = vand.u32 %v237, 4294901760
      %1022 = vmatmul.f32.gmra.mxu0 %v1021
      %v1023 = vpop.f32.mrf.mxu0
      %v1024 = vadd.f32 %v923, %v1023
      %v1025 = vand.u32 %v240, 4294901760
      %1026 = vmatmul.f32.gmra.mxu0 %v1025
      %v1027 = vpop.f32.mrf.mxu0
      %v1028 = vadd.f32 %v927, %v1027
      %v1029 = vand.u32 %v243, 4294901760
      %1030 = vmatmul.f32.gmra.mxu0 %v1029
      %v1031 = vpop.f32.mrf.mxu0
      %v1032 = vadd.f32 %v931, %v1031
      %v1033 = vand.u32 %v246, 4294901760
      %1034 = vmatmul.f32.gmra.mxu0 %v1033
      %v1035 = vpop.f32.mrf.mxu0
      %v1036 = vadd.f32 %v935, %v1035
      %v1037 = vand.u32 %v249, 4294901760
      %1038 = vmatmul.f32.gmra.mxu0 %v1037
      %v1039 = vpop.f32.mrf.mxu0
      %v1040 = vadd.f32 %v939, %v1039
      %v1041 = vand.u32 %v252, 4294901760
      %1042 = vmatmul.f32.gmra.mxu0 %v1041
      %v1043 = vpop.f32.mrf.mxu0
      %v1044 = vadd.f32 %v943, %v1043
      %v1045 = vand.u32 %v255, 4294901760
      %1046 = vmatmul.f32.gmra.mxu0 %v1045
      %v1047 = vpop.f32.mrf.mxu0
      %v1048 = vadd.f32 %v947, %v1047
      %v1049 = vand.u32 %v258, 4294901760
      %1050 = vmatmul.f32.gmra.mxu0 %v1049
      %v1051 = vpop.f32.mrf.mxu0
      %v1052 = vadd.f32 %v951, %v1051
      %v1053 = vand.u32 %v261, 4294901760
      %1054 = vmatmul.f32.gmra.mxu0 %v1053
      %v1055 = vpop.f32.mrf.mxu0
      %v1056 = vadd.f32 %v955, %v1055
      %1057 = vdwg.mxu0
      %v1058 = vand.u32 2147483647, %v984
      %vm1059 = vcmp.le.f32.partialorder %v1058, 0.7853982
      %vm1060 = vcmp.lt.s32.totalorder %v984, 0
      %v1061 = vand.u32 %v984, 2139095040
      %v1062 = vshrl.u32 %v1061, 23
      %v1063 = vsub.s32 %v1062, 127
      %v1064 = vand.u32 2147483647, %v984
      %v1065 = vand.u32 %v1064, 8388607
      %v1066 = vor.u32 %v1065, 8388608
      %v1067 = vsub.s32 0, %v1066
      %v1068 = vadd.s32 %v1063, 1
      %vm1069 = vcmp.gt.s32.totalorder %v1068, 0
      %v1070 = vsel %vm1069, %v1068, 0
      %v1071 = vshrl.u32 %v1070, 5
      %v1072 = vand.u32 %v1070, 31
      %v1073 = vsub.s32 32, %v1072
      %v1074 = vshrl.u32 683565275, %v1073
      %v1075 = vshll.u32 683565275, %v1072
      %v1076 = vshrl.u32 2475754826, %v1073
      %v1077 = vor.u32 %v1075, %v1076
      %v1078 = vshll.u32 2475754826, %v1072
      %v1079 = vshrl.u32 2131351028, %v1073
      %v1080 = vor.u32 %v1078, %v1079
      %v1081 = vshll.u32 2131351028, %v1072
      %v1082 = vshrl.u32 2102212464, %v1073
      %v1083 = vor.u32 %v1081, %v1082
      %v1084 = vshll.u32 2102212464, %v1072
      %v1085 = vshrl.u32 920167782, %v1073
      %v1086 = vor.u32 %v1084, %v1085
      %v1087 = vshll.u32 920167782, %v1072
      %v1088 = vshrl.u32 1326507024, %v1073
      %v1089 = vor.u32 %v1087, %v1088
      %vm1090 = vcmp.lt.s32.totalorder %v1071, 1
      %vm1091 = vcmp.lt.s32.totalorder %v1071, 2
      %vm1092 = vcmp.lt.s32.totalorder %v1071, 3
      %vm1093 = vcmp.lt.s32.totalorder %v1071, 4
      %v1094 = vsel %vm1090, %v1074, %v1077
      %v1095 = vsel %vm1093, %v1083, 2102212464
      %v1096 = vsel %vm1092, %v1080, %v1095
      %v1097 = vsel %vm1091, %v1094, %v1096
      %v1098 = vsel %vm1090, %v1077, %v1080
      %v1099 = vsel %vm1093, %v1086, 920167782
      %v1100 = vsel %vm1092, %v1083, %v1099
      %v1101 = vsel %vm1091, %v1098, %v1100
      %v1102 = vsel %vm1090, %v1080, %v1083
      %v1103 = vsel %vm1093, %v1089, 1326507024
      %v1104 = vsel %vm1092, %v1086, %v1103
      %v1105 = vsel %vm1091, %v1102, %v1104
      %v1106 = vshll.u32 %v1066, 8
      %v1107 = vand.u32 %v1106, 65535
      %v1108 = vshrl.u32 %v1106, 16
      %v1109 = vand.u32 %v1105, 65535
      %v1110 = vshrl.u32 %v1105, 16
      %v1111 = vmul.u32 %v1107, %v1109
      %v1112 = vmul.u32 %v1107, %v1110
      %v1113 = vmul.u32 %v1108, %v1109
      %v1114 = vmul.u32 %v1108, %v1110
      %v1115 = vshll.u32 %v1112, 16
      %v1116 = vshrl.u32 %v1112, 16
      %v1117 = vshll.u32 %v1113, 16
      %v1118 = vshrl.u32 %v1113, 16
      %vm1119 = vc.u32 %v1111, %v1115
      %v1120 = vsel %vm1119, 1, 0
      %v1121 = vadd.s32 %v1111, %v1115
      %v1122 = vadd.s32 %v1114, %v1120
      %vm1123 = vc.u32 %v1121, %v1117
      %v1124 = vsel %vm1123, 1, 0
      %v1125 = vadd.s32 %v1121, %v1117
      %v1126 = vadd.s32 %v1122, %v1124
      %v1127 = vadd.s32 %v1126, %v1116
      %v1128 = vadd.s32 %v1127, %v1118
      %v1129 = vand.u32 %v1106, 65535
      %v1130 = vshrl.u32 %v1106, 16
      %v1131 = vand.u32 %v1101, 65535
      %v1132 = vshrl.u32 %v1101, 16
      %v1133 = vmul.u32 %v1129, %v1131
      %v1134 = vmul.u32 %v1129, %v1132
      %v1135 = vmul.u32 %v1130, %v1131
      %v1136 = vmul.u32 %v1130, %v1132
      %v1137 = vshll.u32 %v1134, 16
      %v1138 = vshrl.u32 %v1134, 16
      %v1139 = vshll.u32 %v1135, 16
      %v1140 = vshrl.u32 %v1135, 16
      %vm1141 = vc.u32 %v1133, %v1137
      %v1142 = vsel %vm1141, 1, 0
      %v1143 = vadd.s32 %v1133, %v1137
      %v1144 = vadd.s32 %v1136, %v1142
      %vm1145 = vc.u32 %v1143, %v1139
      %v1146 = vsel %vm1145, 1, 0
      %v1147 = vadd.s32 %v1143, %v1139
      %v1148 = vadd.s32 %v1144, %v1146
      %v1149 = vadd.s32 %v1148, %v1138
      %v1150 = vadd.s32 %v1149, %v1140
      %v1151 = vmul.u32 %v1106, %v1097
      %v1152 = vadd.s32 %v1128, %v1147
      %vm1153 = vc.u32 %v1128, %v1147
      %v1154 = vadd.s32 %v1150, 1
      %v1155 = vsel %vm1153, %v1154, %v1150
      %v1156 = vadd.s32 %v1151, %v1155
      %v1157 = vadd.s32 %v1156, 536870912
      %v1158 = vshrl.u32 %v1157, 30
      %v1159 = vshll.u32 %v1158, 30
      %v1160 = vsub.s32 %v1156, %v1159
      %vm1161 = vcmp.lt.s32.totalorder %v1160, 0
      %v1162 = vsub.s32 0, %v1160
      %v1163 = vsel %vm1161, %v1162, %v1160
      %v1164 = vclz %v1163
      %v1165 = vsub.s32 %v1164, 2
      %vm1166 = vcmp.gt.s32.totalorder 0, %v1165
      %v1167 = vsel %vm1166, 0, %v1165
      %v1168 = vsub.s32 32, %v1167
      %v1169 = vshll.u32 %v1160, %v1167
      %v1170 = vshrl.u32 %v1152, %v1168
      %v1171 = vor.u32 %v1169, %v1170
      %v1172 = vsub.s32 4294967266, %v1167
      %v1173 = vadd.s32 %v1172, 127
      %v1174 = vshll.u32 %v1173, 23
      %v1175 = vor.u32 4788187, %v1174
      %v1176 = vand.u32 2147483647, %v1175
      %v1178 = vcvt.s32.f32 %v1171
      %v1179 = vmul.f32 %v1178, %v1176
      %v1180 = vxor.u32 %v1179, 2147483648
      %v1181 = vsel %vm1060, %v1180, %v1179
      %v1182 = vsub.s32 4, %v1158
      %v1183 = vsel %vm1060, %v1182, %v1158
      %v1184 = vsel %vm1059, %v984, %v1181
      %v1185 = vsel %vm1059, 0, %v1183
      %v1186 = vmul.f32 %v1184, %v1184
      %v1187 = vmul.f32 %v1186, -0.001358992
      %v1188 = vadd.f32 %v1187, 0.041655596
      %v1189 = vmul.f32 %v1186, %v1188
      %v1190 = vadd.f32 %v1189, -0.4999988
      %v1191 = vmul.f32 %v1186, %v1190
      %v1192 = vadd.f32 1.0, %v1191
      %v1193 = vmul.f32 %v1184, %v1184
      %v1194 = vmul.f32 %v1193, -0.00019511016
      %v1195 = vadd.f32 %v1194, 0.008332121
      %v1196 = vmul.f32 %v1193, %v1195
      %v1197 = vadd.f32 %v1196, -0.16666654
      %v1198 = vmul.f32 %v1193, %v1197
      %v1199 = vadd.f32 %v1198, 1.0
      %v1200 = vmul.f32 %v1199, %v1184
      %vm1201 = vweird.f32 %v984
      %v1202 = vadd.s32 %v1185, 3
      %v1203 = vand.u32 %v1202, 3
      %vm1204 = vcmp.lt.s32.totalorder %v1203, 2
      %vm1205 = vcmp.eq.s32.totalorder %v1203, 0
      %v1206 = vxor.u32 %v1200, 2147483648
      %v1207 = vsel %vm1205, %v1192, %v1206
      %vm1208 = vcmp.eq.s32.totalorder %v1203, 2
      %v1209 = vxor.u32 %v1192, 2147483648
      %v1210 = vsel %vm1208, %v1209, %v1200
      %v1211 = vsel %vm1204, %v1207, %v1210
      %v1212 = vsel %vm1201, nan, %v1211
      %v1213 = vand.u32 2147483647, %v988
      %vm1214 = vcmp.le.f32.partialorder %v1213, 0.7853982
      %vm1215 = vcmp.lt.s32.totalorder %v988, 0
      %v1216 = vand.u32 %v988, 2139095040
      %v1217 = vshrl.u32 %v1216, 23
      %v1218 = vsub.s32 %v1217, 127
      %v1219 = vand.u32 2147483647, %v988
      %v1220 = vand.u32 %v1219, 8388607
      %v1221 = vor.u32 %v1220, 8388608
      %v1222 = vsub.s32 0, %v1221
      %v1223 = vadd.s32 %v1218, 1
      %vm1224 = vcmp.gt.s32.totalorder %v1223, 0
      %v1225 = vsel %vm1224, %v1223, 0
      %v1226 = vshrl.u32 %v1225, 5
      %v1227 = vand.u32 %v1225, 31
      %v1228 = vsub.s32 32, %v1227
      %v1229 = vshrl.u32 683565275, %v1228
      %v1230 = vshll.u32 683565275, %v1227
      %v1231 = vshrl.u32 2475754826, %v1228
      %v1232 = vor.u32 %v1230, %v1231
      %v1233 = vshll.u32 2475754826, %v1227
      %v1234 = vshrl.u32 2131351028, %v1228
      %v1235 = vor.u32 %v1233, %v1234
      %v1236 = vshll.u32 2131351028, %v1227
      %v1237 = vshrl.u32 2102212464, %v1228
      %v1238 = vor.u32 %v1236, %v1237
      %v1239 = vshll.u32 2102212464, %v1227
      %v1240 = vshrl.u32 920167782, %v1228
      %v1241 = vor.u32 %v1239, %v1240
      %v1242 = vshll.u32 920167782, %v1227
      %v1243 = vshrl.u32 1326507024, %v1228
      %v1244 = vor.u32 %v1242, %v1243
      %vm1245 = vcmp.lt.s32.totalorder %v1226, 1
      %vm1246 = vcmp.lt.s32.totalorder %v1226, 2
      %vm1247 = vcmp.lt.s32.totalorder %v1226, 3
      %vm1248 = vcmp.lt.s32.totalorder %v1226, 4
      %v1249 = vsel %vm1245, %v1229, %v1232
      %v1250 = vsel %vm1248, %v1238, 2102212464
      %v1251 = vsel %vm1247, %v1235, %v1250
      %v1252 = vsel %vm1246, %v1249, %v1251
      %v1253 = vsel %vm1245, %v1232, %v1235
      %v1254 = vsel %vm1248, %v1241, 920167782
      %v1255 = vsel %vm1247, %v1238, %v1254
      %v1256 = vsel %vm1246, %v1253, %v1255
      %v1257 = vsel %vm1245, %v1235, %v1238
      %v1258 = vsel %vm1248, %v1244, 1326507024
      %v1259 = vsel %vm1247, %v1241, %v1258
      %v1260 = vsel %vm1246, %v1257, %v1259
      %v1261 = vshll.u32 %v1221, 8
      %v1262 = vand.u32 %v1261, 65535
      %v1263 = vshrl.u32 %v1261, 16
      %v1264 = vand.u32 %v1260, 65535
      %v1265 = vshrl.u32 %v1260, 16
      %v1266 = vmul.u32 %v1262, %v1264
      %v1267 = vmul.u32 %v1262, %v1265
      %v1268 = vmul.u32 %v1263, %v1264
      %v1269 = vmul.u32 %v1263, %v1265
      %v1270 = vshll.u32 %v1267, 16
      %v1271 = vshrl.u32 %v1267, 16
      %v1272 = vshll.u32 %v1268, 16
      %v1273 = vshrl.u32 %v1268, 16
      %vm1274 = vc.u32 %v1266, %v1270
      %v1275 = vsel %vm1274, 1, 0
      %v1276 = vadd.s32 %v1266, %v1270
      %v1277 = vadd.s32 %v1269, %v1275
      %vm1278 = vc.u32 %v1276, %v1272
      %v1279 = vsel %vm1278, 1, 0
      %v1280 = vadd.s32 %v1276, %v1272
      %v1281 = vadd.s32 %v1277, %v1279
      %v1282 = vadd.s32 %v1281, %v1271
      %v1283 = vadd.s32 %v1282, %v1273
      %v1284 = vand.u32 %v1261, 65535
      %v1285 = vshrl.u32 %v1261, 16
      %v1286 = vand.u32 %v1256, 65535
      %v1287 = vshrl.u32 %v1256, 16
      %v1288 = vmul.u32 %v1284, %v1286
      %v1289 = vmul.u32 %v1284, %v1287
      %v1290 = vmul.u32 %v1285, %v1286
      %v1291 = vmul.u32 %v1285, %v1287
      %v1292 = vshll.u32 %v1289, 16
      %v1293 = vshrl.u32 %v1289, 16
      %v1294 = vshll.u32 %v1290, 16
      %v1295 = vshrl.u32 %v1290, 16
      %vm1296 = vc.u32 %v1288, %v1292
      %v1297 = vsel %vm1296, 1, 0
      %v1298 = vadd.s32 %v1288, %v1292
      %v1299 = vadd.s32 %v1291, %v1297
      %vm1300 = vc.u32 %v1298, %v1294
      %v1301 = vsel %vm1300, 1, 0
      %v1302 = vadd.s32 %v1298, %v1294
      %v1303 = vadd.s32 %v1299, %v1301
      %v1304 = vadd.s32 %v1303, %v1293
      %v1305 = vadd.s32 %v1304, %v1295
      %v1306 = vmul.u32 %v1261, %v1252
      %v1307 = vadd.s32 %v1283, %v1302
      %vm1308 = vc.u32 %v1283, %v1302
      %v1309 = vadd.s32 %v1305, 1
      %v1310 = vsel %vm1308, %v1309, %v1305
      %v1311 = vadd.s32 %v1306, %v1310
      %v1312 = vadd.s32 %v1311, 536870912
      %v1313 = vshrl.u32 %v1312, 30
      %v1314 = vshll.u32 %v1313, 30
      %v1315 = vsub.s32 %v1311, %v1314
      %vm1316 = vcmp.lt.s32.totalorder %v1315, 0
      %v1317 = vsub.s32 0, %v1315
      %v1318 = vsel %vm1316, %v1317, %v1315
      %v1319 = vclz %v1318
      %v1320 = vsub.s32 %v1319, 2
      %vm1321 = vcmp.gt.s32.totalorder 0, %v1320
      %v1322 = vsel %vm1321, 0, %v1320
      %v1323 = vsub.s32 32, %v1322
      %v1324 = vshll.u32 %v1315, %v1322
      %v1325 = vshrl.u32 %v1307, %v1323
      %v1326 = vor.u32 %v1324, %v1325
      %v1327 = vsub.s32 4294967266, %v1322
      %v1328 = vadd.s32 %v1327, 127
      %v1329 = vshll.u32 %v1328, 23
      %v1330 = vor.u32 4788187, %v1329
      %v1331 = vand.u32 2147483647, %v1330
      %v1333 = vcvt.s32.f32 %v1326
      %v1334 = vmul.f32 %v1333, %v1331
      %v1335 = vxor.u32 %v1334, 2147483648
      %v1336 = vsel %vm1215, %v1335, %v1334
      %v1337 = vsub.s32 4, %v1313
      %v1338 = vsel %vm1215, %v1337, %v1313
      %v1339 = vsel %vm1214, %v988, %v1336
      %v1340 = vsel %vm1214, 0, %v1338
      %v1341 = vmul.f32 %v1339, %v1339
      %v1342 = vmul.f32 %v1341, -0.001358992
      %v1343 = vadd.f32 %v1342, 0.041655596
      %v1344 = vmul.f32 %v1341, %v1343
      %v1345 = vadd.f32 %v1344, -0.4999988
      %v1346 = vmul.f32 %v1341, %v1345
      %v1347 = vadd.f32 1.0, %v1346
      %v1348 = vmul.f32 %v1339, %v1339
      %v1349 = vmul.f32 %v1348, -0.00019511016
      %v1350 = vadd.f32 %v1349, 0.008332121
      %v1351 = vmul.f32 %v1348, %v1350
      %v1352 = vadd.f32 %v1351, -0.16666654
      %v1353 = vmul.f32 %v1348, %v1352
      %v1354 = vadd.f32 %v1353, 1.0
      %v1355 = vmul.f32 %v1354, %v1339
      %vm1356 = vweird.f32 %v988
      %v1357 = vadd.s32 %v1340, 3
      %v1358 = vand.u32 %v1357, 3
      %vm1359 = vcmp.lt.s32.totalorder %v1358, 2
      %vm1360 = vcmp.eq.s32.totalorder %v1358, 0
      %v1361 = vxor.u32 %v1355, 2147483648
      %v1362 = vsel %vm1360, %v1347, %v1361
      %vm1363 = vcmp.eq.s32.totalorder %v1358, 2
      %v1364 = vxor.u32 %v1347, 2147483648
      %v1365 = vsel %vm1363, %v1364, %v1355
      %v1366 = vsel %vm1359, %v1362, %v1365
      %v1367 = vsel %vm1356, nan, %v1366
      %v1368 = vand.u32 2147483647, %v992
      %vm1369 = vcmp.le.f32.partialorder %v1368, 0.7853982
      %vm1370 = vcmp.lt.s32.totalorder %v992, 0
      %v1371 = vand.u32 %v992, 2139095040
      %v1372 = vshrl.u32 %v1371, 23
      %v1373 = vsub.s32 %v1372, 127
      %v1374 = vand.u32 2147483647, %v992
      %v1375 = vand.u32 %v1374, 8388607
      %v1376 = vor.u32 %v1375, 8388608
      %v1377 = vsub.s32 0, %v1376
      %v1378 = vadd.s32 %v1373, 1
      %vm1379 = vcmp.gt.s32.totalorder %v1378, 0
      %v1380 = vsel %vm1379, %v1378, 0
      %v1381 = vshrl.u32 %v1380, 5
      %v1382 = vand.u32 %v1380, 31
      %v1383 = vsub.s32 32, %v1382
      %v1384 = vshrl.u32 683565275, %v1383
      %v1385 = vshll.u32 683565275, %v1382
      %v1386 = vshrl.u32 2475754826, %v1383
      %v1387 = vor.u32 %v1385, %v1386
      %v1388 = vshll.u32 2475754826, %v1382
      %v1389 = vshrl.u32 2131351028, %v1383
      %v1390 = vor.u32 %v1388, %v1389
      %v1391 = vshll.u32 2131351028, %v1382
      %v1392 = vshrl.u32 2102212464, %v1383
      %v1393 = vor.u32 %v1391, %v1392
      %v1394 = vshll.u32 2102212464, %v1382
      %v1395 = vshrl.u32 920167782, %v1383
      %v1396 = vor.u32 %v1394, %v1395
      %v1397 = vshll.u32 920167782, %v1382
      %v1398 = vshrl.u32 1326507024, %v1383
      %v1399 = vor.u32 %v1397, %v1398
      %vm1400 = vcmp.lt.s32.totalorder %v1381, 1
      %vm1401 = vcmp.lt.s32.totalorder %v1381, 2
      %vm1402 = vcmp.lt.s32.totalorder %v1381, 3
      %vm1403 = vcmp.lt.s32.totalorder %v1381, 4
      %v1404 = vsel %vm1400, %v1384, %v1387
      %v1405 = vsel %vm1403, %v1393, 2102212464
      %v1406 = vsel %vm1402, %v1390, %v1405
      %v1407 = vsel %vm1401, %v1404, %v1406
      %v1408 = vsel %vm1400, %v1387, %v1390
      %v1409 = vsel %vm1403, %v1396, 920167782
      %v1410 = vsel %vm1402, %v1393, %v1409
      %v1411 = vsel %vm1401, %v1408, %v1410
      %v1412 = vsel %vm1400, %v1390, %v1393
      %v1413 = vsel %vm1403, %v1399, 1326507024
      %v1414 = vsel %vm1402, %v1396, %v1413
      %v1415 = vsel %vm1401, %v1412, %v1414
      %v1416 = vshll.u32 %v1376, 8
      %v1417 = vand.u32 %v1416, 65535
      %v1418 = vshrl.u32 %v1416, 16
      %v1419 = vand.u32 %v1415, 65535
      %v1420 = vshrl.u32 %v1415, 16
      %v1421 = vmul.u32 %v1417, %v1419
      %v1422 = vmul.u32 %v1417, %v1420
      %v1423 = vmul.u32 %v1418, %v1419
      %v1424 = vmul.u32 %v1418, %v1420
      %v1425 = vshll.u32 %v1422, 16
      %v1426 = vshrl.u32 %v1422, 16
      %v1427 = vshll.u32 %v1423, 16
      %v1428 = vshrl.u32 %v1423, 16
      %vm1429 = vc.u32 %v1421, %v1425
      %v1430 = vsel %vm1429, 1, 0
      %v1431 = vadd.s32 %v1421, %v1425
      %v1432 = vadd.s32 %v1424, %v1430
      %vm1433 = vc.u32 %v1431, %v1427
      %v1434 = vsel %vm1433, 1, 0
      %v1435 = vadd.s32 %v1431, %v1427
      %v1436 = vadd.s32 %v1432, %v1434
      %v1437 = vadd.s32 %v1436, %v1426
      %v1438 = vadd.s32 %v1437, %v1428
      %v1439 = vand.u32 %v1416, 65535
      %v1440 = vshrl.u32 %v1416, 16
      %v1441 = vand.u32 %v1411, 65535
      %v1442 = vshrl.u32 %v1411, 16
      %v1443 = vmul.u32 %v1439, %v1441
      %v1444 = vmul.u32 %v1439, %v1442
      %v1445 = vmul.u32 %v1440, %v1441
      %v1446 = vmul.u32 %v1440, %v1442
      %v1447 = vshll.u32 %v1444, 16
      %v1448 = vshrl.u32 %v1444, 16
      %v1449 = vshll.u32 %v1445, 16
      %v1450 = vshrl.u32 %v1445, 16
      %vm1451 = vc.u32 %v1443, %v1447
      %v1452 = vsel %vm1451, 1, 0
      %v1453 = vadd.s32 %v1443, %v1447
      %v1454 = vadd.s32 %v1446, %v1452
      %vm1455 = vc.u32 %v1453, %v1449
      %v1456 = vsel %vm1455, 1, 0
      %v1457 = vadd.s32 %v1453, %v1449
      %v1458 = vadd.s32 %v1454, %v1456
      %v1459 = vadd.s32 %v1458, %v1448
      %v1460 = vadd.s32 %v1459, %v1450
      %v1461 = vmul.u32 %v1416, %v1407
      %v1462 = vadd.s32 %v1438, %v1457
      %vm1463 = vc.u32 %v1438, %v1457
      %v1464 = vadd.s32 %v1460, 1
      %v1465 = vsel %vm1463, %v1464, %v1460
      %v1466 = vadd.s32 %v1461, %v1465
      %v1467 = vadd.s32 %v1466, 536870912
      %v1468 = vshrl.u32 %v1467, 30
      %v1469 = vshll.u32 %v1468, 30
      %v1470 = vsub.s32 %v1466, %v1469
      %vm1471 = vcmp.lt.s32.totalorder %v1470, 0
      %v1472 = vsub.s32 0, %v1470
      %v1473 = vsel %vm1471, %v1472, %v1470
      %v1474 = vclz %v1473
      %v1475 = vsub.s32 %v1474, 2
      %vm1476 = vcmp.gt.s32.totalorder 0, %v1475
      %v1477 = vsel %vm1476, 0, %v1475
      %v1478 = vsub.s32 32, %v1477
      %v1479 = vshll.u32 %v1470, %v1477
      %v1480 = vshrl.u32 %v1462, %v1478
      %v1481 = vor.u32 %v1479, %v1480
      %v1482 = vsub.s32 4294967266, %v1477
      %v1483 = vadd.s32 %v1482, 127
      %v1484 = vshll.u32 %v1483, 23
      %v1485 = vor.u32 4788187, %v1484
      %v1486 = vand.u32 2147483647, %v1485
      %v1488 = vcvt.s32.f32 %v1481
      %v1489 = vmul.f32 %v1488, %v1486
      %v1490 = vxor.u32 %v1489, 2147483648
      %v1491 = vsel %vm1370, %v1490, %v1489
      %v1492 = vsub.s32 4, %v1468
      %v1493 = vsel %vm1370, %v1492, %v1468
      %v1494 = vsel %vm1369, %v992, %v1491
      %v1495 = vsel %vm1369, 0, %v1493
      %v1496 = vmul.f32 %v1494, %v1494
      %v1497 = vmul.f32 %v1496, -0.001358992
      %v1498 = vadd.f32 %v1497, 0.041655596
      %v1499 = vmul.f32 %v1496, %v1498
      %v1500 = vadd.f32 %v1499, -0.4999988
      %v1501 = vmul.f32 %v1496, %v1500
      %v1502 = vadd.f32 1.0, %v1501
      %v1503 = vmul.f32 %v1494, %v1494
      %v1504 = vmul.f32 %v1503, -0.00019511016
      %v1505 = vadd.f32 %v1504, 0.008332121
      %v1506 = vmul.f32 %v1503, %v1505
      %v1507 = vadd.f32 %v1506, -0.16666654
      %v1508 = vmul.f32 %v1503, %v1507
      %v1509 = vadd.f32 %v1508, 1.0
      %v1510 = vmul.f32 %v1509, %v1494
      %vm1511 = vweird.f32 %v992
      %v1512 = vadd.s32 %v1495, 3
      %v1513 = vand.u32 %v1512, 3
      %vm1514 = vcmp.lt.s32.totalorder %v1513, 2
      %vm1515 = vcmp.eq.s32.totalorder %v1513, 0
      %v1516 = vxor.u32 %v1510, 2147483648
      %v1517 = vsel %vm1515, %v1502, %v1516
      %vm1518 = vcmp.eq.s32.totalorder %v1513, 2
      %v1519 = vxor.u32 %v1502, 2147483648
      %v1520 = vsel %vm1518, %v1519, %v1510
      %v1521 = vsel %vm1514, %v1517, %v1520
      %v1522 = vsel %vm1511, nan, %v1521
      %v1523 = vand.u32 2147483647, %v996
      %vm1524 = vcmp.le.f32.partialorder %v1523, 0.7853982
      %vm1525 = vcmp.lt.s32.totalorder %v996, 0
      %v1526 = vand.u32 %v996, 2139095040
      %v1527 = vshrl.u32 %v1526, 23
      %v1528 = vsub.s32 %v1527, 127
      %v1529 = vand.u32 2147483647, %v996
      %v1530 = vand.u32 %v1529, 8388607
      %v1531 = vor.u32 %v1530, 8388608
      %v1532 = vsub.s32 0, %v1531
      %v1533 = vadd.s32 %v1528, 1
      %vm1534 = vcmp.gt.s32.totalorder %v1533, 0
      %v1535 = vsel %vm1534, %v1533, 0
      %v1536 = vshrl.u32 %v1535, 5
      %v1537 = vand.u32 %v1535, 31
      %v1538 = vsub.s32 32, %v1537
      %v1539 = vshrl.u32 683565275, %v1538
      %v1540 = vshll.u32 683565275, %v1537
      %v1541 = vshrl.u32 2475754826, %v1538
      %v1542 = vor.u32 %v1540, %v1541
      %v1543 = vshll.u32 2475754826, %v1537
      %v1544 = vshrl.u32 2131351028, %v1538
      %v1545 = vor.u32 %v1543, %v1544
      %v1546 = vshll.u32 2131351028, %v1537
      %v1547 = vshrl.u32 2102212464, %v1538
      %v1548 = vor.u32 %v1546, %v1547
      %v1549 = vshll.u32 2102212464, %v1537
      %v1550 = vshrl.u32 920167782, %v1538
      %v1551 = vor.u32 %v1549, %v1550
      %v1552 = vshll.u32 920167782, %v1537
      %v1553 = vshrl.u32 1326507024, %v1538
      %v1554 = vor.u32 %v1552, %v1553
      %vm1555 = vcmp.lt.s32.totalorder %v1536, 1
      %vm1556 = vcmp.lt.s32.totalorder %v1536, 2
      %vm1557 = vcmp.lt.s32.totalorder %v1536, 3
      %vm1558 = vcmp.lt.s32.totalorder %v1536, 4
      %v1559 = vsel %vm1555, %v1539, %v1542
      %v1560 = vsel %vm1558, %v1548, 2102212464
      %v1561 = vsel %vm1557, %v1545, %v1560
      %v1562 = vsel %vm1556, %v1559, %v1561
      %v1563 = vsel %vm1555, %v1542, %v1545
      %v1564 = vsel %vm1558, %v1551, 920167782
      %v1565 = vsel %vm1557, %v1548, %v1564
      %v1566 = vsel %vm1556, %v1563, %v1565
      %v1567 = vsel %vm1555, %v1545, %v1548
      %v1568 = vsel %vm1558, %v1554, 1326507024
      %v1569 = vsel %vm1557, %v1551, %v1568
      %v1570 = vsel %vm1556, %v1567, %v1569
      %v1571 = vshll.u32 %v1531, 8
      %v1572 = vand.u32 %v1571, 65535
      %v1573 = vshrl.u32 %v1571, 16
      %v1574 = vand.u32 %v1570, 65535
      %v1575 = vshrl.u32 %v1570, 16
      %v1576 = vmul.u32 %v1572, %v1574
      %v1577 = vmul.u32 %v1572, %v1575
      %v1578 = vmul.u32 %v1573, %v1574
      %v1579 = vmul.u32 %v1573, %v1575
      %v1580 = vshll.u32 %v1577, 16
      %v1581 = vshrl.u32 %v1577, 16
      %v1582 = vshll.u32 %v1578, 16
      %v1583 = vshrl.u32 %v1578, 16
      %vm1584 = vc.u32 %v1576, %v1580
      %v1585 = vsel %vm1584, 1, 0
      %v1586 = vadd.s32 %v1576, %v1580
      %v1587 = vadd.s32 %v1579, %v1585
      %vm1588 = vc.u32 %v1586, %v1582
      %v1589 = vsel %vm1588, 1, 0
      %v1590 = vadd.s32 %v1586, %v1582
      %v1591 = vadd.s32 %v1587, %v1589
      %v1592 = vadd.s32 %v1591, %v1581
      %v1593 = vadd.s32 %v1592, %v1583
      %v1594 = vand.u32 %v1571, 65535
      %v1595 = vshrl.u32 %v1571, 16
      %v1596 = vand.u32 %v1566, 65535
      %v1597 = vshrl.u32 %v1566, 16
      %v1598 = vmul.u32 %v1594, %v1596
      %v1599 = vmul.u32 %v1594, %v1597
      %v1600 = vmul.u32 %v1595, %v1596
      %v1601 = vmul.u32 %v1595, %v1597
      %v1602 = vshll.u32 %v1599, 16
      %v1603 = vshrl.u32 %v1599, 16
      %v1604 = vshll.u32 %v1600, 16
      %v1605 = vshrl.u32 %v1600, 16
      %vm1606 = vc.u32 %v1598, %v1602
      %v1607 = vsel %vm1606, 1, 0
      %v1608 = vadd.s32 %v1598, %v1602
      %v1609 = vadd.s32 %v1601, %v1607
      %vm1610 = vc.u32 %v1608, %v1604
      %v1611 = vsel %vm1610, 1, 0
      %v1612 = vadd.s32 %v1608, %v1604
      %v1613 = vadd.s32 %v1609, %v1611
      %v1614 = vadd.s32 %v1613, %v1603
      %v1615 = vadd.s32 %v1614, %v1605
      %v1616 = vmul.u32 %v1571, %v1562
      %v1617 = vadd.s32 %v1593, %v1612
      %vm1618 = vc.u32 %v1593, %v1612
      %v1619 = vadd.s32 %v1615, 1
      %v1620 = vsel %vm1618, %v1619, %v1615
      %v1621 = vadd.s32 %v1616, %v1620
      %v1622 = vadd.s32 %v1621, 536870912
      %v1623 = vshrl.u32 %v1622, 30
      %v1624 = vshll.u32 %v1623, 30
      %v1625 = vsub.s32 %v1621, %v1624
      %vm1626 = vcmp.lt.s32.totalorder %v1625, 0
      %v1627 = vsub.s32 0, %v1625
      %v1628 = vsel %vm1626, %v1627, %v1625
      %v1629 = vclz %v1628
      %v1630 = vsub.s32 %v1629, 2
      %vm1631 = vcmp.gt.s32.totalorder 0, %v1630
      %v1632 = vsel %vm1631, 0, %v1630
      %v1633 = vsub.s32 32, %v1632
      %v1634 = vshll.u32 %v1625, %v1632
      %v1635 = vshrl.u32 %v1617, %v1633
      %v1636 = vor.u32 %v1634, %v1635
      %v1637 = vsub.s32 4294967266, %v1632
      %v1638 = vadd.s32 %v1637, 127
      %v1639 = vshll.u32 %v1638, 23
      %v1640 = vor.u32 4788187, %v1639
      %v1641 = vand.u32 2147483647, %v1640
      %v1643 = vcvt.s32.f32 %v1636
      %v1644 = vmul.f32 %v1643, %v1641
      %v1645 = vxor.u32 %v1644, 2147483648
      %v1646 = vsel %vm1525, %v1645, %v1644
      %v1647 = vsub.s32 4, %v1623
      %v1648 = vsel %vm1525, %v1647, %v1623
      %v1649 = vsel %vm1524, %v996, %v1646
      %v1650 = vsel %vm1524, 0, %v1648
      %v1651 = vmul.f32 %v1649, %v1649
      %v1652 = vmul.f32 %v1651, -0.001358992
      %v1653 = vadd.f32 %v1652, 0.041655596
      %v1654 = vmul.f32 %v1651, %v1653
      %v1655 = vadd.f32 %v1654, -0.4999988
      %v1656 = vmul.f32 %v1651, %v1655
      %v1657 = vadd.f32 1.0, %v1656
      %v1658 = vmul.f32 %v1649, %v1649
      %v1659 = vmul.f32 %v1658, -0.00019511016
      %v1660 = vadd.f32 %v1659, 0.008332121
      %v1661 = vmul.f32 %v1658, %v1660
      %v1662 = vadd.f32 %v1661, -0.16666654
      %v1663 = vmul.f32 %v1658, %v1662
      %v1664 = vadd.f32 %v1663, 1.0
      %v1665 = vmul.f32 %v1664, %v1649
      %vm1666 = vweird.f32 %v996
      %v1667 = vadd.s32 %v1650, 3
      %v1668 = vand.u32 %v1667, 3
      %vm1669 = vcmp.lt.s32.totalorder %v1668, 2
      %vm1670 = vcmp.eq.s32.totalorder %v1668, 0
      %v1671 = vxor.u32 %v1665, 2147483648
      %v1672 = vsel %vm1670, %v1657, %v1671
      %vm1673 = vcmp.eq.s32.totalorder %v1668, 2
      %v1674 = vxor.u32 %v1657, 2147483648
      %v1675 = vsel %vm1673, %v1674, %v1665
      %v1676 = vsel %vm1669, %v1672, %v1675
      %v1677 = vsel %vm1666, nan, %v1676
      %v1678 = vand.u32 2147483647, %v1000
      %vm1679 = vcmp.le.f32.partialorder %v1678, 0.7853982
      %vm1680 = vcmp.lt.s32.totalorder %v1000, 0
      %v1681 = vand.u32 %v1000, 2139095040
      %v1682 = vshrl.u32 %v1681, 23
      %v1683 = vsub.s32 %v1682, 127
      %v1684 = vand.u32 2147483647, %v1000
      %v1685 = vand.u32 %v1684, 8388607
      %v1686 = vor.u32 %v1685, 8388608
      %v1687 = vsub.s32 0, %v1686
      %v1688 = vadd.s32 %v1683, 1
      %vm1689 = vcmp.gt.s32.totalorder %v1688, 0
      %v1690 = vsel %vm1689, %v1688, 0
      %v1691 = vshrl.u32 %v1690, 5
      %v1692 = vand.u32 %v1690, 31
      %v1693 = vsub.s32 32, %v1692
      %v1694 = vshrl.u32 683565275, %v1693
      %v1695 = vshll.u32 683565275, %v1692
      %v1696 = vshrl.u32 2475754826, %v1693
      %v1697 = vor.u32 %v1695, %v1696
      %v1698 = vshll.u32 2475754826, %v1692
      %v1699 = vshrl.u32 2131351028, %v1693
      %v1700 = vor.u32 %v1698, %v1699
      %v1701 = vshll.u32 2131351028, %v1692
      %v1702 = vshrl.u32 2102212464, %v1693
      %v1703 = vor.u32 %v1701, %v1702
      %v1704 = vshll.u32 2102212464, %v1692
      %v1705 = vshrl.u32 920167782, %v1693
      %v1706 = vor.u32 %v1704, %v1705
      %v1707 = vshll.u32 920167782, %v1692
      %v1708 = vshrl.u32 1326507024, %v1693
      %v1709 = vor.u32 %v1707, %v1708
      %vm1710 = vcmp.lt.s32.totalorder %v1691, 1
      %vm1711 = vcmp.lt.s32.totalorder %v1691, 2
      %vm1712 = vcmp.lt.s32.totalorder %v1691, 3
      %vm1713 = vcmp.lt.s32.totalorder %v1691, 4
      %v1714 = vsel %vm1710, %v1694, %v1697
      %v1715 = vsel %vm1713, %v1703, 2102212464
      %v1716 = vsel %vm1712, %v1700, %v1715
      %v1717 = vsel %vm1711, %v1714, %v1716
      %v1718 = vsel %vm1710, %v1697, %v1700
      %v1719 = vsel %vm1713, %v1706, 920167782
      %v1720 = vsel %vm1712, %v1703, %v1719
      %v1721 = vsel %vm1711, %v1718, %v1720
      %v1722 = vsel %vm1710, %v1700, %v1703
      %v1723 = vsel %vm1713, %v1709, 1326507024
      %v1724 = vsel %vm1712, %v1706, %v1723
      %v1725 = vsel %vm1711, %v1722, %v1724
      %v1726 = vshll.u32 %v1686, 8
      %v1727 = vand.u32 %v1726, 65535
      %v1728 = vshrl.u32 %v1726, 16
      %v1729 = vand.u32 %v1725, 65535
      %v1730 = vshrl.u32 %v1725, 16
      %v1731 = vmul.u32 %v1727, %v1729
      %v1732 = vmul.u32 %v1727, %v1730
      %v1733 = vmul.u32 %v1728, %v1729
      %v1734 = vmul.u32 %v1728, %v1730
      %v1735 = vshll.u32 %v1732, 16
      %v1736 = vshrl.u32 %v1732, 16
      %v1737 = vshll.u32 %v1733, 16
      %v1738 = vshrl.u32 %v1733, 16
      %vm1739 = vc.u32 %v1731, %v1735
      %v1740 = vsel %vm1739, 1, 0
      %v1741 = vadd.s32 %v1731, %v1735
      %v1742 = vadd.s32 %v1734, %v1740
      %vm1743 = vc.u32 %v1741, %v1737
      %v1744 = vsel %vm1743, 1, 0
      %v1745 = vadd.s32 %v1741, %v1737
      %v1746 = vadd.s32 %v1742, %v1744
      %v1747 = vadd.s32 %v1746, %v1736
      %v1748 = vadd.s32 %v1747, %v1738
      %v1749 = vand.u32 %v1726, 65535
      %v1750 = vshrl.u32 %v1726, 16
      %v1751 = vand.u32 %v1721, 65535
      %v1752 = vshrl.u32 %v1721, 16
      %v1753 = vmul.u32 %v1749, %v1751
      %v1754 = vmul.u32 %v1749, %v1752
      %v1755 = vmul.u32 %v1750, %v1751
      %v1756 = vmul.u32 %v1750, %v1752
      %v1757 = vshll.u32 %v1754, 16
      %v1758 = vshrl.u32 %v1754, 16
      %v1759 = vshll.u32 %v1755, 16
      %v1760 = vshrl.u32 %v1755, 16
      %vm1761 = vc.u32 %v1753, %v1757
      %v1762 = vsel %vm1761, 1, 0
      %v1763 = vadd.s32 %v1753, %v1757
      %v1764 = vadd.s32 %v1756, %v1762
      %vm1765 = vc.u32 %v1763, %v1759
      %v1766 = vsel %vm1765, 1, 0
      %v1767 = vadd.s32 %v1763, %v1759
      %v1768 = vadd.s32 %v1764, %v1766
      %v1769 = vadd.s32 %v1768, %v1758
      %v1770 = vadd.s32 %v1769, %v1760
      %v1771 = vmul.u32 %v1726, %v1717
      %v1772 = vadd.s32 %v1748, %v1767
      %vm1773 = vc.u32 %v1748, %v1767
      %v1774 = vadd.s32 %v1770, 1
      %v1775 = vsel %vm1773, %v1774, %v1770
      %v1776 = vadd.s32 %v1771, %v1775
      %v1777 = vadd.s32 %v1776, 536870912
      %v1778 = vshrl.u32 %v1777, 30
      %v1779 = vshll.u32 %v1778, 30
      %v1780 = vsub.s32 %v1776, %v1779
      %vm1781 = vcmp.lt.s32.totalorder %v1780, 0
      %v1782 = vsub.s32 0, %v1780
      %v1783 = vsel %vm1781, %v1782, %v1780
      %v1784 = vclz %v1783
      %v1785 = vsub.s32 %v1784, 2
      %vm1786 = vcmp.gt.s32.totalorder 0, %v1785
      %v1787 = vsel %vm1786, 0, %v1785
      %v1788 = vsub.s32 32, %v1787
      %v1789 = vshll.u32 %v1780, %v1787
      %v1790 = vshrl.u32 %v1772, %v1788
      %v1791 = vor.u32 %v1789, %v1790
      %v1792 = vsub.s32 4294967266, %v1787
      %v1793 = vadd.s32 %v1792, 127
      %v1794 = vshll.u32 %v1793, 23
      %v1795 = vor.u32 4788187, %v1794
      %v1796 = vand.u32 2147483647, %v1795
      %v1798 = vcvt.s32.f32 %v1791
      %v1799 = vmul.f32 %v1798, %v1796
      %v1800 = vxor.u32 %v1799, 2147483648
      %v1801 = vsel %vm1680, %v1800, %v1799
      %v1802 = vsub.s32 4, %v1778
      %v1803 = vsel %vm1680, %v1802, %v1778
      %v1804 = vsel %vm1679, %v1000, %v1801
      %v1805 = vsel %vm1679, 0, %v1803
      %v1806 = vmul.f32 %v1804, %v1804
      %v1807 = vmul.f32 %v1806, -0.001358992
      %v1808 = vadd.f32 %v1807, 0.041655596
      %v1809 = vmul.f32 %v1806, %v1808
      %v1810 = vadd.f32 %v1809, -0.4999988
      %v1811 = vmul.f32 %v1806, %v1810
      %v1812 = vadd.f32 1.0, %v1811
      %v1813 = vmul.f32 %v1804, %v1804
      %v1814 = vmul.f32 %v1813, -0.00019511016
      %v1815 = vadd.f32 %v1814, 0.008332121
      %v1816 = vmul.f32 %v1813, %v1815
      %v1817 = vadd.f32 %v1816, -0.16666654
      %v1818 = vmul.f32 %v1813, %v1817
      %v1819 = vadd.f32 %v1818, 1.0
      %v1820 = vmul.f32 %v1819, %v1804
      %vm1821 = vweird.f32 %v1000
      %v1822 = vadd.s32 %v1805, 3
      %v1823 = vand.u32 %v1822, 3
      %vm1824 = vcmp.lt.s32.totalorder %v1823, 2
      %vm1825 = vcmp.eq.s32.totalorder %v1823, 0
      %v1826 = vxor.u32 %v1820, 2147483648
      %v1827 = vsel %vm1825, %v1812, %v1826
      %vm1828 = vcmp.eq.s32.totalorder %v1823, 2
      %v1829 = vxor.u32 %v1812, 2147483648
      %v1830 = vsel %vm1828, %v1829, %v1820
      %v1831 = vsel %vm1824, %v1827, %v1830
      %v1832 = vsel %vm1821, nan, %v1831
      %v1833 = vand.u32 2147483647, %v1004
      %vm1834 = vcmp.le.f32.partialorder %v1833, 0.7853982
      %vm1835 = vcmp.lt.s32.totalorder %v1004, 0
      %v1836 = vand.u32 %v1004, 2139095040
      %v1837 = vshrl.u32 %v1836, 23
      %v1838 = vsub.s32 %v1837, 127
      %v1839 = vand.u32 2147483647, %v1004
      %v1840 = vand.u32 %v1839, 8388607
      %v1841 = vor.u32 %v1840, 8388608
      %v1842 = vsub.s32 0, %v1841
      %v1843 = vadd.s32 %v1838, 1
      %vm1844 = vcmp.gt.s32.totalorder %v1843, 0
      %v1845 = vsel %vm1844, %v1843, 0
      %v1846 = vshrl.u32 %v1845, 5
      %v1847 = vand.u32 %v1845, 31
      %v1848 = vsub.s32 32, %v1847
      %v1849 = vshrl.u32 683565275, %v1848
      %v1850 = vshll.u32 683565275, %v1847
      %v1851 = vshrl.u32 2475754826, %v1848
      %v1852 = vor.u32 %v1850, %v1851
      %v1853 = vshll.u32 2475754826, %v1847
      %v1854 = vshrl.u32 2131351028, %v1848
      %v1855 = vor.u32 %v1853, %v1854
      %v1856 = vshll.u32 2131351028, %v1847
      %v1857 = vshrl.u32 2102212464, %v1848
      %v1858 = vor.u32 %v1856, %v1857
      %v1859 = vshll.u32 2102212464, %v1847
      %v1860 = vshrl.u32 920167782, %v1848
      %v1861 = vor.u32 %v1859, %v1860
      %v1862 = vshll.u32 920167782, %v1847
      %v1863 = vshrl.u32 1326507024, %v1848
      %v1864 = vor.u32 %v1862, %v1863
      %vm1865 = vcmp.lt.s32.totalorder %v1846, 1
      %vm1866 = vcmp.lt.s32.totalorder %v1846, 2
      %vm1867 = vcmp.lt.s32.totalorder %v1846, 3
      %vm1868 = vcmp.lt.s32.totalorder %v1846, 4
      %v1869 = vsel %vm1865, %v1849, %v1852
      %v1870 = vsel %vm1868, %v1858, 2102212464
      %v1871 = vsel %vm1867, %v1855, %v1870
      %v1872 = vsel %vm1866, %v1869, %v1871
      %v1873 = vsel %vm1865, %v1852, %v1855
      %v1874 = vsel %vm1868, %v1861, 920167782
      %v1875 = vsel %vm1867, %v1858, %v1874
      %v1876 = vsel %vm1866, %v1873, %v1875
      %v1877 = vsel %vm1865, %v1855, %v1858
      %v1878 = vsel %vm1868, %v1864, 1326507024
      %v1879 = vsel %vm1867, %v1861, %v1878
      %v1880 = vsel %vm1866, %v1877, %v1879
      %v1881 = vshll.u32 %v1841, 8
      %v1882 = vand.u32 %v1881, 65535
      %v1883 = vshrl.u32 %v1881, 16
      %v1884 = vand.u32 %v1880, 65535
      %v1885 = vshrl.u32 %v1880, 16
      %v1886 = vmul.u32 %v1882, %v1884
      %v1887 = vmul.u32 %v1882, %v1885
      %v1888 = vmul.u32 %v1883, %v1884
      %v1889 = vmul.u32 %v1883, %v1885
      %v1890 = vshll.u32 %v1887, 16
      %v1891 = vshrl.u32 %v1887, 16
      %v1892 = vshll.u32 %v1888, 16
      %v1893 = vshrl.u32 %v1888, 16
      %vm1894 = vc.u32 %v1886, %v1890
      %v1895 = vsel %vm1894, 1, 0
      %v1896 = vadd.s32 %v1886, %v1890
      %v1897 = vadd.s32 %v1889, %v1895
      %vm1898 = vc.u32 %v1896, %v1892
      %v1899 = vsel %vm1898, 1, 0
      %v1900 = vadd.s32 %v1896, %v1892
      %v1901 = vadd.s32 %v1897, %v1899
      %v1902 = vadd.s32 %v1901, %v1891
      %v1903 = vadd.s32 %v1902, %v1893
      %v1904 = vand.u32 %v1881, 65535
      %v1905 = vshrl.u32 %v1881, 16
      %v1906 = vand.u32 %v1876, 65535
      %v1907 = vshrl.u32 %v1876, 16
      %v1908 = vmul.u32 %v1904, %v1906
      %v1909 = vmul.u32 %v1904, %v1907
      %v1910 = vmul.u32 %v1905, %v1906
      %v1911 = vmul.u32 %v1905, %v1907
      %v1912 = vshll.u32 %v1909, 16
      %v1913 = vshrl.u32 %v1909, 16
      %v1914 = vshll.u32 %v1910, 16
      %v1915 = vshrl.u32 %v1910, 16
      %vm1916 = vc.u32 %v1908, %v1912
      %v1917 = vsel %vm1916, 1, 0
      %v1918 = vadd.s32 %v1908, %v1912
      %v1919 = vadd.s32 %v1911, %v1917
      %vm1920 = vc.u32 %v1918, %v1914
      %v1921 = vsel %vm1920, 1, 0
      %v1922 = vadd.s32 %v1918, %v1914
      %v1923 = vadd.s32 %v1919, %v1921
      %v1924 = vadd.s32 %v1923, %v1913
      %v1925 = vadd.s32 %v1924, %v1915
      %v1926 = vmul.u32 %v1881, %v1872
      %v1927 = vadd.s32 %v1903, %v1922
      %vm1928 = vc.u32 %v1903, %v1922
      %v1929 = vadd.s32 %v1925, 1
      %v1930 = vsel %vm1928, %v1929, %v1925
      %v1931 = vadd.s32 %v1926, %v1930
      %v1932 = vadd.s32 %v1931, 536870912
      %v1933 = vshrl.u32 %v1932, 30
      %v1934 = vshll.u32 %v1933, 30
      %v1935 = vsub.s32 %v1931, %v1934
      %vm1936 = vcmp.lt.s32.totalorder %v1935, 0
      %v1937 = vsub.s32 0, %v1935
      %v1938 = vsel %vm1936, %v1937, %v1935
      %v1939 = vclz %v1938
      %v1940 = vsub.s32 %v1939, 2
      %vm1941 = vcmp.gt.s32.totalorder 0, %v1940
      %v1942 = vsel %vm1941, 0, %v1940
      %v1943 = vsub.s32 32, %v1942
      %v1944 = vshll.u32 %v1935, %v1942
      %v1945 = vshrl.u32 %v1927, %v1943
      %v1946 = vor.u32 %v1944, %v1945
      %v1947 = vsub.s32 4294967266, %v1942
      %v1948 = vadd.s32 %v1947, 127
      %v1949 = vshll.u32 %v1948, 23
      %v1950 = vor.u32 4788187, %v1949
      %v1951 = vand.u32 2147483647, %v1950
      %v1953 = vcvt.s32.f32 %v1946
      %v1954 = vmul.f32 %v1953, %v1951
      %v1955 = vxor.u32 %v1954, 2147483648
      %v1956 = vsel %vm1835, %v1955, %v1954
      %v1957 = vsub.s32 4, %v1933
      %v1958 = vsel %vm1835, %v1957, %v1933
      %v1959 = vsel %vm1834, %v1004, %v1956
      %v1960 = vsel %vm1834, 0, %v1958
      %v1961 = vmul.f32 %v1959, %v1959
      %v1962 = vmul.f32 %v1961, -0.001358992
      %v1963 = vadd.f32 %v1962, 0.041655596
      %v1964 = vmul.f32 %v1961, %v1963
      %v1965 = vadd.f32 %v1964, -0.4999988
      %v1966 = vmul.f32 %v1961, %v1965
      %v1967 = vadd.f32 1.0, %v1966
      %v1968 = vmul.f32 %v1959, %v1959
      %v1969 = vmul.f32 %v1968, -0.00019511016
      %v1970 = vadd.f32 %v1969, 0.008332121
      %v1971 = vmul.f32 %v1968, %v1970
      %v1972 = vadd.f32 %v1971, -0.16666654
      %v1973 = vmul.f32 %v1968, %v1972
      %v1974 = vadd.f32 %v1973, 1.0
      %v1975 = vmul.f32 %v1974, %v1959
      %vm1976 = vweird.f32 %v1004
      %v1977 = vadd.s32 %v1960, 3
      %v1978 = vand.u32 %v1977, 3
      %vm1979 = vcmp.lt.s32.totalorder %v1978, 2
      %vm1980 = vcmp.eq.s32.totalorder %v1978, 0
      %v1981 = vxor.u32 %v1975, 2147483648
      %v1982 = vsel %vm1980, %v1967, %v1981
      %vm1983 = vcmp.eq.s32.totalorder %v1978, 2
      %v1984 = vxor.u32 %v1967, 2147483648
      %v1985 = vsel %vm1983, %v1984, %v1975
      %v1986 = vsel %vm1979, %v1982, %v1985
      %v1987 = vsel %vm1976, nan, %v1986
      %v1988 = vand.u32 2147483647, %v1008
      %vm1989 = vcmp.le.f32.partialorder %v1988, 0.7853982
      %vm1990 = vcmp.lt.s32.totalorder %v1008, 0
      %v1991 = vand.u32 %v1008, 2139095040
      %v1992 = vshrl.u32 %v1991, 23
      %v1993 = vsub.s32 %v1992, 127
      %v1994 = vand.u32 2147483647, %v1008
      %v1995 = vand.u32 %v1994, 8388607
      %v1996 = vor.u32 %v1995, 8388608
      %v1997 = vsub.s32 0, %v1996
      %v1998 = vadd.s32 %v1993, 1
      %vm1999 = vcmp.gt.s32.totalorder %v1998, 0
      %v2000 = vsel %vm1999, %v1998, 0
      %v2001 = vshrl.u32 %v2000, 5
      %v2002 = vand.u32 %v2000, 31
      %v2003 = vsub.s32 32, %v2002
      %v2004 = vshrl.u32 683565275, %v2003
      %v2005 = vshll.u32 683565275, %v2002
      %v2006 = vshrl.u32 2475754826, %v2003
      %v2007 = vor.u32 %v2005, %v2006
      %v2008 = vshll.u32 2475754826, %v2002
      %v2009 = vshrl.u32 2131351028, %v2003
      %v2010 = vor.u32 %v2008, %v2009
      %v2011 = vshll.u32 2131351028, %v2002
      %v2012 = vshrl.u32 2102212464, %v2003
      %v2013 = vor.u32 %v2011, %v2012
      %v2014 = vshll.u32 2102212464, %v2002
      %v2015 = vshrl.u32 920167782, %v2003
      %v2016 = vor.u32 %v2014, %v2015
      %v2017 = vshll.u32 920167782, %v2002
      %v2018 = vshrl.u32 1326507024, %v2003
      %v2019 = vor.u32 %v2017, %v2018
      %vm2020 = vcmp.lt.s32.totalorder %v2001, 1
      %vm2021 = vcmp.lt.s32.totalorder %v2001, 2
      %vm2022 = vcmp.lt.s32.totalorder %v2001, 3
      %vm2023 = vcmp.lt.s32.totalorder %v2001, 4
      %v2024 = vsel %vm2020, %v2004, %v2007
      %v2025 = vsel %vm2023, %v2013, 2102212464
      %v2026 = vsel %vm2022, %v2010, %v2025
      %v2027 = vsel %vm2021, %v2024, %v2026
      %v2028 = vsel %vm2020, %v2007, %v2010
      %v2029 = vsel %vm2023, %v2016, 920167782
      %v2030 = vsel %vm2022, %v2013, %v2029
      %v2031 = vsel %vm2021, %v2028, %v2030
      %v2032 = vsel %vm2020, %v2010, %v2013
      %v2033 = vsel %vm2023, %v2019, 1326507024
      %v2034 = vsel %vm2022, %v2016, %v2033
      %v2035 = vsel %vm2021, %v2032, %v2034
      %v2036 = vshll.u32 %v1996, 8
      %v2037 = vand.u32 %v2036, 65535
      %v2038 = vshrl.u32 %v2036, 16
      %v2039 = vand.u32 %v2035, 65535
      %v2040 = vshrl.u32 %v2035, 16
      %v2041 = vmul.u32 %v2037, %v2039
      %v2042 = vmul.u32 %v2037, %v2040
      %v2043 = vmul.u32 %v2038, %v2039
      %v2044 = vmul.u32 %v2038, %v2040
      %v2045 = vshll.u32 %v2042, 16
      %v2046 = vshrl.u32 %v2042, 16
      %v2047 = vshll.u32 %v2043, 16
      %v2048 = vshrl.u32 %v2043, 16
      %vm2049 = vc.u32 %v2041, %v2045
      %v2050 = vsel %vm2049, 1, 0
      %v2051 = vadd.s32 %v2041, %v2045
      %v2052 = vadd.s32 %v2044, %v2050
      %vm2053 = vc.u32 %v2051, %v2047
      %v2054 = vsel %vm2053, 1, 0
      %v2055 = vadd.s32 %v2051, %v2047
      %v2056 = vadd.s32 %v2052, %v2054
      %v2057 = vadd.s32 %v2056, %v2046
      %v2058 = vadd.s32 %v2057, %v2048
      %v2059 = vand.u32 %v2036, 65535
      %v2060 = vshrl.u32 %v2036, 16
      %v2061 = vand.u32 %v2031, 65535
      %v2062 = vshrl.u32 %v2031, 16
      %v2063 = vmul.u32 %v2059, %v2061
      %v2064 = vmul.u32 %v2059, %v2062
      %v2065 = vmul.u32 %v2060, %v2061
      %v2066 = vmul.u32 %v2060, %v2062
      %v2067 = vshll.u32 %v2064, 16
      %v2068 = vshrl.u32 %v2064, 16
      %v2069 = vshll.u32 %v2065, 16
      %v2070 = vshrl.u32 %v2065, 16
      %vm2071 = vc.u32 %v2063, %v2067
      %v2072 = vsel %vm2071, 1, 0
      %v2073 = vadd.s32 %v2063, %v2067
      %v2074 = vadd.s32 %v2066, %v2072
      %vm2075 = vc.u32 %v2073, %v2069
      %v2076 = vsel %vm2075, 1, 0
      %v2077 = vadd.s32 %v2073, %v2069
      %v2078 = vadd.s32 %v2074, %v2076
      %v2079 = vadd.s32 %v2078, %v2068
      %v2080 = vadd.s32 %v2079, %v2070
      %v2081 = vmul.u32 %v2036, %v2027
      %v2082 = vadd.s32 %v2058, %v2077
      %vm2083 = vc.u32 %v2058, %v2077
      %v2084 = vadd.s32 %v2080, 1
      %v2085 = vsel %vm2083, %v2084, %v2080
      %v2086 = vadd.s32 %v2081, %v2085
      %v2087 = vadd.s32 %v2086, 536870912
      %v2088 = vshrl.u32 %v2087, 30
      %v2089 = vshll.u32 %v2088, 30
      %v2090 = vsub.s32 %v2086, %v2089
      %vm2091 = vcmp.lt.s32.totalorder %v2090, 0
      %v2092 = vsub.s32 0, %v2090
      %v2093 = vsel %vm2091, %v2092, %v2090
      %v2094 = vclz %v2093
      %v2095 = vsub.s32 %v2094, 2
      %vm2096 = vcmp.gt.s32.totalorder 0, %v2095
      %v2097 = vsel %vm2096, 0, %v2095
      %v2098 = vsub.s32 32, %v2097
      %v2099 = vshll.u32 %v2090, %v2097
      %v2100 = vshrl.u32 %v2082, %v2098
      %v2101 = vor.u32 %v2099, %v2100
      %v2102 = vsub.s32 4294967266, %v2097
      %v2103 = vadd.s32 %v2102, 127
      %v2104 = vshll.u32 %v2103, 23
      %v2105 = vor.u32 4788187, %v2104
      %v2106 = vand.u32 2147483647, %v2105
      %v2108 = vcvt.s32.f32 %v2101
      %v2109 = vmul.f32 %v2108, %v2106
      %v2110 = vxor.u32 %v2109, 2147483648
      %v2111 = vsel %vm1990, %v2110, %v2109
      %v2112 = vsub.s32 4, %v2088
      %v2113 = vsel %vm1990, %v2112, %v2088
      %v2114 = vsel %vm1989, %v1008, %v2111
      %v2115 = vsel %vm1989, 0, %v2113
      %v2116 = vmul.f32 %v2114, %v2114
      %v2117 = vmul.f32 %v2116, -0.001358992
      %v2118 = vadd.f32 %v2117, 0.041655596
      %v2119 = vmul.f32 %v2116, %v2118
      %v2120 = vadd.f32 %v2119, -0.4999988
      %v2121 = vmul.f32 %v2116, %v2120
      %v2122 = vadd.f32 1.0, %v2121
      %v2123 = vmul.f32 %v2114, %v2114
      %v2124 = vmul.f32 %v2123, -0.00019511016
      %v2125 = vadd.f32 %v2124, 0.008332121
      %v2126 = vmul.f32 %v2123, %v2125
      %v2127 = vadd.f32 %v2126, -0.16666654
      %v2128 = vmul.f32 %v2123, %v2127
      %v2129 = vadd.f32 %v2128, 1.0
      %v2130 = vmul.f32 %v2129, %v2114
      %vm2131 = vweird.f32 %v1008
      %v2132 = vadd.s32 %v2115, 3
      %v2133 = vand.u32 %v2132, 3
      %vm2134 = vcmp.lt.s32.totalorder %v2133, 2
      %vm2135 = vcmp.eq.s32.totalorder %v2133, 0
      %v2136 = vxor.u32 %v2130, 2147483648
      %v2137 = vsel %vm2135, %v2122, %v2136
      %vm2138 = vcmp.eq.s32.totalorder %v2133, 2
      %v2139 = vxor.u32 %v2122, 2147483648
      %v2140 = vsel %vm2138, %v2139, %v2130
      %v2141 = vsel %vm2134, %v2137, %v2140
      %v2142 = vsel %vm2131, nan, %v2141
      %v2143 = vand.u32 2147483647, %v1012
      %vm2144 = vcmp.le.f32.partialorder %v2143, 0.7853982
      %vm2145 = vcmp.lt.s32.totalorder %v1012, 0
      %v2146 = vand.u32 %v1012, 2139095040
      %v2147 = vshrl.u32 %v2146, 23
      %v2148 = vsub.s32 %v2147, 127
      %v2149 = vand.u32 2147483647, %v1012
      %v2150 = vand.u32 %v2149, 8388607
      %v2151 = vor.u32 %v2150, 8388608
      %v2152 = vsub.s32 0, %v2151
      %v2153 = vadd.s32 %v2148, 1
      %vm2154 = vcmp.gt.s32.totalorder %v2153, 0
      %v2155 = vsel %vm2154, %v2153, 0
      %v2156 = vshrl.u32 %v2155, 5
      %v2157 = vand.u32 %v2155, 31
      %v2158 = vsub.s32 32, %v2157
      %v2159 = vshrl.u32 683565275, %v2158
      %v2160 = vshll.u32 683565275, %v2157
      %v2161 = vshrl.u32 2475754826, %v2158
      %v2162 = vor.u32 %v2160, %v2161
      %v2163 = vshll.u32 2475754826, %v2157
      %v2164 = vshrl.u32 2131351028, %v2158
      %v2165 = vor.u32 %v2163, %v2164
      %v2166 = vshll.u32 2131351028, %v2157
      %v2167 = vshrl.u32 2102212464, %v2158
      %v2168 = vor.u32 %v2166, %v2167
      %v2169 = vshll.u32 2102212464, %v2157
      %v2170 = vshrl.u32 920167782, %v2158
      %v2171 = vor.u32 %v2169, %v2170
      %v2172 = vshll.u32 920167782, %v2157
      %v2173 = vshrl.u32 1326507024, %v2158
      %v2174 = vor.u32 %v2172, %v2173
      %vm2175 = vcmp.lt.s32.totalorder %v2156, 1
      %vm2176 = vcmp.lt.s32.totalorder %v2156, 2
      %vm2177 = vcmp.lt.s32.totalorder %v2156, 3
      %vm2178 = vcmp.lt.s32.totalorder %v2156, 4
      %v2179 = vsel %vm2175, %v2159, %v2162
      %v2180 = vsel %vm2178, %v2168, 2102212464
      %v2181 = vsel %vm2177, %v2165, %v2180
      %v2182 = vsel %vm2176, %v2179, %v2181
      %v2183 = vsel %vm2175, %v2162, %v2165
      %v2184 = vsel %vm2178, %v2171, 920167782
      %v2185 = vsel %vm2177, %v2168, %v2184
      %v2186 = vsel %vm2176, %v2183, %v2185
      %v2187 = vsel %vm2175, %v2165, %v2168
      %v2188 = vsel %vm2178, %v2174, 1326507024
      %v2189 = vsel %vm2177, %v2171, %v2188
      %v2190 = vsel %vm2176, %v2187, %v2189
      %v2191 = vshll.u32 %v2151, 8
      %v2192 = vand.u32 %v2191, 65535
      %v2193 = vshrl.u32 %v2191, 16
      %v2194 = vand.u32 %v2190, 65535
      %v2195 = vshrl.u32 %v2190, 16
      %v2196 = vmul.u32 %v2192, %v2194
      %v2197 = vmul.u32 %v2192, %v2195
      %v2198 = vmul.u32 %v2193, %v2194
      %v2199 = vmul.u32 %v2193, %v2195
      %v2200 = vshll.u32 %v2197, 16
      %v2201 = vshrl.u32 %v2197, 16
      %v2202 = vshll.u32 %v2198, 16
      %v2203 = vshrl.u32 %v2198, 16
      %vm2204 = vc.u32 %v2196, %v2200
      %v2205 = vsel %vm2204, 1, 0
      %v2206 = vadd.s32 %v2196, %v2200
      %v2207 = vadd.s32 %v2199, %v2205
      %vm2208 = vc.u32 %v2206, %v2202
      %v2209 = vsel %vm2208, 1, 0
      %v2210 = vadd.s32 %v2206, %v2202
      %v2211 = vadd.s32 %v2207, %v2209
      %v2212 = vadd.s32 %v2211, %v2201
      %v2213 = vadd.s32 %v2212, %v2203
      %v2214 = vand.u32 %v2191, 65535
      %v2215 = vshrl.u32 %v2191, 16
      %v2216 = vand.u32 %v2186, 65535
      %v2217 = vshrl.u32 %v2186, 16
      %v2218 = vmul.u32 %v2214, %v2216
      %v2219 = vmul.u32 %v2214, %v2217
      %v2220 = vmul.u32 %v2215, %v2216
      %v2221 = vmul.u32 %v2215, %v2217
      %v2222 = vshll.u32 %v2219, 16
      %v2223 = vshrl.u32 %v2219, 16
      %v2224 = vshll.u32 %v2220, 16
      %v2225 = vshrl.u32 %v2220, 16
      %vm2226 = vc.u32 %v2218, %v2222
      %v2227 = vsel %vm2226, 1, 0
      %v2228 = vadd.s32 %v2218, %v2222
      %v2229 = vadd.s32 %v2221, %v2227
      %vm2230 = vc.u32 %v2228, %v2224
      %v2231 = vsel %vm2230, 1, 0
      %v2232 = vadd.s32 %v2228, %v2224
      %v2233 = vadd.s32 %v2229, %v2231
      %v2234 = vadd.s32 %v2233, %v2223
      %v2235 = vadd.s32 %v2234, %v2225
      %v2236 = vmul.u32 %v2191, %v2182
      %v2237 = vadd.s32 %v2213, %v2232
      %vm2238 = vc.u32 %v2213, %v2232
      %v2239 = vadd.s32 %v2235, 1
      %v2240 = vsel %vm2238, %v2239, %v2235
      %v2241 = vadd.s32 %v2236, %v2240
      %v2242 = vadd.s32 %v2241, 536870912
      %v2243 = vshrl.u32 %v2242, 30
      %v2244 = vshll.u32 %v2243, 30
      %v2245 = vsub.s32 %v2241, %v2244
      %vm2246 = vcmp.lt.s32.totalorder %v2245, 0
      %v2247 = vsub.s32 0, %v2245
      %v2248 = vsel %vm2246, %v2247, %v2245
      %v2249 = vclz %v2248
      %v2250 = vsub.s32 %v2249, 2
      %vm2251 = vcmp.gt.s32.totalorder 0, %v2250
      %v2252 = vsel %vm2251, 0, %v2250
      %v2253 = vsub.s32 32, %v2252
      %v2254 = vshll.u32 %v2245, %v2252
      %v2255 = vshrl.u32 %v2237, %v2253
      %v2256 = vor.u32 %v2254, %v2255
      %v2257 = vsub.s32 4294967266, %v2252
      %v2258 = vadd.s32 %v2257, 127
      %v2259 = vshll.u32 %v2258, 23
      %v2260 = vor.u32 4788187, %v2259
      %v2261 = vand.u32 2147483647, %v2260
      %v2263 = vcvt.s32.f32 %v2256
      %v2264 = vmul.f32 %v2263, %v2261
      %v2265 = vxor.u32 %v2264, 2147483648
      %v2266 = vsel %vm2145, %v2265, %v2264
      %v2267 = vsub.s32 4, %v2243
      %v2268 = vsel %vm2145, %v2267, %v2243
      %v2269 = vsel %vm2144, %v1012, %v2266
      %v2270 = vsel %vm2144, 0, %v2268
      %v2271 = vmul.f32 %v2269, %v2269
      %v2272 = vmul.f32 %v2271, -0.001358992
      %v2273 = vadd.f32 %v2272, 0.041655596
      %v2274 = vmul.f32 %v2271, %v2273
      %v2275 = vadd.f32 %v2274, -0.4999988
      %v2276 = vmul.f32 %v2271, %v2275
      %v2277 = vadd.f32 1.0, %v2276
      %v2278 = vmul.f32 %v2269, %v2269
      %v2279 = vmul.f32 %v2278, -0.00019511016
      %v2280 = vadd.f32 %v2279, 0.008332121
      %v2281 = vmul.f32 %v2278, %v2280
      %v2282 = vadd.f32 %v2281, -0.16666654
      %v2283 = vmul.f32 %v2278, %v2282
      %v2284 = vadd.f32 %v2283, 1.0
      %v2285 = vmul.f32 %v2284, %v2269
      %vm2286 = vweird.f32 %v1012
      %v2287 = vadd.s32 %v2270, 3
      %v2288 = vand.u32 %v2287, 3
      %vm2289 = vcmp.lt.s32.totalorder %v2288, 2
      %vm2290 = vcmp.eq.s32.totalorder %v2288, 0
      %v2291 = vxor.u32 %v2285, 2147483648
      %v2292 = vsel %vm2290, %v2277, %v2291
      %vm2293 = vcmp.eq.s32.totalorder %v2288, 2
      %v2294 = vxor.u32 %v2277, 2147483648
      %v2295 = vsel %vm2293, %v2294, %v2285
      %v2296 = vsel %vm2289, %v2292, %v2295
      %v2297 = vsel %vm2286, nan, %v2296
      %v2298 = vand.u32 2147483647, %v1016
      %vm2299 = vcmp.le.f32.partialorder %v2298, 0.7853982
      %vm2300 = vcmp.lt.s32.totalorder %v1016, 0
      %v2301 = vand.u32 %v1016, 2139095040
      %v2302 = vshrl.u32 %v2301, 23
      %v2303 = vsub.s32 %v2302, 127
      %v2304 = vand.u32 2147483647, %v1016
      %v2305 = vand.u32 %v2304, 8388607
      %v2306 = vor.u32 %v2305, 8388608
      %v2307 = vsub.s32 0, %v2306
      %v2308 = vadd.s32 %v2303, 1
      %vm2309 = vcmp.gt.s32.totalorder %v2308, 0
      %v2310 = vsel %vm2309, %v2308, 0
      %v2311 = vshrl.u32 %v2310, 5
      %v2312 = vand.u32 %v2310, 31
      %v2313 = vsub.s32 32, %v2312
      %v2314 = vshrl.u32 683565275, %v2313
      %v2315 = vshll.u32 683565275, %v2312
      %v2316 = vshrl.u32 2475754826, %v2313
      %v2317 = vor.u32 %v2315, %v2316
      %v2318 = vshll.u32 2475754826, %v2312
      %v2319 = vshrl.u32 2131351028, %v2313
      %v2320 = vor.u32 %v2318, %v2319
      %v2321 = vshll.u32 2131351028, %v2312
      %v2322 = vshrl.u32 2102212464, %v2313
      %v2323 = vor.u32 %v2321, %v2322
      %v2324 = vshll.u32 2102212464, %v2312
      %v2325 = vshrl.u32 920167782, %v2313
      %v2326 = vor.u32 %v2324, %v2325
      %v2327 = vshll.u32 920167782, %v2312
      %v2328 = vshrl.u32 1326507024, %v2313
      %v2329 = vor.u32 %v2327, %v2328
      %vm2330 = vcmp.lt.s32.totalorder %v2311, 1
      %vm2331 = vcmp.lt.s32.totalorder %v2311, 2
      %vm2332 = vcmp.lt.s32.totalorder %v2311, 3
      %vm2333 = vcmp.lt.s32.totalorder %v2311, 4
      %v2334 = vsel %vm2330, %v2314, %v2317
      %v2335 = vsel %vm2333, %v2323, 2102212464
      %v2336 = vsel %vm2332, %v2320, %v2335
      %v2337 = vsel %vm2331, %v2334, %v2336
      %v2338 = vsel %vm2330, %v2317, %v2320
      %v2339 = vsel %vm2333, %v2326, 920167782
      %v2340 = vsel %vm2332, %v2323, %v2339
      %v2341 = vsel %vm2331, %v2338, %v2340
      %v2342 = vsel %vm2330, %v2320, %v2323
      %v2343 = vsel %vm2333, %v2329, 1326507024
      %v2344 = vsel %vm2332, %v2326, %v2343
      %v2345 = vsel %vm2331, %v2342, %v2344
      %v2346 = vshll.u32 %v2306, 8
      %v2347 = vand.u32 %v2346, 65535
      %v2348 = vshrl.u32 %v2346, 16
      %v2349 = vand.u32 %v2345, 65535
      %v2350 = vshrl.u32 %v2345, 16
      %v2351 = vmul.u32 %v2347, %v2349
      %v2352 = vmul.u32 %v2347, %v2350
      %v2353 = vmul.u32 %v2348, %v2349
      %v2354 = vmul.u32 %v2348, %v2350
      %v2355 = vshll.u32 %v2352, 16
      %v2356 = vshrl.u32 %v2352, 16
      %v2357 = vshll.u32 %v2353, 16
      %v2358 = vshrl.u32 %v2353, 16
      %vm2359 = vc.u32 %v2351, %v2355
      %v2360 = vsel %vm2359, 1, 0
      %v2361 = vadd.s32 %v2351, %v2355
      %v2362 = vadd.s32 %v2354, %v2360
      %vm2363 = vc.u32 %v2361, %v2357
      %v2364 = vsel %vm2363, 1, 0
      %v2365 = vadd.s32 %v2361, %v2357
      %v2366 = vadd.s32 %v2362, %v2364
      %v2367 = vadd.s32 %v2366, %v2356
      %v2368 = vadd.s32 %v2367, %v2358
      %v2369 = vand.u32 %v2346, 65535
      %v2370 = vshrl.u32 %v2346, 16
      %v2371 = vand.u32 %v2341, 65535
      %v2372 = vshrl.u32 %v2341, 16
      %v2373 = vmul.u32 %v2369, %v2371
      %v2374 = vmul.u32 %v2369, %v2372
      %v2375 = vmul.u32 %v2370, %v2371
      %v2376 = vmul.u32 %v2370, %v2372
      %v2377 = vshll.u32 %v2374, 16
      %v2378 = vshrl.u32 %v2374, 16
      %v2379 = vshll.u32 %v2375, 16
      %v2380 = vshrl.u32 %v2375, 16
      %vm2381 = vc.u32 %v2373, %v2377
      %v2382 = vsel %vm2381, 1, 0
      %v2383 = vadd.s32 %v2373, %v2377
      %v2384 = vadd.s32 %v2376, %v2382
      %vm2385 = vc.u32 %v2383, %v2379
      %v2386 = vsel %vm2385, 1, 0
      %v2387 = vadd.s32 %v2383, %v2379
      %v2388 = vadd.s32 %v2384, %v2386
      %v2389 = vadd.s32 %v2388, %v2378
      %v2390 = vadd.s32 %v2389, %v2380
      %v2391 = vmul.u32 %v2346, %v2337
      %v2392 = vadd.s32 %v2368, %v2387
      %vm2393 = vc.u32 %v2368, %v2387
      %v2394 = vadd.s32 %v2390, 1
      %v2395 = vsel %vm2393, %v2394, %v2390
      %v2396 = vadd.s32 %v2391, %v2395
      %v2397 = vadd.s32 %v2396, 536870912
      %v2398 = vshrl.u32 %v2397, 30
      %v2399 = vshll.u32 %v2398, 30
      %v2400 = vsub.s32 %v2396, %v2399
      %vm2401 = vcmp.lt.s32.totalorder %v2400, 0
      %v2402 = vsub.s32 0, %v2400
      %v2403 = vsel %vm2401, %v2402, %v2400
      %v2404 = vclz %v2403
      %v2405 = vsub.s32 %v2404, 2
      %vm2406 = vcmp.gt.s32.totalorder 0, %v2405
      %v2407 = vsel %vm2406, 0, %v2405
      %v2408 = vsub.s32 32, %v2407
      %v2409 = vshll.u32 %v2400, %v2407
      %v2410 = vshrl.u32 %v2392, %v2408
      %v2411 = vor.u32 %v2409, %v2410
      %v2412 = vsub.s32 4294967266, %v2407
      %v2413 = vadd.s32 %v2412, 127
      %v2414 = vshll.u32 %v2413, 23
      %v2415 = vor.u32 4788187, %v2414
      %v2416 = vand.u32 2147483647, %v2415
      %v2418 = vcvt.s32.f32 %v2411
      %v2419 = vmul.f32 %v2418, %v2416
      %v2420 = vxor.u32 %v2419, 2147483648
      %v2421 = vsel %vm2300, %v2420, %v2419
      %v2422 = vsub.s32 4, %v2398
      %v2423 = vsel %vm2300, %v2422, %v2398
      %v2424 = vsel %vm2299, %v1016, %v2421
      %v2425 = vsel %vm2299, 0, %v2423
      %v2426 = vmul.f32 %v2424, %v2424
      %v2427 = vmul.f32 %v2426, -0.001358992
      %v2428 = vadd.f32 %v2427, 0.041655596
      %v2429 = vmul.f32 %v2426, %v2428
      %v2430 = vadd.f32 %v2429, -0.4999988
      %v2431 = vmul.f32 %v2426, %v2430
      %v2432 = vadd.f32 1.0, %v2431
      %v2433 = vmul.f32 %v2424, %v2424
      %v2434 = vmul.f32 %v2433, -0.00019511016
      %v2435 = vadd.f32 %v2434, 0.008332121
      %v2436 = vmul.f32 %v2433, %v2435
      %v2437 = vadd.f32 %v2436, -0.16666654
      %v2438 = vmul.f32 %v2433, %v2437
      %v2439 = vadd.f32 %v2438, 1.0
      %v2440 = vmul.f32 %v2439, %v2424
      %vm2441 = vweird.f32 %v1016
      %v2442 = vadd.s32 %v2425, 3
      %v2443 = vand.u32 %v2442, 3
      %vm2444 = vcmp.lt.s32.totalorder %v2443, 2
      %vm2445 = vcmp.eq.s32.totalorder %v2443, 0
      %v2446 = vxor.u32 %v2440, 2147483648
      %v2447 = vsel %vm2445, %v2432, %v2446
      %vm2448 = vcmp.eq.s32.totalorder %v2443, 2
      %v2449 = vxor.u32 %v2432, 2147483648
      %v2450 = vsel %vm2448, %v2449, %v2440
      %v2451 = vsel %vm2444, %v2447, %v2450
      %v2452 = vsel %vm2441, nan, %v2451
      %v2453 = vand.u32 2147483647, %v1020
      %vm2454 = vcmp.le.f32.partialorder %v2453, 0.7853982
      %vm2455 = vcmp.lt.s32.totalorder %v1020, 0
      %v2456 = vand.u32 %v1020, 2139095040
      %v2457 = vshrl.u32 %v2456, 23
      %v2458 = vsub.s32 %v2457, 127
      %v2459 = vand.u32 2147483647, %v1020
      %v2460 = vand.u32 %v2459, 8388607
      %v2461 = vor.u32 %v2460, 8388608
      %v2462 = vsub.s32 0, %v2461
      %v2463 = vadd.s32 %v2458, 1
      %vm2464 = vcmp.gt.s32.totalorder %v2463, 0
      %v2465 = vsel %vm2464, %v2463, 0
      %v2466 = vshrl.u32 %v2465, 5
      %v2467 = vand.u32 %v2465, 31
      %v2468 = vsub.s32 32, %v2467
      %v2469 = vshrl.u32 683565275, %v2468
      %v2470 = vshll.u32 683565275, %v2467
      %v2471 = vshrl.u32 2475754826, %v2468
      %v2472 = vor.u32 %v2470, %v2471
      %v2473 = vshll.u32 2475754826, %v2467
      %v2474 = vshrl.u32 2131351028, %v2468
      %v2475 = vor.u32 %v2473, %v2474
      %v2476 = vshll.u32 2131351028, %v2467
      %v2477 = vshrl.u32 2102212464, %v2468
      %v2478 = vor.u32 %v2476, %v2477
      %v2479 = vshll.u32 2102212464, %v2467
      %v2480 = vshrl.u32 920167782, %v2468
      %v2481 = vor.u32 %v2479, %v2480
      %v2482 = vshll.u32 920167782, %v2467
      %v2483 = vshrl.u32 1326507024, %v2468
      %v2484 = vor.u32 %v2482, %v2483
      %vm2485 = vcmp.lt.s32.totalorder %v2466, 1
      %vm2486 = vcmp.lt.s32.totalorder %v2466, 2
      %vm2487 = vcmp.lt.s32.totalorder %v2466, 3
      %vm2488 = vcmp.lt.s32.totalorder %v2466, 4
      %v2489 = vsel %vm2485, %v2469, %v2472
      %v2490 = vsel %vm2488, %v2478, 2102212464
      %v2491 = vsel %vm2487, %v2475, %v2490
      %v2492 = vsel %vm2486, %v2489, %v2491
      %v2493 = vsel %vm2485, %v2472, %v2475
      %v2494 = vsel %vm2488, %v2481, 920167782
      %v2495 = vsel %vm2487, %v2478, %v2494
      %v2496 = vsel %vm2486, %v2493, %v2495
      %v2497 = vsel %vm2485, %v2475, %v2478
      %v2498 = vsel %vm2488, %v2484, 1326507024
      %v2499 = vsel %vm2487, %v2481, %v2498
      %v2500 = vsel %vm2486, %v2497, %v2499
      %v2501 = vshll.u32 %v2461, 8
      %v2502 = vand.u32 %v2501, 65535
      %v2503 = vshrl.u32 %v2501, 16
      %v2504 = vand.u32 %v2500, 65535
      %v2505 = vshrl.u32 %v2500, 16
      %v2506 = vmul.u32 %v2502, %v2504
      %v2507 = vmul.u32 %v2502, %v2505
      %v2508 = vmul.u32 %v2503, %v2504
      %v2509 = vmul.u32 %v2503, %v2505
      %v2510 = vshll.u32 %v2507, 16
      %v2511 = vshrl.u32 %v2507, 16
      %v2512 = vshll.u32 %v2508, 16
      %v2513 = vshrl.u32 %v2508, 16
      %vm2514 = vc.u32 %v2506, %v2510
      %v2515 = vsel %vm2514, 1, 0
      %v2516 = vadd.s32 %v2506, %v2510
      %v2517 = vadd.s32 %v2509, %v2515
      %vm2518 = vc.u32 %v2516, %v2512
      %v2519 = vsel %vm2518, 1, 0
      %v2520 = vadd.s32 %v2516, %v2512
      %v2521 = vadd.s32 %v2517, %v2519
      %v2522 = vadd.s32 %v2521, %v2511
      %v2523 = vadd.s32 %v2522, %v2513
      %v2524 = vand.u32 %v2501, 65535
      %v2525 = vshrl.u32 %v2501, 16
      %v2526 = vand.u32 %v2496, 65535
      %v2527 = vshrl.u32 %v2496, 16
      %v2528 = vmul.u32 %v2524, %v2526
      %v2529 = vmul.u32 %v2524, %v2527
      %v2530 = vmul.u32 %v2525, %v2526
      %v2531 = vmul.u32 %v2525, %v2527
      %v2532 = vshll.u32 %v2529, 16
      %v2533 = vshrl.u32 %v2529, 16
      %v2534 = vshll.u32 %v2530, 16
      %v2535 = vshrl.u32 %v2530, 16
      %vm2536 = vc.u32 %v2528, %v2532
      %v2537 = vsel %vm2536, 1, 0
      %v2538 = vadd.s32 %v2528, %v2532
      %v2539 = vadd.s32 %v2531, %v2537
      %vm2540 = vc.u32 %v2538, %v2534
      %v2541 = vsel %vm2540, 1, 0
      %v2542 = vadd.s32 %v2538, %v2534
      %v2543 = vadd.s32 %v2539, %v2541
      %v2544 = vadd.s32 %v2543, %v2533
      %v2545 = vadd.s32 %v2544, %v2535
      %v2546 = vmul.u32 %v2501, %v2492
      %v2547 = vadd.s32 %v2523, %v2542
      %vm2548 = vc.u32 %v2523, %v2542
      %v2549 = vadd.s32 %v2545, 1
      %v2550 = vsel %vm2548, %v2549, %v2545
      %v2551 = vadd.s32 %v2546, %v2550
      %v2552 = vadd.s32 %v2551, 536870912
      %v2553 = vshrl.u32 %v2552, 30
      %v2554 = vshll.u32 %v2553, 30
      %v2555 = vsub.s32 %v2551, %v2554
      %vm2556 = vcmp.lt.s32.totalorder %v2555, 0
      %v2557 = vsub.s32 0, %v2555
      %v2558 = vsel %vm2556, %v2557, %v2555
      %v2559 = vclz %v2558
      %v2560 = vsub.s32 %v2559, 2
      %vm2561 = vcmp.gt.s32.totalorder 0, %v2560
      %v2562 = vsel %vm2561, 0, %v2560
      %v2563 = vsub.s32 32, %v2562
      %v2564 = vshll.u32 %v2555, %v2562
      %v2565 = vshrl.u32 %v2547, %v2563
      %v2566 = vor.u32 %v2564, %v2565
      %v2567 = vsub.s32 4294967266, %v2562
      %v2568 = vadd.s32 %v2567, 127
      %v2569 = vshll.u32 %v2568, 23
      %v2570 = vor.u32 4788187, %v2569
      %v2571 = vand.u32 2147483647, %v2570
      %v2573 = vcvt.s32.f32 %v2566
      %v2574 = vmul.f32 %v2573, %v2571
      %v2575 = vxor.u32 %v2574, 2147483648
      %v2576 = vsel %vm2455, %v2575, %v2574
      %v2577 = vsub.s32 4, %v2553
      %v2578 = vsel %vm2455, %v2577, %v2553
      %v2579 = vsel %vm2454, %v1020, %v2576
      %v2580 = vsel %vm2454, 0, %v2578
      %v2581 = vmul.f32 %v2579, %v2579
      %v2582 = vmul.f32 %v2581, -0.001358992
      %v2583 = vadd.f32 %v2582, 0.041655596
      %v2584 = vmul.f32 %v2581, %v2583
      %v2585 = vadd.f32 %v2584, -0.4999988
      %v2586 = vmul.f32 %v2581, %v2585
      %v2587 = vadd.f32 1.0, %v2586
      %v2588 = vmul.f32 %v2579, %v2579
      %v2589 = vmul.f32 %v2588, -0.00019511016
      %v2590 = vadd.f32 %v2589, 0.008332121
      %v2591 = vmul.f32 %v2588, %v2590
      %v2592 = vadd.f32 %v2591, -0.16666654
      %v2593 = vmul.f32 %v2588, %v2592
      %v2594 = vadd.f32 %v2593, 1.0
      %v2595 = vmul.f32 %v2594, %v2579
      %vm2596 = vweird.f32 %v1020
      %v2597 = vadd.s32 %v2580, 3
      %v2598 = vand.u32 %v2597, 3
      %vm2599 = vcmp.lt.s32.totalorder %v2598, 2
      %vm2600 = vcmp.eq.s32.totalorder %v2598, 0
      %v2601 = vxor.u32 %v2595, 2147483648
      %v2602 = vsel %vm2600, %v2587, %v2601
      %vm2603 = vcmp.eq.s32.totalorder %v2598, 2
      %v2604 = vxor.u32 %v2587, 2147483648
      %v2605 = vsel %vm2603, %v2604, %v2595
      %v2606 = vsel %vm2599, %v2602, %v2605
      %v2607 = vsel %vm2596, nan, %v2606
      %v2608 = vand.u32 2147483647, %v1024
      %vm2609 = vcmp.le.f32.partialorder %v2608, 0.7853982
      %vm2610 = vcmp.lt.s32.totalorder %v1024, 0
      %v2611 = vand.u32 %v1024, 2139095040
      %v2612 = vshrl.u32 %v2611, 23
      %v2613 = vsub.s32 %v2612, 127
      %v2614 = vand.u32 2147483647, %v1024
      %v2615 = vand.u32 %v2614, 8388607
      %v2616 = vor.u32 %v2615, 8388608
      %v2617 = vsub.s32 0, %v2616
      %v2618 = vadd.s32 %v2613, 1
      %vm2619 = vcmp.gt.s32.totalorder %v2618, 0
      %v2620 = vsel %vm2619, %v2618, 0
      %v2621 = vshrl.u32 %v2620, 5
      %v2622 = vand.u32 %v2620, 31
      %v2623 = vsub.s32 32, %v2622
      %v2624 = vshrl.u32 683565275, %v2623
      %v2625 = vshll.u32 683565275, %v2622
      %v2626 = vshrl.u32 2475754826, %v2623
      %v2627 = vor.u32 %v2625, %v2626
      %v2628 = vshll.u32 2475754826, %v2622
      %v2629 = vshrl.u32 2131351028, %v2623
      %v2630 = vor.u32 %v2628, %v2629
      %v2631 = vshll.u32 2131351028, %v2622
      %v2632 = vshrl.u32 2102212464, %v2623
      %v2633 = vor.u32 %v2631, %v2632
      %v2634 = vshll.u32 2102212464, %v2622
      %v2635 = vshrl.u32 920167782, %v2623
      %v2636 = vor.u32 %v2634, %v2635
      %v2637 = vshll.u32 920167782, %v2622
      %v2638 = vshrl.u32 1326507024, %v2623
      %v2639 = vor.u32 %v2637, %v2638
      %vm2640 = vcmp.lt.s32.totalorder %v2621, 1
      %vm2641 = vcmp.lt.s32.totalorder %v2621, 2
      %vm2642 = vcmp.lt.s32.totalorder %v2621, 3
      %vm2643 = vcmp.lt.s32.totalorder %v2621, 4
      %v2644 = vsel %vm2640, %v2624, %v2627
      %v2645 = vsel %vm2643, %v2633, 2102212464
      %v2646 = vsel %vm2642, %v2630, %v2645
      %v2647 = vsel %vm2641, %v2644, %v2646
      %v2648 = vsel %vm2640, %v2627, %v2630
      %v2649 = vsel %vm2643, %v2636, 920167782
      %v2650 = vsel %vm2642, %v2633, %v2649
      %v2651 = vsel %vm2641, %v2648, %v2650
      %v2652 = vsel %vm2640, %v2630, %v2633
      %v2653 = vsel %vm2643, %v2639, 1326507024
      %v2654 = vsel %vm2642, %v2636, %v2653
      %v2655 = vsel %vm2641, %v2652, %v2654
      %v2656 = vshll.u32 %v2616, 8
      %v2657 = vand.u32 %v2656, 65535
      %v2658 = vshrl.u32 %v2656, 16
      %v2659 = vand.u32 %v2655, 65535
      %v2660 = vshrl.u32 %v2655, 16
      %v2661 = vmul.u32 %v2657, %v2659
      %v2662 = vmul.u32 %v2657, %v2660
      %v2663 = vmul.u32 %v2658, %v2659
      %v2664 = vmul.u32 %v2658, %v2660
      %v2665 = vshll.u32 %v2662, 16
      %v2666 = vshrl.u32 %v2662, 16
      %v2667 = vshll.u32 %v2663, 16
      %v2668 = vshrl.u32 %v2663, 16
      %vm2669 = vc.u32 %v2661, %v2665
      %v2670 = vsel %vm2669, 1, 0
      %v2671 = vadd.s32 %v2661, %v2665
      %v2672 = vadd.s32 %v2664, %v2670
      %vm2673 = vc.u32 %v2671, %v2667
      %v2674 = vsel %vm2673, 1, 0
      %v2675 = vadd.s32 %v2671, %v2667
      %v2676 = vadd.s32 %v2672, %v2674
      %v2677 = vadd.s32 %v2676, %v2666
      %v2678 = vadd.s32 %v2677, %v2668
      %v2679 = vand.u32 %v2656, 65535
      %v2680 = vshrl.u32 %v2656, 16
      %v2681 = vand.u32 %v2651, 65535
      %v2682 = vshrl.u32 %v2651, 16
      %v2683 = vmul.u32 %v2679, %v2681
      %v2684 = vmul.u32 %v2679, %v2682
      %v2685 = vmul.u32 %v2680, %v2681
      %v2686 = vmul.u32 %v2680, %v2682
      %v2687 = vshll.u32 %v2684, 16
      %v2688 = vshrl.u32 %v2684, 16
      %v2689 = vshll.u32 %v2685, 16
      %v2690 = vshrl.u32 %v2685, 16
      %vm2691 = vc.u32 %v2683, %v2687
      %v2692 = vsel %vm2691, 1, 0
      %v2693 = vadd.s32 %v2683, %v2687
      %v2694 = vadd.s32 %v2686, %v2692
      %vm2695 = vc.u32 %v2693, %v2689
      %v2696 = vsel %vm2695, 1, 0
      %v2697 = vadd.s32 %v2693, %v2689
      %v2698 = vadd.s32 %v2694, %v2696
      %v2699 = vadd.s32 %v2698, %v2688
      %v2700 = vadd.s32 %v2699, %v2690
      %v2701 = vmul.u32 %v2656, %v2647
      %v2702 = vadd.s32 %v2678, %v2697
      %vm2703 = vc.u32 %v2678, %v2697
      %v2704 = vadd.s32 %v2700, 1
      %v2705 = vsel %vm2703, %v2704, %v2700
      %v2706 = vadd.s32 %v2701, %v2705
      %v2707 = vadd.s32 %v2706, 536870912
      %v2708 = vshrl.u32 %v2707, 30
      %v2709 = vshll.u32 %v2708, 30
      %v2710 = vsub.s32 %v2706, %v2709
      %vm2711 = vcmp.lt.s32.totalorder %v2710, 0
      %v2712 = vsub.s32 0, %v2710
      %v2713 = vsel %vm2711, %v2712, %v2710
      %v2714 = vclz %v2713
      %v2715 = vsub.s32 %v2714, 2
      %vm2716 = vcmp.gt.s32.totalorder 0, %v2715
      %v2717 = vsel %vm2716, 0, %v2715
      %v2718 = vsub.s32 32, %v2717
      %v2719 = vshll.u32 %v2710, %v2717
      %v2720 = vshrl.u32 %v2702, %v2718
      %v2721 = vor.u32 %v2719, %v2720
      %v2722 = vsub.s32 4294967266, %v2717
      %v2723 = vadd.s32 %v2722, 127
      %v2724 = vshll.u32 %v2723, 23
      %v2725 = vor.u32 4788187, %v2724
      %v2726 = vand.u32 2147483647, %v2725
      %v2728 = vcvt.s32.f32 %v2721
      %v2729 = vmul.f32 %v2728, %v2726
      %v2730 = vxor.u32 %v2729, 2147483648
      %v2731 = vsel %vm2610, %v2730, %v2729
      %v2732 = vsub.s32 4, %v2708
      %v2733 = vsel %vm2610, %v2732, %v2708
      %v2734 = vsel %vm2609, %v1024, %v2731
      %v2735 = vsel %vm2609, 0, %v2733
      %v2736 = vmul.f32 %v2734, %v2734
      %v2737 = vmul.f32 %v2736, -0.001358992
      %v2738 = vadd.f32 %v2737, 0.041655596
      %v2739 = vmul.f32 %v2736, %v2738
      %v2740 = vadd.f32 %v2739, -0.4999988
      %v2741 = vmul.f32 %v2736, %v2740
      %v2742 = vadd.f32 1.0, %v2741
      %v2743 = vmul.f32 %v2734, %v2734
      %v2744 = vmul.f32 %v2743, -0.00019511016
      %v2745 = vadd.f32 %v2744, 0.008332121
      %v2746 = vmul.f32 %v2743, %v2745
      %v2747 = vadd.f32 %v2746, -0.16666654
      %v2748 = vmul.f32 %v2743, %v2747
      %v2749 = vadd.f32 %v2748, 1.0
      %v2750 = vmul.f32 %v2749, %v2734
      %vm2751 = vweird.f32 %v1024
      %v2752 = vadd.s32 %v2735, 3
      %v2753 = vand.u32 %v2752, 3
      %vm2754 = vcmp.lt.s32.totalorder %v2753, 2
      %vm2755 = vcmp.eq.s32.totalorder %v2753, 0
      %v2756 = vxor.u32 %v2750, 2147483648
      %v2757 = vsel %vm2755, %v2742, %v2756
      %vm2758 = vcmp.eq.s32.totalorder %v2753, 2
      %v2759 = vxor.u32 %v2742, 2147483648
      %v2760 = vsel %vm2758, %v2759, %v2750
      %v2761 = vsel %vm2754, %v2757, %v2760
      %v2762 = vsel %vm2751, nan, %v2761
      %v2763 = vand.u32 2147483647, %v1028
      %vm2764 = vcmp.le.f32.partialorder %v2763, 0.7853982
      %vm2765 = vcmp.lt.s32.totalorder %v1028, 0
      %v2766 = vand.u32 %v1028, 2139095040
      %v2767 = vshrl.u32 %v2766, 23
      %v2768 = vsub.s32 %v2767, 127
      %v2769 = vand.u32 2147483647, %v1028
      %v2770 = vand.u32 %v2769, 8388607
      %v2771 = vor.u32 %v2770, 8388608
      %v2772 = vsub.s32 0, %v2771
      %v2773 = vadd.s32 %v2768, 1
      %vm2774 = vcmp.gt.s32.totalorder %v2773, 0
      %v2775 = vsel %vm2774, %v2773, 0
      %v2776 = vshrl.u32 %v2775, 5
      %v2777 = vand.u32 %v2775, 31
      %v2778 = vsub.s32 32, %v2777
      %v2779 = vshrl.u32 683565275, %v2778
      %v2780 = vshll.u32 683565275, %v2777
      %v2781 = vshrl.u32 2475754826, %v2778
      %v2782 = vor.u32 %v2780, %v2781
      %v2783 = vshll.u32 2475754826, %v2777
      %v2784 = vshrl.u32 2131351028, %v2778
      %v2785 = vor.u32 %v2783, %v2784
      %v2786 = vshll.u32 2131351028, %v2777
      %v2787 = vshrl.u32 2102212464, %v2778
      %v2788 = vor.u32 %v2786, %v2787
      %v2789 = vshll.u32 2102212464, %v2777
      %v2790 = vshrl.u32 920167782, %v2778
      %v2791 = vor.u32 %v2789, %v2790
      %v2792 = vshll.u32 920167782, %v2777
      %v2793 = vshrl.u32 1326507024, %v2778
      %v2794 = vor.u32 %v2792, %v2793
      %vm2795 = vcmp.lt.s32.totalorder %v2776, 1
      %vm2796 = vcmp.lt.s32.totalorder %v2776, 2
      %vm2797 = vcmp.lt.s32.totalorder %v2776, 3
      %vm2798 = vcmp.lt.s32.totalorder %v2776, 4
      %v2799 = vsel %vm2795, %v2779, %v2782
      %v2800 = vsel %vm2798, %v2788, 2102212464
      %v2801 = vsel %vm2797, %v2785, %v2800
      %v2802 = vsel %vm2796, %v2799, %v2801
      %v2803 = vsel %vm2795, %v2782, %v2785
      %v2804 = vsel %vm2798, %v2791, 920167782
      %v2805 = vsel %vm2797, %v2788, %v2804
      %v2806 = vsel %vm2796, %v2803, %v2805
      %v2807 = vsel %vm2795, %v2785, %v2788
      %v2808 = vsel %vm2798, %v2794, 1326507024
      %v2809 = vsel %vm2797, %v2791, %v2808
      %v2810 = vsel %vm2796, %v2807, %v2809
      %v2811 = vshll.u32 %v2771, 8
      %v2812 = vand.u32 %v2811, 65535
      %v2813 = vshrl.u32 %v2811, 16
      %v2814 = vand.u32 %v2810, 65535
      %v2815 = vshrl.u32 %v2810, 16
      %v2816 = vmul.u32 %v2812, %v2814
      %v2817 = vmul.u32 %v2812, %v2815
      %v2818 = vmul.u32 %v2813, %v2814
      %v2819 = vmul.u32 %v2813, %v2815
      %v2820 = vshll.u32 %v2817, 16
      %v2821 = vshrl.u32 %v2817, 16
      %v2822 = vshll.u32 %v2818, 16
      %v2823 = vshrl.u32 %v2818, 16
      %vm2824 = vc.u32 %v2816, %v2820
      %v2825 = vsel %vm2824, 1, 0
      %v2826 = vadd.s32 %v2816, %v2820
      %v2827 = vadd.s32 %v2819, %v2825
      %vm2828 = vc.u32 %v2826, %v2822
      %v2829 = vsel %vm2828, 1, 0
      %v2830 = vadd.s32 %v2826, %v2822
      %v2831 = vadd.s32 %v2827, %v2829
      %v2832 = vadd.s32 %v2831, %v2821
      %v2833 = vadd.s32 %v2832, %v2823
      %v2834 = vand.u32 %v2811, 65535
      %v2835 = vshrl.u32 %v2811, 16
      %v2836 = vand.u32 %v2806, 65535
      %v2837 = vshrl.u32 %v2806, 16
      %v2838 = vmul.u32 %v2834, %v2836
      %v2839 = vmul.u32 %v2834, %v2837
      %v2840 = vmul.u32 %v2835, %v2836
      %v2841 = vmul.u32 %v2835, %v2837
      %v2842 = vshll.u32 %v2839, 16
      %v2843 = vshrl.u32 %v2839, 16
      %v2844 = vshll.u32 %v2840, 16
      %v2845 = vshrl.u32 %v2840, 16
      %vm2846 = vc.u32 %v2838, %v2842
      %v2847 = vsel %vm2846, 1, 0
      %v2848 = vadd.s32 %v2838, %v2842
      %v2849 = vadd.s32 %v2841, %v2847
      %vm2850 = vc.u32 %v2848, %v2844
      %v2851 = vsel %vm2850, 1, 0
      %v2852 = vadd.s32 %v2848, %v2844
      %v2853 = vadd.s32 %v2849, %v2851
      %v2854 = vadd.s32 %v2853, %v2843
      %v2855 = vadd.s32 %v2854, %v2845
      %v2856 = vmul.u32 %v2811, %v2802
      %v2857 = vadd.s32 %v2833, %v2852
      %vm2858 = vc.u32 %v2833, %v2852
      %v2859 = vadd.s32 %v2855, 1
      %v2860 = vsel %vm2858, %v2859, %v2855
      %v2861 = vadd.s32 %v2856, %v2860
      %v2862 = vadd.s32 %v2861, 536870912
      %v2863 = vshrl.u32 %v2862, 30
      %v2864 = vshll.u32 %v2863, 30
      %v2865 = vsub.s32 %v2861, %v2864
      %vm2866 = vcmp.lt.s32.totalorder %v2865, 0
      %v2867 = vsub.s32 0, %v2865
      %v2868 = vsel %vm2866, %v2867, %v2865
      %v2869 = vclz %v2868
      %v2870 = vsub.s32 %v2869, 2
      %vm2871 = vcmp.gt.s32.totalorder 0, %v2870
      %v2872 = vsel %vm2871, 0, %v2870
      %v2873 = vsub.s32 32, %v2872
      %v2874 = vshll.u32 %v2865, %v2872
      %v2875 = vshrl.u32 %v2857, %v2873
      %v2876 = vor.u32 %v2874, %v2875
      %v2877 = vsub.s32 4294967266, %v2872
      %v2878 = vadd.s32 %v2877, 127
      %v2879 = vshll.u32 %v2878, 23
      %v2880 = vor.u32 4788187, %v2879
      %v2881 = vand.u32 2147483647, %v2880
      %v2883 = vcvt.s32.f32 %v2876
      %v2884 = vmul.f32 %v2883, %v2881
      %v2885 = vxor.u32 %v2884, 2147483648
      %v2886 = vsel %vm2765, %v2885, %v2884
      %v2887 = vsub.s32 4, %v2863
      %v2888 = vsel %vm2765, %v2887, %v2863
      %v2889 = vsel %vm2764, %v1028, %v2886
      %v2890 = vsel %vm2764, 0, %v2888
      %v2891 = vmul.f32 %v2889, %v2889
      %v2892 = vmul.f32 %v2891, -0.001358992
      %v2893 = vadd.f32 %v2892, 0.041655596
      %v2894 = vmul.f32 %v2891, %v2893
      %v2895 = vadd.f32 %v2894, -0.4999988
      %v2896 = vmul.f32 %v2891, %v2895
      %v2897 = vadd.f32 1.0, %v2896
      %v2898 = vmul.f32 %v2889, %v2889
      %v2899 = vmul.f32 %v2898, -0.00019511016
      %v2900 = vadd.f32 %v2899, 0.008332121
      %v2901 = vmul.f32 %v2898, %v2900
      %v2902 = vadd.f32 %v2901, -0.16666654
      %v2903 = vmul.f32 %v2898, %v2902
      %v2904 = vadd.f32 %v2903, 1.0
      %v2905 = vmul.f32 %v2904, %v2889
      %vm2906 = vweird.f32 %v1028
      %v2907 = vadd.s32 %v2890, 3
      %v2908 = vand.u32 %v2907, 3
      %vm2909 = vcmp.lt.s32.totalorder %v2908, 2
      %vm2910 = vcmp.eq.s32.totalorder %v2908, 0
      %v2911 = vxor.u32 %v2905, 2147483648
      %v2912 = vsel %vm2910, %v2897, %v2911
      %vm2913 = vcmp.eq.s32.totalorder %v2908, 2
      %v2914 = vxor.u32 %v2897, 2147483648
      %v2915 = vsel %vm2913, %v2914, %v2905
      %v2916 = vsel %vm2909, %v2912, %v2915
      %v2917 = vsel %vm2906, nan, %v2916
      %v2918 = vand.u32 2147483647, %v1032
      %vm2919 = vcmp.le.f32.partialorder %v2918, 0.7853982
      %vm2920 = vcmp.lt.s32.totalorder %v1032, 0
      %v2921 = vand.u32 %v1032, 2139095040
      %v2922 = vshrl.u32 %v2921, 23
      %v2923 = vsub.s32 %v2922, 127
      %v2924 = vand.u32 2147483647, %v1032
      %v2925 = vand.u32 %v2924, 8388607
      %v2926 = vor.u32 %v2925, 8388608
      %v2927 = vsub.s32 0, %v2926
      %v2928 = vadd.s32 %v2923, 1
      %vm2929 = vcmp.gt.s32.totalorder %v2928, 0
      %v2930 = vsel %vm2929, %v2928, 0
      %v2931 = vshrl.u32 %v2930, 5
      %v2932 = vand.u32 %v2930, 31
      %v2933 = vsub.s32 32, %v2932
      %v2934 = vshrl.u32 683565275, %v2933
      %v2935 = vshll.u32 683565275, %v2932
      %v2936 = vshrl.u32 2475754826, %v2933
      %v2937 = vor.u32 %v2935, %v2936
      %v2938 = vshll.u32 2475754826, %v2932
      %v2939 = vshrl.u32 2131351028, %v2933
      %v2940 = vor.u32 %v2938, %v2939
      %v2941 = vshll.u32 2131351028, %v2932
      %v2942 = vshrl.u32 2102212464, %v2933
      %v2943 = vor.u32 %v2941, %v2942
      %v2944 = vshll.u32 2102212464, %v2932
      %v2945 = vshrl.u32 920167782, %v2933
      %v2946 = vor.u32 %v2944, %v2945
      %v2947 = vshll.u32 920167782, %v2932
      %v2948 = vshrl.u32 1326507024, %v2933
      %v2949 = vor.u32 %v2947, %v2948
      %vm2950 = vcmp.lt.s32.totalorder %v2931, 1
      %vm2951 = vcmp.lt.s32.totalorder %v2931, 2
      %vm2952 = vcmp.lt.s32.totalorder %v2931, 3
      %vm2953 = vcmp.lt.s32.totalorder %v2931, 4
      %v2954 = vsel %vm2950, %v2934, %v2937
      %v2955 = vsel %vm2953, %v2943, 2102212464
      %v2956 = vsel %vm2952, %v2940, %v2955
      %v2957 = vsel %vm2951, %v2954, %v2956
      %v2958 = vsel %vm2950, %v2937, %v2940
      %v2959 = vsel %vm2953, %v2946, 920167782
      %v2960 = vsel %vm2952, %v2943, %v2959
      %v2961 = vsel %vm2951, %v2958, %v2960
      %v2962 = vsel %vm2950, %v2940, %v2943
      %v2963 = vsel %vm2953, %v2949, 1326507024
      %v2964 = vsel %vm2952, %v2946, %v2963
      %v2965 = vsel %vm2951, %v2962, %v2964
      %v2966 = vshll.u32 %v2926, 8
      %v2967 = vand.u32 %v2966, 65535
      %v2968 = vshrl.u32 %v2966, 16
      %v2969 = vand.u32 %v2965, 65535
      %v2970 = vshrl.u32 %v2965, 16
      %v2971 = vmul.u32 %v2967, %v2969
      %v2972 = vmul.u32 %v2967, %v2970
      %v2973 = vmul.u32 %v2968, %v2969
      %v2974 = vmul.u32 %v2968, %v2970
      %v2975 = vshll.u32 %v2972, 16
      %v2976 = vshrl.u32 %v2972, 16
      %v2977 = vshll.u32 %v2973, 16
      %v2978 = vshrl.u32 %v2973, 16
      %vm2979 = vc.u32 %v2971, %v2975
      %v2980 = vsel %vm2979, 1, 0
      %v2981 = vadd.s32 %v2971, %v2975
      %v2982 = vadd.s32 %v2974, %v2980
      %vm2983 = vc.u32 %v2981, %v2977
      %v2984 = vsel %vm2983, 1, 0
      %v2985 = vadd.s32 %v2981, %v2977
      %v2986 = vadd.s32 %v2982, %v2984
      %v2987 = vadd.s32 %v2986, %v2976
      %v2988 = vadd.s32 %v2987, %v2978
      %v2989 = vand.u32 %v2966, 65535
      %v2990 = vshrl.u32 %v2966, 16
      %v2991 = vand.u32 %v2961, 65535
      %v2992 = vshrl.u32 %v2961, 16
      %v2993 = vmul.u32 %v2989, %v2991
      %v2994 = vmul.u32 %v2989, %v2992
      %v2995 = vmul.u32 %v2990, %v2991
      %v2996 = vmul.u32 %v2990, %v2992
      %v2997 = vshll.u32 %v2994, 16
      %v2998 = vshrl.u32 %v2994, 16
      %v2999 = vshll.u32 %v2995, 16
      %v3000 = vshrl.u32 %v2995, 16
      %vm3001 = vc.u32 %v2993, %v2997
      %v3002 = vsel %vm3001, 1, 0
      %v3003 = vadd.s32 %v2993, %v2997
      %v3004 = vadd.s32 %v2996, %v3002
      %vm3005 = vc.u32 %v3003, %v2999
      %v3006 = vsel %vm3005, 1, 0
      %v3007 = vadd.s32 %v3003, %v2999
      %v3008 = vadd.s32 %v3004, %v3006
      %v3009 = vadd.s32 %v3008, %v2998
      %v3010 = vadd.s32 %v3009, %v3000
      %v3011 = vmul.u32 %v2966, %v2957
      %v3012 = vadd.s32 %v2988, %v3007
      %vm3013 = vc.u32 %v2988, %v3007
      %v3014 = vadd.s32 %v3010, 1
      %v3015 = vsel %vm3013, %v3014, %v3010
      %v3016 = vadd.s32 %v3011, %v3015
      %v3017 = vadd.s32 %v3016, 536870912
      %v3018 = vshrl.u32 %v3017, 30
      %v3019 = vshll.u32 %v3018, 30
      %v3020 = vsub.s32 %v3016, %v3019
      %vm3021 = vcmp.lt.s32.totalorder %v3020, 0
      %v3022 = vsub.s32 0, %v3020
      %v3023 = vsel %vm3021, %v3022, %v3020
      %v3024 = vclz %v3023
      %v3025 = vsub.s32 %v3024, 2
      %vm3026 = vcmp.gt.s32.totalorder 0, %v3025
      %v3027 = vsel %vm3026, 0, %v3025
      %v3028 = vsub.s32 32, %v3027
      %v3029 = vshll.u32 %v3020, %v3027
      %v3030 = vshrl.u32 %v3012, %v3028
      %v3031 = vor.u32 %v3029, %v3030
      %v3032 = vsub.s32 4294967266, %v3027
      %v3033 = vadd.s32 %v3032, 127
      %v3034 = vshll.u32 %v3033, 23
      %v3035 = vor.u32 4788187, %v3034
      %v3036 = vand.u32 2147483647, %v3035
      %v3038 = vcvt.s32.f32 %v3031
      %v3039 = vmul.f32 %v3038, %v3036
      %v3040 = vxor.u32 %v3039, 2147483648
      %v3041 = vsel %vm2920, %v3040, %v3039
      %v3042 = vsub.s32 4, %v3018
      %v3043 = vsel %vm2920, %v3042, %v3018
      %v3044 = vsel %vm2919, %v1032, %v3041
      %v3045 = vsel %vm2919, 0, %v3043
      %v3046 = vmul.f32 %v3044, %v3044
      %v3047 = vmul.f32 %v3046, -0.001358992
      %v3048 = vadd.f32 %v3047, 0.041655596
      %v3049 = vmul.f32 %v3046, %v3048
      %v3050 = vadd.f32 %v3049, -0.4999988
      %v3051 = vmul.f32 %v3046, %v3050
      %v3052 = vadd.f32 1.0, %v3051
      %v3053 = vmul.f32 %v3044, %v3044
      %v3054 = vmul.f32 %v3053, -0.00019511016
      %v3055 = vadd.f32 %v3054, 0.008332121
      %v3056 = vmul.f32 %v3053, %v3055
      %v3057 = vadd.f32 %v3056, -0.16666654
      %v3058 = vmul.f32 %v3053, %v3057
      %v3059 = vadd.f32 %v3058, 1.0
      %v3060 = vmul.f32 %v3059, %v3044
      %vm3061 = vweird.f32 %v1032
      %v3062 = vadd.s32 %v3045, 3
      %v3063 = vand.u32 %v3062, 3
      %vm3064 = vcmp.lt.s32.totalorder %v3063, 2
      %vm3065 = vcmp.eq.s32.totalorder %v3063, 0
      %v3066 = vxor.u32 %v3060, 2147483648
      %v3067 = vsel %vm3065, %v3052, %v3066
      %vm3068 = vcmp.eq.s32.totalorder %v3063, 2
      %v3069 = vxor.u32 %v3052, 2147483648
      %v3070 = vsel %vm3068, %v3069, %v3060
      %v3071 = vsel %vm3064, %v3067, %v3070
      %v3072 = vsel %vm3061, nan, %v3071
      %v3073 = vand.u32 2147483647, %v1036
      %vm3074 = vcmp.le.f32.partialorder %v3073, 0.7853982
      %vm3075 = vcmp.lt.s32.totalorder %v1036, 0
      %v3076 = vand.u32 %v1036, 2139095040
      %v3077 = vshrl.u32 %v3076, 23
      %v3078 = vsub.s32 %v3077, 127
      %v3079 = vand.u32 2147483647, %v1036
      %v3080 = vand.u32 %v3079, 8388607
      %v3081 = vor.u32 %v3080, 8388608
      %v3082 = vsub.s32 0, %v3081
      %v3083 = vadd.s32 %v3078, 1
      %vm3084 = vcmp.gt.s32.totalorder %v3083, 0
      %v3085 = vsel %vm3084, %v3083, 0
      %v3086 = vshrl.u32 %v3085, 5
      %v3087 = vand.u32 %v3085, 31
      %v3088 = vsub.s32 32, %v3087
      %v3089 = vshrl.u32 683565275, %v3088
      %v3090 = vshll.u32 683565275, %v3087
      %v3091 = vshrl.u32 2475754826, %v3088
      %v3092 = vor.u32 %v3090, %v3091
      %v3093 = vshll.u32 2475754826, %v3087
      %v3094 = vshrl.u32 2131351028, %v3088
      %v3095 = vor.u32 %v3093, %v3094
      %v3096 = vshll.u32 2131351028, %v3087
      %v3097 = vshrl.u32 2102212464, %v3088
      %v3098 = vor.u32 %v3096, %v3097
      %v3099 = vshll.u32 2102212464, %v3087
      %v3100 = vshrl.u32 920167782, %v3088
      %v3101 = vor.u32 %v3099, %v3100
      %v3102 = vshll.u32 920167782, %v3087
      %v3103 = vshrl.u32 1326507024, %v3088
      %v3104 = vor.u32 %v3102, %v3103
      %vm3105 = vcmp.lt.s32.totalorder %v3086, 1
      %vm3106 = vcmp.lt.s32.totalorder %v3086, 2
      %vm3107 = vcmp.lt.s32.totalorder %v3086, 3
      %vm3108 = vcmp.lt.s32.totalorder %v3086, 4
      %v3109 = vsel %vm3105, %v3089, %v3092
      %v3110 = vsel %vm3108, %v3098, 2102212464
      %v3111 = vsel %vm3107, %v3095, %v3110
      %v3112 = vsel %vm3106, %v3109, %v3111
      %v3113 = vsel %vm3105, %v3092, %v3095
      %v3114 = vsel %vm3108, %v3101, 920167782
      %v3115 = vsel %vm3107, %v3098, %v3114
      %v3116 = vsel %vm3106, %v3113, %v3115
      %v3117 = vsel %vm3105, %v3095, %v3098
      %v3118 = vsel %vm3108, %v3104, 1326507024
      %v3119 = vsel %vm3107, %v3101, %v3118
      %v3120 = vsel %vm3106, %v3117, %v3119
      %v3121 = vshll.u32 %v3081, 8
      %v3122 = vand.u32 %v3121, 65535
      %v3123 = vshrl.u32 %v3121, 16
      %v3124 = vand.u32 %v3120, 65535
      %v3125 = vshrl.u32 %v3120, 16
      %v3126 = vmul.u32 %v3122, %v3124
      %v3127 = vmul.u32 %v3122, %v3125
      %v3128 = vmul.u32 %v3123, %v3124
      %v3129 = vmul.u32 %v3123, %v3125
      %v3130 = vshll.u32 %v3127, 16
      %v3131 = vshrl.u32 %v3127, 16
      %v3132 = vshll.u32 %v3128, 16
      %v3133 = vshrl.u32 %v3128, 16
      %vm3134 = vc.u32 %v3126, %v3130
      %v3135 = vsel %vm3134, 1, 0
      %v3136 = vadd.s32 %v3126, %v3130
      %v3137 = vadd.s32 %v3129, %v3135
      %vm3138 = vc.u32 %v3136, %v3132
      %v3139 = vsel %vm3138, 1, 0
      %v3140 = vadd.s32 %v3136, %v3132
      %v3141 = vadd.s32 %v3137, %v3139
      %v3142 = vadd.s32 %v3141, %v3131
      %v3143 = vadd.s32 %v3142, %v3133
      %v3144 = vand.u32 %v3121, 65535
      %v3145 = vshrl.u32 %v3121, 16
      %v3146 = vand.u32 %v3116, 65535
      %v3147 = vshrl.u32 %v3116, 16
      %v3148 = vmul.u32 %v3144, %v3146
      %v3149 = vmul.u32 %v3144, %v3147
      %v3150 = vmul.u32 %v3145, %v3146
      %v3151 = vmul.u32 %v3145, %v3147
      %v3152 = vshll.u32 %v3149, 16
      %v3153 = vshrl.u32 %v3149, 16
      %v3154 = vshll.u32 %v3150, 16
      %v3155 = vshrl.u32 %v3150, 16
      %vm3156 = vc.u32 %v3148, %v3152
      %v3157 = vsel %vm3156, 1, 0
      %v3158 = vadd.s32 %v3148, %v3152
      %v3159 = vadd.s32 %v3151, %v3157
      %vm3160 = vc.u32 %v3158, %v3154
      %v3161 = vsel %vm3160, 1, 0
      %v3162 = vadd.s32 %v3158, %v3154
      %v3163 = vadd.s32 %v3159, %v3161
      %v3164 = vadd.s32 %v3163, %v3153
      %v3165 = vadd.s32 %v3164, %v3155
      %v3166 = vmul.u32 %v3121, %v3112
      %v3167 = vadd.s32 %v3143, %v3162
      %vm3168 = vc.u32 %v3143, %v3162
      %v3169 = vadd.s32 %v3165, 1
      %v3170 = vsel %vm3168, %v3169, %v3165
      %v3171 = vadd.s32 %v3166, %v3170
      %v3172 = vadd.s32 %v3171, 536870912
      %v3173 = vshrl.u32 %v3172, 30
      %v3174 = vshll.u32 %v3173, 30
      %v3175 = vsub.s32 %v3171, %v3174
      %vm3176 = vcmp.lt.s32.totalorder %v3175, 0
      %v3177 = vsub.s32 0, %v3175
      %v3178 = vsel %vm3176, %v3177, %v3175
      %v3179 = vclz %v3178
      %v3180 = vsub.s32 %v3179, 2
      %vm3181 = vcmp.gt.s32.totalorder 0, %v3180
      %v3182 = vsel %vm3181, 0, %v3180
      %v3183 = vsub.s32 32, %v3182
      %v3184 = vshll.u32 %v3175, %v3182
      %v3185 = vshrl.u32 %v3167, %v3183
      %v3186 = vor.u32 %v3184, %v3185
      %v3187 = vsub.s32 4294967266, %v3182
      %v3188 = vadd.s32 %v3187, 127
      %v3189 = vshll.u32 %v3188, 23
      %v3190 = vor.u32 4788187, %v3189
      %v3191 = vand.u32 2147483647, %v3190
      %v3193 = vcvt.s32.f32 %v3186
      %v3194 = vmul.f32 %v3193, %v3191
      %v3195 = vxor.u32 %v3194, 2147483648
      %v3196 = vsel %vm3075, %v3195, %v3194
      %v3197 = vsub.s32 4, %v3173
      %v3198 = vsel %vm3075, %v3197, %v3173
      %v3199 = vsel %vm3074, %v1036, %v3196
      %v3200 = vsel %vm3074, 0, %v3198
      %v3201 = vmul.f32 %v3199, %v3199
      %v3202 = vmul.f32 %v3201, -0.001358992
      %v3203 = vadd.f32 %v3202, 0.041655596
      %v3204 = vmul.f32 %v3201, %v3203
      %v3205 = vadd.f32 %v3204, -0.4999988
      %v3206 = vmul.f32 %v3201, %v3205
      %v3207 = vadd.f32 1.0, %v3206
      %v3208 = vmul.f32 %v3199, %v3199
      %v3209 = vmul.f32 %v3208, -0.00019511016
      %v3210 = vadd.f32 %v3209, 0.008332121
      %v3211 = vmul.f32 %v3208, %v3210
      %v3212 = vadd.f32 %v3211, -0.16666654
      %v3213 = vmul.f32 %v3208, %v3212
      %v3214 = vadd.f32 %v3213, 1.0
      %v3215 = vmul.f32 %v3214, %v3199
      %vm3216 = vweird.f32 %v1036
      %v3217 = vadd.s32 %v3200, 3
      %v3218 = vand.u32 %v3217, 3
      %vm3219 = vcmp.lt.s32.totalorder %v3218, 2
      %vm3220 = vcmp.eq.s32.totalorder %v3218, 0
      %v3221 = vxor.u32 %v3215, 2147483648
      %v3222 = vsel %vm3220, %v3207, %v3221
      %vm3223 = vcmp.eq.s32.totalorder %v3218, 2
      %v3224 = vxor.u32 %v3207, 2147483648
      %v3225 = vsel %vm3223, %v3224, %v3215
      %v3226 = vsel %vm3219, %v3222, %v3225
      %v3227 = vsel %vm3216, nan, %v3226
      %v3228 = vand.u32 2147483647, %v1040
      %vm3229 = vcmp.le.f32.partialorder %v3228, 0.7853982
      %vm3230 = vcmp.lt.s32.totalorder %v1040, 0
      %v3231 = vand.u32 %v1040, 2139095040
      %v3232 = vshrl.u32 %v3231, 23
      %v3233 = vsub.s32 %v3232, 127
      %v3234 = vand.u32 2147483647, %v1040
      %v3235 = vand.u32 %v3234, 8388607
      %v3236 = vor.u32 %v3235, 8388608
      %v3237 = vsub.s32 0, %v3236
      %v3238 = vadd.s32 %v3233, 1
      %vm3239 = vcmp.gt.s32.totalorder %v3238, 0
      %v3240 = vsel %vm3239, %v3238, 0
      %v3241 = vshrl.u32 %v3240, 5
      %v3242 = vand.u32 %v3240, 31
      %v3243 = vsub.s32 32, %v3242
      %v3244 = vshrl.u32 683565275, %v3243
      %v3245 = vshll.u32 683565275, %v3242
      %v3246 = vshrl.u32 2475754826, %v3243
      %v3247 = vor.u32 %v3245, %v3246
      %v3248 = vshll.u32 2475754826, %v3242
      %v3249 = vshrl.u32 2131351028, %v3243
      %v3250 = vor.u32 %v3248, %v3249
      %v3251 = vshll.u32 2131351028, %v3242
      %v3252 = vshrl.u32 2102212464, %v3243
      %v3253 = vor.u32 %v3251, %v3252
      %v3254 = vshll.u32 2102212464, %v3242
      %v3255 = vshrl.u32 920167782, %v3243
      %v3256 = vor.u32 %v3254, %v3255
      %v3257 = vshll.u32 920167782, %v3242
      %v3258 = vshrl.u32 1326507024, %v3243
      %v3259 = vor.u32 %v3257, %v3258
      %vm3260 = vcmp.lt.s32.totalorder %v3241, 1
      %vm3261 = vcmp.lt.s32.totalorder %v3241, 2
      %vm3262 = vcmp.lt.s32.totalorder %v3241, 3
      %vm3263 = vcmp.lt.s32.totalorder %v3241, 4
      %v3264 = vsel %vm3260, %v3244, %v3247
      %v3265 = vsel %vm3263, %v3253, 2102212464
      %v3266 = vsel %vm3262, %v3250, %v3265
      %v3267 = vsel %vm3261, %v3264, %v3266
      %v3268 = vsel %vm3260, %v3247, %v3250
      %v3269 = vsel %vm3263, %v3256, 920167782
      %v3270 = vsel %vm3262, %v3253, %v3269
      %v3271 = vsel %vm3261, %v3268, %v3270
      %v3272 = vsel %vm3260, %v3250, %v3253
      %v3273 = vsel %vm3263, %v3259, 1326507024
      %v3274 = vsel %vm3262, %v3256, %v3273
      %v3275 = vsel %vm3261, %v3272, %v3274
      %v3276 = vshll.u32 %v3236, 8
      %v3277 = vand.u32 %v3276, 65535
      %v3278 = vshrl.u32 %v3276, 16
      %v3279 = vand.u32 %v3275, 65535
      %v3280 = vshrl.u32 %v3275, 16
      %v3281 = vmul.u32 %v3277, %v3279
      %v3282 = vmul.u32 %v3277, %v3280
      %v3283 = vmul.u32 %v3278, %v3279
      %v3284 = vmul.u32 %v3278, %v3280
      %v3285 = vshll.u32 %v3282, 16
      %v3286 = vshrl.u32 %v3282, 16
      %v3287 = vshll.u32 %v3283, 16
      %v3288 = vshrl.u32 %v3283, 16
      %vm3289 = vc.u32 %v3281, %v3285
      %v3290 = vsel %vm3289, 1, 0
      %v3291 = vadd.s32 %v3281, %v3285
      %v3292 = vadd.s32 %v3284, %v3290
      %vm3293 = vc.u32 %v3291, %v3287
      %v3294 = vsel %vm3293, 1, 0
      %v3295 = vadd.s32 %v3291, %v3287
      %v3296 = vadd.s32 %v3292, %v3294
      %v3297 = vadd.s32 %v3296, %v3286
      %v3298 = vadd.s32 %v3297, %v3288
      %v3299 = vand.u32 %v3276, 65535
      %v3300 = vshrl.u32 %v3276, 16
      %v3301 = vand.u32 %v3271, 65535
      %v3302 = vshrl.u32 %v3271, 16
      %v3303 = vmul.u32 %v3299, %v3301
      %v3304 = vmul.u32 %v3299, %v3302
      %v3305 = vmul.u32 %v3300, %v3301
      %v3306 = vmul.u32 %v3300, %v3302
      %v3307 = vshll.u32 %v3304, 16
      %v3308 = vshrl.u32 %v3304, 16
      %v3309 = vshll.u32 %v3305, 16
      %v3310 = vshrl.u32 %v3305, 16
      %vm3311 = vc.u32 %v3303, %v3307
      %v3312 = vsel %vm3311, 1, 0
      %v3313 = vadd.s32 %v3303, %v3307
      %v3314 = vadd.s32 %v3306, %v3312
      %vm3315 = vc.u32 %v3313, %v3309
      %v3316 = vsel %vm3315, 1, 0
      %v3317 = vadd.s32 %v3313, %v3309
      %v3318 = vadd.s32 %v3314, %v3316
      %v3319 = vadd.s32 %v3318, %v3308
      %v3320 = vadd.s32 %v3319, %v3310
      %v3321 = vmul.u32 %v3276, %v3267
      %v3322 = vadd.s32 %v3298, %v3317
      %vm3323 = vc.u32 %v3298, %v3317
      %v3324 = vadd.s32 %v3320, 1
      %v3325 = vsel %vm3323, %v3324, %v3320
      %v3326 = vadd.s32 %v3321, %v3325
      %v3327 = vadd.s32 %v3326, 536870912
      %v3328 = vshrl.u32 %v3327, 30
      %v3329 = vshll.u32 %v3328, 30
      %v3330 = vsub.s32 %v3326, %v3329
      %vm3331 = vcmp.lt.s32.totalorder %v3330, 0
      %v3332 = vsub.s32 0, %v3330
      %v3333 = vsel %vm3331, %v3332, %v3330
      %v3334 = vclz %v3333
      %v3335 = vsub.s32 %v3334, 2
      %vm3336 = vcmp.gt.s32.totalorder 0, %v3335
      %v3337 = vsel %vm3336, 0, %v3335
      %v3338 = vsub.s32 32, %v3337
      %v3339 = vshll.u32 %v3330, %v3337
      %v3340 = vshrl.u32 %v3322, %v3338
      %v3341 = vor.u32 %v3339, %v3340
      %v3342 = vsub.s32 4294967266, %v3337
      %v3343 = vadd.s32 %v3342, 127
      %v3344 = vshll.u32 %v3343, 23
      %v3345 = vor.u32 4788187, %v3344
      %v3346 = vand.u32 2147483647, %v3345
      %v3348 = vcvt.s32.f32 %v3341
      %v3349 = vmul.f32 %v3348, %v3346
      %v3350 = vxor.u32 %v3349, 2147483648
      %v3351 = vsel %vm3230, %v3350, %v3349
      %v3352 = vsub.s32 4, %v3328
      %v3353 = vsel %vm3230, %v3352, %v3328
      %v3354 = vsel %vm3229, %v1040, %v3351
      %v3355 = vsel %vm3229, 0, %v3353
      %v3356 = vmul.f32 %v3354, %v3354
      %v3357 = vmul.f32 %v3356, -0.001358992
      %v3358 = vadd.f32 %v3357, 0.041655596
      %v3359 = vmul.f32 %v3356, %v3358
      %v3360 = vadd.f32 %v3359, -0.4999988
      %v3361 = vmul.f32 %v3356, %v3360
      %v3362 = vadd.f32 1.0, %v3361
      %v3363 = vmul.f32 %v3354, %v3354
      %v3364 = vmul.f32 %v3363, -0.00019511016
      %v3365 = vadd.f32 %v3364, 0.008332121
      %v3366 = vmul.f32 %v3363, %v3365
      %v3367 = vadd.f32 %v3366, -0.16666654
      %v3368 = vmul.f32 %v3363, %v3367
      %v3369 = vadd.f32 %v3368, 1.0
      %v3370 = vmul.f32 %v3369, %v3354
      %vm3371 = vweird.f32 %v1040
      %v3372 = vadd.s32 %v3355, 3
      %v3373 = vand.u32 %v3372, 3
      %vm3374 = vcmp.lt.s32.totalorder %v3373, 2
      %vm3375 = vcmp.eq.s32.totalorder %v3373, 0
      %v3376 = vxor.u32 %v3370, 2147483648
      %v3377 = vsel %vm3375, %v3362, %v3376
      %vm3378 = vcmp.eq.s32.totalorder %v3373, 2
      %v3379 = vxor.u32 %v3362, 2147483648
      %v3380 = vsel %vm3378, %v3379, %v3370
      %v3381 = vsel %vm3374, %v3377, %v3380
      %v3382 = vsel %vm3371, nan, %v3381
      %v3383 = vand.u32 2147483647, %v1044
      %vm3384 = vcmp.le.f32.partialorder %v3383, 0.7853982
      %vm3385 = vcmp.lt.s32.totalorder %v1044, 0
      %v3386 = vand.u32 %v1044, 2139095040
      %v3387 = vshrl.u32 %v3386, 23
      %v3388 = vsub.s32 %v3387, 127
      %v3389 = vand.u32 2147483647, %v1044
      %v3390 = vand.u32 %v3389, 8388607
      %v3391 = vor.u32 %v3390, 8388608
      %v3392 = vsub.s32 0, %v3391
      %v3393 = vadd.s32 %v3388, 1
      %vm3394 = vcmp.gt.s32.totalorder %v3393, 0
      %v3395 = vsel %vm3394, %v3393, 0
      %v3396 = vshrl.u32 %v3395, 5
      %v3397 = vand.u32 %v3395, 31
      %v3398 = vsub.s32 32, %v3397
      %v3399 = vshrl.u32 683565275, %v3398
      %v3400 = vshll.u32 683565275, %v3397
      %v3401 = vshrl.u32 2475754826, %v3398
      %v3402 = vor.u32 %v3400, %v3401
      %v3403 = vshll.u32 2475754826, %v3397
      %v3404 = vshrl.u32 2131351028, %v3398
      %v3405 = vor.u32 %v3403, %v3404
      %v3406 = vshll.u32 2131351028, %v3397
      %v3407 = vshrl.u32 2102212464, %v3398
      %v3408 = vor.u32 %v3406, %v3407
      %v3409 = vshll.u32 2102212464, %v3397
      %v3410 = vshrl.u32 920167782, %v3398
      %v3411 = vor.u32 %v3409, %v3410
      %v3412 = vshll.u32 920167782, %v3397
      %v3413 = vshrl.u32 1326507024, %v3398
      %v3414 = vor.u32 %v3412, %v3413
      %vm3415 = vcmp.lt.s32.totalorder %v3396, 1
      %vm3416 = vcmp.lt.s32.totalorder %v3396, 2
      %vm3417 = vcmp.lt.s32.totalorder %v3396, 3
      %vm3418 = vcmp.lt.s32.totalorder %v3396, 4
      %v3419 = vsel %vm3415, %v3399, %v3402
      %v3420 = vsel %vm3418, %v3408, 2102212464
      %v3421 = vsel %vm3417, %v3405, %v3420
      %v3422 = vsel %vm3416, %v3419, %v3421
      %v3423 = vsel %vm3415, %v3402, %v3405
      %v3424 = vsel %vm3418, %v3411, 920167782
      %v3425 = vsel %vm3417, %v3408, %v3424
      %v3426 = vsel %vm3416, %v3423, %v3425
      %v3427 = vsel %vm3415, %v3405, %v3408
      %v3428 = vsel %vm3418, %v3414, 1326507024
      %v3429 = vsel %vm3417, %v3411, %v3428
      %v3430 = vsel %vm3416, %v3427, %v3429
      %v3431 = vshll.u32 %v3391, 8
      %v3432 = vand.u32 %v3431, 65535
      %v3433 = vshrl.u32 %v3431, 16
      %v3434 = vand.u32 %v3430, 65535
      %v3435 = vshrl.u32 %v3430, 16
      %v3436 = vmul.u32 %v3432, %v3434
      %v3437 = vmul.u32 %v3432, %v3435
      %v3438 = vmul.u32 %v3433, %v3434
      %v3439 = vmul.u32 %v3433, %v3435
      %v3440 = vshll.u32 %v3437, 16
      %v3441 = vshrl.u32 %v3437, 16
      %v3442 = vshll.u32 %v3438, 16
      %v3443 = vshrl.u32 %v3438, 16
      %vm3444 = vc.u32 %v3436, %v3440
      %v3445 = vsel %vm3444, 1, 0
      %v3446 = vadd.s32 %v3436, %v3440
      %v3447 = vadd.s32 %v3439, %v3445
      %vm3448 = vc.u32 %v3446, %v3442
      %v3449 = vsel %vm3448, 1, 0
      %v3450 = vadd.s32 %v3446, %v3442
      %v3451 = vadd.s32 %v3447, %v3449
      %v3452 = vadd.s32 %v3451, %v3441
      %v3453 = vadd.s32 %v3452, %v3443
      %v3454 = vand.u32 %v3431, 65535
      %v3455 = vshrl.u32 %v3431, 16
      %v3456 = vand.u32 %v3426, 65535
      %v3457 = vshrl.u32 %v3426, 16
      %v3458 = vmul.u32 %v3454, %v3456
      %v3459 = vmul.u32 %v3454, %v3457
      %v3460 = vmul.u32 %v3455, %v3456
      %v3461 = vmul.u32 %v3455, %v3457
      %v3462 = vshll.u32 %v3459, 16
      %v3463 = vshrl.u32 %v3459, 16
      %v3464 = vshll.u32 %v3460, 16
      %v3465 = vshrl.u32 %v3460, 16
      %vm3466 = vc.u32 %v3458, %v3462
      %v3467 = vsel %vm3466, 1, 0
      %v3468 = vadd.s32 %v3458, %v3462
      %v3469 = vadd.s32 %v3461, %v3467
      %vm3470 = vc.u32 %v3468, %v3464
      %v3471 = vsel %vm3470, 1, 0
      %v3472 = vadd.s32 %v3468, %v3464
      %v3473 = vadd.s32 %v3469, %v3471
      %v3474 = vadd.s32 %v3473, %v3463
      %v3475 = vadd.s32 %v3474, %v3465
      %v3476 = vmul.u32 %v3431, %v3422
      %v3477 = vadd.s32 %v3453, %v3472
      %vm3478 = vc.u32 %v3453, %v3472
      %v3479 = vadd.s32 %v3475, 1
      %v3480 = vsel %vm3478, %v3479, %v3475
      %v3481 = vadd.s32 %v3476, %v3480
      %v3482 = vadd.s32 %v3481, 536870912
      %v3483 = vshrl.u32 %v3482, 30
      %v3484 = vshll.u32 %v3483, 30
      %v3485 = vsub.s32 %v3481, %v3484
      %vm3486 = vcmp.lt.s32.totalorder %v3485, 0
      %v3487 = vsub.s32 0, %v3485
      %v3488 = vsel %vm3486, %v3487, %v3485
      %v3489 = vclz %v3488
      %v3490 = vsub.s32 %v3489, 2
      %vm3491 = vcmp.gt.s32.totalorder 0, %v3490
      %v3492 = vsel %vm3491, 0, %v3490
      %v3493 = vsub.s32 32, %v3492
      %v3494 = vshll.u32 %v3485, %v3492
      %v3495 = vshrl.u32 %v3477, %v3493
      %v3496 = vor.u32 %v3494, %v3495
      %v3497 = vsub.s32 4294967266, %v3492
      %v3498 = vadd.s32 %v3497, 127
      %v3499 = vshll.u32 %v3498, 23
      %v3500 = vor.u32 4788187, %v3499
      %v3501 = vand.u32 2147483647, %v3500
      %v3503 = vcvt.s32.f32 %v3496
      %v3504 = vmul.f32 %v3503, %v3501
      %v3505 = vxor.u32 %v3504, 2147483648
      %v3506 = vsel %vm3385, %v3505, %v3504
      %v3507 = vsub.s32 4, %v3483
      %v3508 = vsel %vm3385, %v3507, %v3483
      %v3509 = vsel %vm3384, %v1044, %v3506
      %v3510 = vsel %vm3384, 0, %v3508
      %v3511 = vmul.f32 %v3509, %v3509
      %v3512 = vmul.f32 %v3511, -0.001358992
      %v3513 = vadd.f32 %v3512, 0.041655596
      %v3514 = vmul.f32 %v3511, %v3513
      %v3515 = vadd.f32 %v3514, -0.4999988
      %v3516 = vmul.f32 %v3511, %v3515
      %v3517 = vadd.f32 1.0, %v3516
      %v3518 = vmul.f32 %v3509, %v3509
      %v3519 = vmul.f32 %v3518, -0.00019511016
      %v3520 = vadd.f32 %v3519, 0.008332121
      %v3521 = vmul.f32 %v3518, %v3520
      %v3522 = vadd.f32 %v3521, -0.16666654
      %v3523 = vmul.f32 %v3518, %v3522
      %v3524 = vadd.f32 %v3523, 1.0
      %v3525 = vmul.f32 %v3524, %v3509
      %vm3526 = vweird.f32 %v1044
      %v3527 = vadd.s32 %v3510, 3
      %v3528 = vand.u32 %v3527, 3
      %vm3529 = vcmp.lt.s32.totalorder %v3528, 2
      %vm3530 = vcmp.eq.s32.totalorder %v3528, 0
      %v3531 = vxor.u32 %v3525, 2147483648
      %v3532 = vsel %vm3530, %v3517, %v3531
      %vm3533 = vcmp.eq.s32.totalorder %v3528, 2
      %v3534 = vxor.u32 %v3517, 2147483648
      %v3535 = vsel %vm3533, %v3534, %v3525
      %v3536 = vsel %vm3529, %v3532, %v3535
      %v3537 = vsel %vm3526, nan, %v3536
      %v3538 = vand.u32 2147483647, %v1048
      %vm3539 = vcmp.le.f32.partialorder %v3538, 0.7853982
      %vm3540 = vcmp.lt.s32.totalorder %v1048, 0
      %v3541 = vand.u32 %v1048, 2139095040
      %v3542 = vshrl.u32 %v3541, 23
      %v3543 = vsub.s32 %v3542, 127
      %v3544 = vand.u32 2147483647, %v1048
      %v3545 = vand.u32 %v3544, 8388607
      %v3546 = vor.u32 %v3545, 8388608
      %v3547 = vsub.s32 0, %v3546
      %v3548 = vadd.s32 %v3543, 1
      %vm3549 = vcmp.gt.s32.totalorder %v3548, 0
      %v3550 = vsel %vm3549, %v3548, 0
      %v3551 = vshrl.u32 %v3550, 5
      %v3552 = vand.u32 %v3550, 31
      %v3553 = vsub.s32 32, %v3552
      %v3554 = vshrl.u32 683565275, %v3553
      %v3555 = vshll.u32 683565275, %v3552
      %v3556 = vshrl.u32 2475754826, %v3553
      %v3557 = vor.u32 %v3555, %v3556
      %v3558 = vshll.u32 2475754826, %v3552
      %v3559 = vshrl.u32 2131351028, %v3553
      %v3560 = vor.u32 %v3558, %v3559
      %v3561 = vshll.u32 2131351028, %v3552
      %v3562 = vshrl.u32 2102212464, %v3553
      %v3563 = vor.u32 %v3561, %v3562
      %v3564 = vshll.u32 2102212464, %v3552
      %v3565 = vshrl.u32 920167782, %v3553
      %v3566 = vor.u32 %v3564, %v3565
      %v3567 = vshll.u32 920167782, %v3552
      %v3568 = vshrl.u32 1326507024, %v3553
      %v3569 = vor.u32 %v3567, %v3568
      %vm3570 = vcmp.lt.s32.totalorder %v3551, 1
      %vm3571 = vcmp.lt.s32.totalorder %v3551, 2
      %vm3572 = vcmp.lt.s32.totalorder %v3551, 3
      %vm3573 = vcmp.lt.s32.totalorder %v3551, 4
      %v3574 = vsel %vm3570, %v3554, %v3557
      %v3575 = vsel %vm3573, %v3563, 2102212464
      %v3576 = vsel %vm3572, %v3560, %v3575
      %v3577 = vsel %vm3571, %v3574, %v3576
      %v3578 = vsel %vm3570, %v3557, %v3560
      %v3579 = vsel %vm3573, %v3566, 920167782
      %v3580 = vsel %vm3572, %v3563, %v3579
      %v3581 = vsel %vm3571, %v3578, %v3580
      %v3582 = vsel %vm3570, %v3560, %v3563
      %v3583 = vsel %vm3573, %v3569, 1326507024
      %v3584 = vsel %vm3572, %v3566, %v3583
      %v3585 = vsel %vm3571, %v3582, %v3584
      %v3586 = vshll.u32 %v3546, 8
      %v3587 = vand.u32 %v3586, 65535
      %v3588 = vshrl.u32 %v3586, 16
      %v3589 = vand.u32 %v3585, 65535
      %v3590 = vshrl.u32 %v3585, 16
      %v3591 = vmul.u32 %v3587, %v3589
      %v3592 = vmul.u32 %v3587, %v3590
      %v3593 = vmul.u32 %v3588, %v3589
      %v3594 = vmul.u32 %v3588, %v3590
      %v3595 = vshll.u32 %v3592, 16
      %v3596 = vshrl.u32 %v3592, 16
      %v3597 = vshll.u32 %v3593, 16
      %v3598 = vshrl.u32 %v3593, 16
      %vm3599 = vc.u32 %v3591, %v3595
      %v3600 = vsel %vm3599, 1, 0
      %v3601 = vadd.s32 %v3591, %v3595
      %v3602 = vadd.s32 %v3594, %v3600
      %vm3603 = vc.u32 %v3601, %v3597
      %v3604 = vsel %vm3603, 1, 0
      %v3605 = vadd.s32 %v3601, %v3597
      %v3606 = vadd.s32 %v3602, %v3604
      %v3607 = vadd.s32 %v3606, %v3596
      %v3608 = vadd.s32 %v3607, %v3598
      %v3609 = vand.u32 %v3586, 65535
      %v3610 = vshrl.u32 %v3586, 16
      %v3611 = vand.u32 %v3581, 65535
      %v3612 = vshrl.u32 %v3581, 16
      %v3613 = vmul.u32 %v3609, %v3611
      %v3614 = vmul.u32 %v3609, %v3612
      %v3615 = vmul.u32 %v3610, %v3611
      %v3616 = vmul.u32 %v3610, %v3612
      %v3617 = vshll.u32 %v3614, 16
      %v3618 = vshrl.u32 %v3614, 16
      %v3619 = vshll.u32 %v3615, 16
      %v3620 = vshrl.u32 %v3615, 16
      %vm3621 = vc.u32 %v3613, %v3617
      %v3622 = vsel %vm3621, 1, 0
      %v3623 = vadd.s32 %v3613, %v3617
      %v3624 = vadd.s32 %v3616, %v3622
      %vm3625 = vc.u32 %v3623, %v3619
      %v3626 = vsel %vm3625, 1, 0
      %v3627 = vadd.s32 %v3623, %v3619
      %v3628 = vadd.s32 %v3624, %v3626
      %v3629 = vadd.s32 %v3628, %v3618
      %v3630 = vadd.s32 %v3629, %v3620
      %v3631 = vmul.u32 %v3586, %v3577
      %v3632 = vadd.s32 %v3608, %v3627
      %vm3633 = vc.u32 %v3608, %v3627
      %v3634 = vadd.s32 %v3630, 1
      %v3635 = vsel %vm3633, %v3634, %v3630
      %v3636 = vadd.s32 %v3631, %v3635
      %v3637 = vadd.s32 %v3636, 536870912
      %v3638 = vshrl.u32 %v3637, 30
      %v3639 = vshll.u32 %v3638, 30
      %v3640 = vsub.s32 %v3636, %v3639
      %vm3641 = vcmp.lt.s32.totalorder %v3640, 0
      %v3642 = vsub.s32 0, %v3640
      %v3643 = vsel %vm3641, %v3642, %v3640
      %v3644 = vclz %v3643
      %v3645 = vsub.s32 %v3644, 2
      %vm3646 = vcmp.gt.s32.totalorder 0, %v3645
      %v3647 = vsel %vm3646, 0, %v3645
      %v3648 = vsub.s32 32, %v3647
      %v3649 = vshll.u32 %v3640, %v3647
      %v3650 = vshrl.u32 %v3632, %v3648
      %v3651 = vor.u32 %v3649, %v3650
      %v3652 = vsub.s32 4294967266, %v3647
      %v3653 = vadd.s32 %v3652, 127
      %v3654 = vshll.u32 %v3653, 23
      %v3655 = vor.u32 4788187, %v3654
      %v3656 = vand.u32 2147483647, %v3655
      %v3658 = vcvt.s32.f32 %v3651
      %v3659 = vmul.f32 %v3658, %v3656
      %v3660 = vxor.u32 %v3659, 2147483648
      %v3661 = vsel %vm3540, %v3660, %v3659
      %v3662 = vsub.s32 4, %v3638
      %v3663 = vsel %vm3540, %v3662, %v3638
      %v3664 = vsel %vm3539, %v1048, %v3661
      %v3665 = vsel %vm3539, 0, %v3663
      %v3666 = vmul.f32 %v3664, %v3664
      %v3667 = vmul.f32 %v3666, -0.001358992
      %v3668 = vadd.f32 %v3667, 0.041655596
      %v3669 = vmul.f32 %v3666, %v3668
      %v3670 = vadd.f32 %v3669, -0.4999988
      %v3671 = vmul.f32 %v3666, %v3670
      %v3672 = vadd.f32 1.0, %v3671
      %v3673 = vmul.f32 %v3664, %v3664
      %v3674 = vmul.f32 %v3673, -0.00019511016
      %v3675 = vadd.f32 %v3674, 0.008332121
      %v3676 = vmul.f32 %v3673, %v3675
      %v3677 = vadd.f32 %v3676, -0.16666654
      %v3678 = vmul.f32 %v3673, %v3677
      %v3679 = vadd.f32 %v3678, 1.0
      %v3680 = vmul.f32 %v3679, %v3664
      %vm3681 = vweird.f32 %v1048
      %v3682 = vadd.s32 %v3665, 3
      %v3683 = vand.u32 %v3682, 3
      %vm3684 = vcmp.lt.s32.totalorder %v3683, 2
      %vm3685 = vcmp.eq.s32.totalorder %v3683, 0
      %v3686 = vxor.u32 %v3680, 2147483648
      %v3687 = vsel %vm3685, %v3672, %v3686
      %vm3688 = vcmp.eq.s32.totalorder %v3683, 2
      %v3689 = vxor.u32 %v3672, 2147483648
      %v3690 = vsel %vm3688, %v3689, %v3680
      %v3691 = vsel %vm3684, %v3687, %v3690
      %v3692 = vsel %vm3681, nan, %v3691
      %v3693 = vand.u32 2147483647, %v1052
      %vm3694 = vcmp.le.f32.partialorder %v3693, 0.7853982
      %vm3695 = vcmp.lt.s32.totalorder %v1052, 0
      %v3696 = vand.u32 %v1052, 2139095040
      %v3697 = vshrl.u32 %v3696, 23
      %v3698 = vsub.s32 %v3697, 127
      %v3699 = vand.u32 2147483647, %v1052
      %v3700 = vand.u32 %v3699, 8388607
      %v3701 = vor.u32 %v3700, 8388608
      %v3702 = vsub.s32 0, %v3701
      %v3703 = vadd.s32 %v3698, 1
      %vm3704 = vcmp.gt.s32.totalorder %v3703, 0
      %v3705 = vsel %vm3704, %v3703, 0
      %v3706 = vshrl.u32 %v3705, 5
      %v3707 = vand.u32 %v3705, 31
      %v3708 = vsub.s32 32, %v3707
      %v3709 = vshrl.u32 683565275, %v3708
      %v3710 = vshll.u32 683565275, %v3707
      %v3711 = vshrl.u32 2475754826, %v3708
      %v3712 = vor.u32 %v3710, %v3711
      %v3713 = vshll.u32 2475754826, %v3707
      %v3714 = vshrl.u32 2131351028, %v3708
      %v3715 = vor.u32 %v3713, %v3714
      %v3716 = vshll.u32 2131351028, %v3707
      %v3717 = vshrl.u32 2102212464, %v3708
      %v3718 = vor.u32 %v3716, %v3717
      %v3719 = vshll.u32 2102212464, %v3707
      %v3720 = vshrl.u32 920167782, %v3708
      %v3721 = vor.u32 %v3719, %v3720
      %v3722 = vshll.u32 920167782, %v3707
      %v3723 = vshrl.u32 1326507024, %v3708
      %v3724 = vor.u32 %v3722, %v3723
      %vm3725 = vcmp.lt.s32.totalorder %v3706, 1
      %vm3726 = vcmp.lt.s32.totalorder %v3706, 2
      %vm3727 = vcmp.lt.s32.totalorder %v3706, 3
      %vm3728 = vcmp.lt.s32.totalorder %v3706, 4
      %v3729 = vsel %vm3725, %v3709, %v3712
      %v3730 = vsel %vm3728, %v3718, 2102212464
      %v3731 = vsel %vm3727, %v3715, %v3730
      %v3732 = vsel %vm3726, %v3729, %v3731
      %v3733 = vsel %vm3725, %v3712, %v3715
      %v3734 = vsel %vm3728, %v3721, 920167782
      %v3735 = vsel %vm3727, %v3718, %v3734
      %v3736 = vsel %vm3726, %v3733, %v3735
      %v3737 = vsel %vm3725, %v3715, %v3718
      %v3738 = vsel %vm3728, %v3724, 1326507024
      %v3739 = vsel %vm3727, %v3721, %v3738
      %v3740 = vsel %vm3726, %v3737, %v3739
      %v3741 = vshll.u32 %v3701, 8
      %v3742 = vand.u32 %v3741, 65535
      %v3743 = vshrl.u32 %v3741, 16
      %v3744 = vand.u32 %v3740, 65535
      %v3745 = vshrl.u32 %v3740, 16
      %v3746 = vmul.u32 %v3742, %v3744
      %v3747 = vmul.u32 %v3742, %v3745
      %v3748 = vmul.u32 %v3743, %v3744
      %v3749 = vmul.u32 %v3743, %v3745
      %v3750 = vshll.u32 %v3747, 16
      %v3751 = vshrl.u32 %v3747, 16
      %v3752 = vshll.u32 %v3748, 16
      %v3753 = vshrl.u32 %v3748, 16
      %vm3754 = vc.u32 %v3746, %v3750
      %v3755 = vsel %vm3754, 1, 0
      %v3756 = vadd.s32 %v3746, %v3750
      %v3757 = vadd.s32 %v3749, %v3755
      %vm3758 = vc.u32 %v3756, %v3752
      %v3759 = vsel %vm3758, 1, 0
      %v3760 = vadd.s32 %v3756, %v3752
      %v3761 = vadd.s32 %v3757, %v3759
      %v3762 = vadd.s32 %v3761, %v3751
      %v3763 = vadd.s32 %v3762, %v3753
      %v3764 = vand.u32 %v3741, 65535
      %v3765 = vshrl.u32 %v3741, 16
      %v3766 = vand.u32 %v3736, 65535
      %v3767 = vshrl.u32 %v3736, 16
      %v3768 = vmul.u32 %v3764, %v3766
      %v3769 = vmul.u32 %v3764, %v3767
      %v3770 = vmul.u32 %v3765, %v3766
      %v3771 = vmul.u32 %v3765, %v3767
      %v3772 = vshll.u32 %v3769, 16
      %v3773 = vshrl.u32 %v3769, 16
      %v3774 = vshll.u32 %v3770, 16
      %v3775 = vshrl.u32 %v3770, 16
      %vm3776 = vc.u32 %v3768, %v3772
      %v3777 = vsel %vm3776, 1, 0
      %v3778 = vadd.s32 %v3768, %v3772
      %v3779 = vadd.s32 %v3771, %v3777
      %vm3780 = vc.u32 %v3778, %v3774
      %v3781 = vsel %vm3780, 1, 0
      %v3782 = vadd.s32 %v3778, %v3774
      %v3783 = vadd.s32 %v3779, %v3781
      %v3784 = vadd.s32 %v3783, %v3773
      %v3785 = vadd.s32 %v3784, %v3775
      %v3786 = vmul.u32 %v3741, %v3732
      %v3787 = vadd.s32 %v3763, %v3782
      %vm3788 = vc.u32 %v3763, %v3782
      %v3789 = vadd.s32 %v3785, 1
      %v3790 = vsel %vm3788, %v3789, %v3785
      %v3791 = vadd.s32 %v3786, %v3790
      %v3792 = vadd.s32 %v3791, 536870912
      %v3793 = vshrl.u32 %v3792, 30
      %v3794 = vshll.u32 %v3793, 30
      %v3795 = vsub.s32 %v3791, %v3794
      %vm3796 = vcmp.lt.s32.totalorder %v3795, 0
      %v3797 = vsub.s32 0, %v3795
      %v3798 = vsel %vm3796, %v3797, %v3795
      %v3799 = vclz %v3798
      %v3800 = vsub.s32 %v3799, 2
      %vm3801 = vcmp.gt.s32.totalorder 0, %v3800
      %v3802 = vsel %vm3801, 0, %v3800
      %v3803 = vsub.s32 32, %v3802
      %v3804 = vshll.u32 %v3795, %v3802
      %v3805 = vshrl.u32 %v3787, %v3803
      %v3806 = vor.u32 %v3804, %v3805
      %v3807 = vsub.s32 4294967266, %v3802
      %v3808 = vadd.s32 %v3807, 127
      %v3809 = vshll.u32 %v3808, 23
      %v3810 = vor.u32 4788187, %v3809
      %v3811 = vand.u32 2147483647, %v3810
      %v3813 = vcvt.s32.f32 %v3806
      %v3814 = vmul.f32 %v3813, %v3811
      %v3815 = vxor.u32 %v3814, 2147483648
      %v3816 = vsel %vm3695, %v3815, %v3814
      %v3817 = vsub.s32 4, %v3793
      %v3818 = vsel %vm3695, %v3817, %v3793
      %v3819 = vsel %vm3694, %v1052, %v3816
      %v3820 = vsel %vm3694, 0, %v3818
      %v3821 = vmul.f32 %v3819, %v3819
      %v3822 = vmul.f32 %v3821, -0.001358992
      %v3823 = vadd.f32 %v3822, 0.041655596
      %v3824 = vmul.f32 %v3821, %v3823
      %v3825 = vadd.f32 %v3824, -0.4999988
      %v3826 = vmul.f32 %v3821, %v3825
      %v3827 = vadd.f32 1.0, %v3826
      %v3828 = vmul.f32 %v3819, %v3819
      %v3829 = vmul.f32 %v3828, -0.00019511016
      %v3830 = vadd.f32 %v3829, 0.008332121
      %v3831 = vmul.f32 %v3828, %v3830
      %v3832 = vadd.f32 %v3831, -0.16666654
      %v3833 = vmul.f32 %v3828, %v3832
      %v3834 = vadd.f32 %v3833, 1.0
      %v3835 = vmul.f32 %v3834, %v3819
      %vm3836 = vweird.f32 %v1052
      %v3837 = vadd.s32 %v3820, 3
      %v3838 = vand.u32 %v3837, 3
      %vm3839 = vcmp.lt.s32.totalorder %v3838, 2
      %vm3840 = vcmp.eq.s32.totalorder %v3838, 0
      %v3841 = vxor.u32 %v3835, 2147483648
      %v3842 = vsel %vm3840, %v3827, %v3841
      %vm3843 = vcmp.eq.s32.totalorder %v3838, 2
      %v3844 = vxor.u32 %v3827, 2147483648
      %v3845 = vsel %vm3843, %v3844, %v3835
      %v3846 = vsel %vm3839, %v3842, %v3845
      %v3847 = vsel %vm3836, nan, %v3846
      %v3848 = vand.u32 2147483647, %v1056
      %vm3849 = vcmp.le.f32.partialorder %v3848, 0.7853982
      %vm3850 = vcmp.lt.s32.totalorder %v1056, 0
      %v3851 = vand.u32 %v1056, 2139095040
      %v3852 = vshrl.u32 %v3851, 23
      %v3853 = vsub.s32 %v3852, 127
      %v3854 = vand.u32 2147483647, %v1056
      %v3855 = vand.u32 %v3854, 8388607
      %v3856 = vor.u32 %v3855, 8388608
      %v3857 = vsub.s32 0, %v3856
      %v3858 = vadd.s32 %v3853, 1
      %vm3859 = vcmp.gt.s32.totalorder %v3858, 0
      %v3860 = vsel %vm3859, %v3858, 0
      %v3861 = vshrl.u32 %v3860, 5
      %v3862 = vand.u32 %v3860, 31
      %v3863 = vsub.s32 32, %v3862
      %v3864 = vshrl.u32 683565275, %v3863
      %v3865 = vshll.u32 683565275, %v3862
      %v3866 = vshrl.u32 2475754826, %v3863
      %v3867 = vor.u32 %v3865, %v3866
      %v3868 = vshll.u32 2475754826, %v3862
      %v3869 = vshrl.u32 2131351028, %v3863
      %v3870 = vor.u32 %v3868, %v3869
      %v3871 = vshll.u32 2131351028, %v3862
      %v3872 = vshrl.u32 2102212464, %v3863
      %v3873 = vor.u32 %v3871, %v3872
      %v3874 = vshll.u32 2102212464, %v3862
      %v3875 = vshrl.u32 920167782, %v3863
      %v3876 = vor.u32 %v3874, %v3875
      %v3877 = vshll.u32 920167782, %v3862
      %v3878 = vshrl.u32 1326507024, %v3863
      %v3879 = vor.u32 %v3877, %v3878
      %vm3880 = vcmp.lt.s32.totalorder %v3861, 1
      %vm3881 = vcmp.lt.s32.totalorder %v3861, 2
      %vm3882 = vcmp.lt.s32.totalorder %v3861, 3
      %vm3883 = vcmp.lt.s32.totalorder %v3861, 4
      %v3884 = vsel %vm3880, %v3864, %v3867
      %v3885 = vsel %vm3883, %v3873, 2102212464
      %v3886 = vsel %vm3882, %v3870, %v3885
      %v3887 = vsel %vm3881, %v3884, %v3886
      %v3888 = vsel %vm3880, %v3867, %v3870
      %v3889 = vsel %vm3883, %v3876, 920167782
      %v3890 = vsel %vm3882, %v3873, %v3889
      %v3891 = vsel %vm3881, %v3888, %v3890
      %v3892 = vsel %vm3880, %v3870, %v3873
      %v3893 = vsel %vm3883, %v3879, 1326507024
      %v3894 = vsel %vm3882, %v3876, %v3893
      %v3895 = vsel %vm3881, %v3892, %v3894
      %v3896 = vshll.u32 %v3856, 8
      %v3897 = vand.u32 %v3896, 65535
      %v3898 = vshrl.u32 %v3896, 16
      %v3899 = vand.u32 %v3895, 65535
      %v3900 = vshrl.u32 %v3895, 16
      %v3901 = vmul.u32 %v3897, %v3899
      %v3902 = vmul.u32 %v3897, %v3900
      %v3903 = vmul.u32 %v3898, %v3899
      %v3904 = vmul.u32 %v3898, %v3900
      %v3905 = vshll.u32 %v3902, 16
      %v3906 = vshrl.u32 %v3902, 16
      %v3907 = vshll.u32 %v3903, 16
      %v3908 = vshrl.u32 %v3903, 16
      %vm3909 = vc.u32 %v3901, %v3905
      %v3910 = vsel %vm3909, 1, 0
      %v3911 = vadd.s32 %v3901, %v3905
      %v3912 = vadd.s32 %v3904, %v3910
      %vm3913 = vc.u32 %v3911, %v3907
      %v3914 = vsel %vm3913, 1, 0
      %v3915 = vadd.s32 %v3911, %v3907
      %v3916 = vadd.s32 %v3912, %v3914
      %v3917 = vadd.s32 %v3916, %v3906
      %v3918 = vadd.s32 %v3917, %v3908
      %v3919 = vand.u32 %v3896, 65535
      %v3920 = vshrl.u32 %v3896, 16
      %v3921 = vand.u32 %v3891, 65535
      %v3922 = vshrl.u32 %v3891, 16
      %v3923 = vmul.u32 %v3919, %v3921
      %v3924 = vmul.u32 %v3919, %v3922
      %v3925 = vmul.u32 %v3920, %v3921
      %v3926 = vmul.u32 %v3920, %v3922
      %v3927 = vshll.u32 %v3924, 16
      %v3928 = vshrl.u32 %v3924, 16
      %v3929 = vshll.u32 %v3925, 16
      %v3930 = vshrl.u32 %v3925, 16
      %vm3931 = vc.u32 %v3923, %v3927
      %v3932 = vsel %vm3931, 1, 0
      %v3933 = vadd.s32 %v3923, %v3927
      %v3934 = vadd.s32 %v3926, %v3932
      %vm3935 = vc.u32 %v3933, %v3929
      %v3936 = vsel %vm3935, 1, 0
      %v3937 = vadd.s32 %v3933, %v3929
      %v3938 = vadd.s32 %v3934, %v3936
      %v3939 = vadd.s32 %v3938, %v3928
      %v3940 = vadd.s32 %v3939, %v3930
      %v3941 = vmul.u32 %v3896, %v3887
      %v3942 = vadd.s32 %v3918, %v3937
      %vm3943 = vc.u32 %v3918, %v3937
      %v3944 = vadd.s32 %v3940, 1
      %v3945 = vsel %vm3943, %v3944, %v3940
      %v3946 = vadd.s32 %v3941, %v3945
      %v3947 = vadd.s32 %v3946, 536870912
      %v3948 = vshrl.u32 %v3947, 30
      %v3949 = vshll.u32 %v3948, 30
      %v3950 = vsub.s32 %v3946, %v3949
      %vm3951 = vcmp.lt.s32.totalorder %v3950, 0
      %v3952 = vsub.s32 0, %v3950
      %v3953 = vsel %vm3951, %v3952, %v3950
      %v3954 = vclz %v3953
      %v3955 = vsub.s32 %v3954, 2
      %vm3956 = vcmp.gt.s32.totalorder 0, %v3955
      %v3957 = vsel %vm3956, 0, %v3955
      %v3958 = vsub.s32 32, %v3957
      %v3959 = vshll.u32 %v3950, %v3957
      %v3960 = vshrl.u32 %v3942, %v3958
      %v3961 = vor.u32 %v3959, %v3960
      %v3962 = vsub.s32 4294967266, %v3957
      %v3963 = vadd.s32 %v3962, 127
      %v3964 = vshll.u32 %v3963, 23
      %v3965 = vor.u32 4788187, %v3964
      %v3966 = vand.u32 2147483647, %v3965
      %v3968 = vcvt.s32.f32 %v3961
      %v3969 = vmul.f32 %v3968, %v3966
      %v3970 = vxor.u32 %v3969, 2147483648
      %v3971 = vsel %vm3850, %v3970, %v3969
      %v3972 = vsub.s32 4, %v3948
      %v3973 = vsel %vm3850, %v3972, %v3948
      %v3974 = vsel %vm3849, %v1056, %v3971
      %v3975 = vsel %vm3849, 0, %v3973
      %v3976 = vmul.f32 %v3974, %v3974
      %v3977 = vmul.f32 %v3976, -0.001358992
      %v3978 = vadd.f32 %v3977, 0.041655596
      %v3979 = vmul.f32 %v3976, %v3978
      %v3980 = vadd.f32 %v3979, -0.4999988
      %v3981 = vmul.f32 %v3976, %v3980
      %v3982 = vadd.f32 1.0, %v3981
      %v3983 = vmul.f32 %v3974, %v3974
      %v3984 = vmul.f32 %v3983, -0.00019511016
      %v3985 = vadd.f32 %v3984, 0.008332121
      %v3986 = vmul.f32 %v3983, %v3985
      %v3987 = vadd.f32 %v3986, -0.16666654
      %v3988 = vmul.f32 %v3983, %v3987
      %v3989 = vadd.f32 %v3988, 1.0
      %v3990 = vmul.f32 %v3989, %v3974
      %vm3991 = vweird.f32 %v1056
      %v3992 = vadd.s32 %v3975, 3
      %v3993 = vand.u32 %v3992, 3
      %vm3994 = vcmp.lt.s32.totalorder %v3993, 2
      %vm3995 = vcmp.eq.s32.totalorder %v3993, 0
      %v3996 = vxor.u32 %v3990, 2147483648
      %v3997 = vsel %vm3995, %v3982, %v3996
      %vm3998 = vcmp.eq.s32.totalorder %v3993, 2
      %v3999 = vxor.u32 %v3982, 2147483648
      %v4000 = vsel %vm3998, %v3999, %v3990
      %v4001 = vsel %vm3994, %v3997, %v4000
      %v4002 = vsel %vm3991, nan, %v4001
      %4003 = vst.msk [vmem:[%s172] sm:$0xff] %vm205, %v1212
      %4004 = vst.msk [vmem:[%s172 + $0x8] sm:$0xff] %vm205, %v1367
      %4005 = vst.msk [vmem:[%s172 + $0x10] sm:$0xff] %vm205, %v1522
      %4006 = vst.msk [vmem:[%s172 + $0x18] sm:$0xff] %vm205, %v1677
      %4007 = vst.msk [vmem:[%s172 + $0x20] sm:$0xff] %vm205, %v1832
      %4008 = vst.msk [vmem:[%s172 + $0x28] sm:$0xff] %vm205, %v1987
      %4009 = vst.msk [vmem:[%s172 + $0x30] sm:$0xff] %vm205, %v2142
      %4010 = vst.msk [vmem:[%s172 + $0x38] sm:$0xff] %vm205, %v2297
      %4011 = vst.msk [vmem:[%s172 + $0x40] sm:$0xff] %vm205, %v2452
      %4012 = vst.msk [vmem:[%s172 + $0x48] sm:$0xff] %vm205, %v2607
      %4013 = vst.msk [vmem:[%s172 + $0x50] sm:$0xff] %vm205, %v2762
      %4014 = vst.msk [vmem:[%s172 + $0x58] sm:$0xff] %vm205, %v2917
      %4015 = vst.msk [vmem:[%s172 + $0x60] sm:$0xff] %vm205, %v3072
      %4016 = vst.msk [vmem:[%s172 + $0x68] sm:$0xff] %vm205, %v3227
      %4017 = vst.msk [vmem:[%s172 + $0x70] sm:$0xff] %vm205, %v3382
      %4018 = vst.msk [vmem:[%s172 + $0x78] sm:$0xff] %vm205, %v3537
      %4019 = vst.msk [vmem:[%s172 + $0x80] sm:$0xff] %vm205, %v3692
      %4020 = vst.msk [vmem:[%s172 + $0x88] sm:$0xff] %vm205, %v3847
      %4021 = vst.msk [vmem:[%s172 + $0x90] sm:$0xff] %vm205, %v4002
      %s4022 = smul.u32 19, %s14
      %p4023 = scmp.lt.s32.totalorder %s4022, 37
      %s4024 = scalar_select %p4023, %s4022, 37
      %s4025 = smul.addr %s4024, 8
      %s4026 = scalar_lea.vmem %s3, %s4025
      // Predicated region
      $region33: #{tpu_custom_call.1} parent=31 // pred_check
        %p4027 = pneg %p100
      $region34: #{tpu_custom_call.1} parent=31 // pred_check_branch
        %4029 = sbr.rel (%p4027) target = $region36
      $region35: #{tpu_custom_call.1} parent=31 // pred_region
        %s4030 = smul.u32 19, %s14
      $region36: #{tpu_custom_call.1} parent=31 // pred_fallthru
        _
    $region32: #{tpu_custom_call.1} parent=5 // pred_fallthru
      _
    %p4031 = scmp.le.s32.totalorder 2, %s9
    // Predicated region
    $region37: #{tpu_custom_call.1} parent=5 // pred_check
      %p4032 = pneg %p4031
    $region38: #{tpu_custom_call.1} parent=5 // pred_check_branch
      %4034 = sbr.rel (%p4032) target = $region40
    $region39: #{tpu_custom_call.1} parent=5 // pred_region
      %s4035 = ssub.s32 %s9, 2
      // Predicated region
      $region41: #{tpu_custom_call.1} parent=39 // pred_check
        %p4036 = pneg %p106
      $region42: #{tpu_custom_call.1} parent=39 // pred_check_branch
        %4038 = sbr.rel (%p4036) target = $region44
      $region43: #{tpu_custom_call.1} parent=39 // pred_region
        %s4039 = smul.u32 19, %s15
        %p4040 = scmp.lt.s32.totalorder %s4039, 37
        %s4041 = scalar_select %p4040, %s4039, 37
        %s4042 = smul.addr %s4041, 8
        %s4043 = scalar_lea.vmem %s3, %s4042
      $region44: #{tpu_custom_call.1} parent=39 // pred_fallthru
        _
    $region40: #{tpu_custom_call.1} parent=5 // pred_fallthru
      _
  $region6: #{tpu_custom_call.1} parent=0 // loop_footer
    %s13 = sadd.s32 1, %s9
  $region7: #{tpu_custom_call.1} parent=0 // loop_footer_branch
    %8 = sbr.rel target = $region3
  $region8: #{tpu_custom_call.1} parent=0 // loop_exit
    _

</llo_original>
